<compile_context>
chip_gen: v6e
topology: v6e:2x2x1
jax: 0.10.0
libtpu: 0.0.40
codegen_flags: <defaults>
</compile_context>

<pallas_src>
import functools

import numpy as np

import jax
import jax.numpy as jnp
from jax.experimental import pallas as pl
from jax.experimental.pallas import tpu as pltpu


# MXU operand dtype for the 3x3 conv matmuls.  jnp.bfloat16 gives ~2x MXU
# throughput on v6e/v7x and halves vreg pressure; float32 keeps the kernel
# numerically exact for the self-test below.
CONV_MXU_DTYPE = jnp.float32


# ---------------------------------------------------------------------------
# Fused Pallas kernel (one grid step == one block of `bpb` batch samples,
# all folded onto the lane axis)
# ---------------------------------------------------------------------------
def _mask_head_kernel(featbb_ref, featcorr_ref, masks_ref, rt_ref, fwt_ref,
                      w1_ref, w2_ref, w3_ref, aff_ref, o_ref, *, H, W):
    B, Cbb, HW = featbb_ref.shape            # (samples in this block, C, H*W)
    hidden = w1_ref.shape[1]
    total = B * HW

    # ---- packed per-channel affine params (one small VMEM tile) -----------
    s1 = aff_ref[pl.ds(0, hidden), pl.ds(0, 1)]
    sh1 = aff_ref[pl.ds(0, hidden), pl.ds(1, 1)]
    s2 = aff_ref[pl.ds(0, hidden), pl.ds(2, 1)]
    sh2 = aff_ref[pl.ds(0, hidden), pl.ds(3, 1)]
    fb = aff_ref[pl.ds(0, Cbb), pl.ds(4, 1)]
    b3 = aff_ref[pl.ds(0, 1), pl.ds(5, 1)]

    # ---- fusion (1x1 conv) + bilinear upsample, reassociated ---------------
    # per-sample (Ccorr, HcWc) @ RT(HcWc, HW), then one fwt matmul over lanes.
    ups = [jnp.dot(featcorr_ref[n], rt_ref[...],
                   preferred_element_type=jnp.float32) for n in range(B)]
    corr_up = ups[0] if B == 1 else jnp.concatenate(ups, axis=1)   # (Ccorr, B*HW)
    fusion_up = jnp.dot(fwt_ref[...], corr_up,
                        preferred_element_type=jnp.float32) + fb   # (Cbb, B*HW)

    # ---- featbb * sigmoid(fusion_up): exact sigmoid (EUP exp + divide) -----
    bb = (featbb_ref[0] if B == 1
          else jnp.concatenate([featbb_ref[n] for n in range(B)], axis=1))
    sig = 1.0 / (1.0 + jnp.exp(-fusion_up))
    feat = bb * sig                                                 # (Cbb, B*HW)

    def conv3x3(x, w_ref):
        """3x3 / pad=1 conv in (Cin, B*HW) layout -> (Cout, B*HW).

        9 accumulating (Cout, Cin) @ (Cin, B*HW) matmuls: each tap is built by
        rolling the flattened spatial axis (XLU) and zeroing the padding ring
        (which also covers cross-sample wrap positions) with a precomputed
        mask.  No im2col concat, bounded live vregs.
        """
        acc = None
        k = 0
        for dy in (-1, 0, 1):
            for dx in (-1, 0, 1):
                off = dy * W + dx
                if off == 0:
                    tap = x
                else:
                    tap = pltpu.roll(x, shift=(-off) % total, axis=1)
                    tap = tap * masks_ref[pl.ds(k, 1), :]          # (1, B*HW)
                contrib = jnp.dot(w_ref[k], tap.astype(w_ref.dtype),
                                  preferred_element_type=jnp.float32)
                acc = contrib if acc is None else acc + contrib
                k += 1
        return acc                                                  # (Cout, B*HW)

    # ---- head1: conv3x3 -> BN -> ReLU -> conv3x3 -> BN -> ReLU -> conv3x3+b
    h1 = jnp.maximum(conv3x3(feat, w1_ref) * s1 + sh1, 0.0)
    h2 = jnp.maximum(conv3x3(h1, w2_ref) * s2 + sh2, 0.0)
    mask = conv3x3(h2, w3_ref) + b3                                 # (1, B*HW)

    for n in range(B):
        o_ref[n] = mask[:, n * HW:(n + 1) * HW].astype(o_ref.dtype)


# ---------------------------------------------------------------------------
# Constant / parameter preprocessing (trace-time, tiny)
# ---------------------------------------------------------------------------
def _bilinear_axis_matrix(out_size, in_size):
    """(out, in) interpolation weights, PyTorch align_corners=False."""
    scale = in_size / out_size
    i = np.arange(out_size, dtype=np.float64)
    src = np.maximum(scale * (i + 0.5) - 0.5, 0.0)
    i0 = np.minimum(np.floor(src).astype(np.int64), in_size - 1)
    i1 = np.minimum(i0 + 1, in_size - 1)
    lam = src - i0
    m = np.zeros((out_size, in_size), dtype=np.float64)
    m[np.arange(out_size), i0] += 1.0 - lam
    m[np.arange(out_size), i1] += lam
    return m


def bilinear_matrix_t(in_h, in_w, out_h, out_w):
    """Transposed full interpolation matrix: (in_h*in_w, out_h*out_w)."""
    ry = _bilinear_axis_matrix(out_h, in_h)            # (H, Hc)
    rx = _bilinear_axis_matrix(out_w, in_w)            # (W, Wc)
    r = np.kron(ry, rx)                                # (H*W, Hc*Wc)
    return jnp.asarray(r.T.astype(np.float32))         # (Hc*Wc, H*W)


def shift_masks(H, W, reps):
    """(9, reps*H*W) float masks: 1 where the (dy,dx)-shifted tap is in-bounds.

    Tiled `reps` times so multiple samples can share the lane axis; the
    invalid (padding-ring) positions coincide with cross-sample wrap positions.
    """
    r = np.arange(H * W) // W
    c = np.arange(H * W) % W
    rows = []
    for dy in (-1, 0, 1):
        for dx in (-1, 0, 1):
            valid = (r + dy >= 0) & (r + dy < H) & (c + dx >= 0) & (c + dx < W)
            rows.append(valid.astype(np.float32))
    m = np.stack(rows)                                  # (9, H*W)
    return jnp.asarray(np.tile(m, (1, reps)))           # (9, reps*H*W)


def fold_bn(bn, eps=1e-5):
    scale = bn["gamma"] / jnp.sqrt(bn["var"] + eps)
    shift = bn["beta"] - bn["mean"] * scale
    return scale, shift


# ---------------------------------------------------------------------------
# Forward pass wrapper
# ---------------------------------------------------------------------------
def mask_pred_head_forward(featbb_nchw, featcorr_nchw, params, n_blocks=1):
    N, Cbb, H, W = featbb_nchw.shape
    _, Ccorr, Hc, Wc = featcorr_nchw.shape
    hidden = params["w1"].shape[-1]
    HW, HcWc = H * W, Hc * Wc
    assert N % n_blocks == 0, "batch must divide into n_blocks"
    bpb = N // n_blocks                                   # samples per block

    # NCHW -> (N, C, H*W): a free reshape; batch blocks are folded onto lanes
    # inside the kernel, so no host-side transposes are needed.
    featbb = featbb_nchw.reshape(N, Cbb, HW).astype(jnp.float32)
    featcorr = featcorr_nchw.reshape(N, Ccorr, HcWc).astype(jnp.float32)

    masks = shift_masks(H, W, bpb)                        # (9, bpb*HW)
    rt = bilinear_matrix_t(Hc, Wc, H, W)                  # (HcWc, HW)

    # Fold eval-mode BN and pack all per-channel affine vectors into one tile.
    s1, sh1 = fold_bn(params["bn1"])
    s2, sh2 = fold_bn(params["bn2"])
    P = max(hidden, Cbb)
    aff = jnp.zeros((P, 6), jnp.float32)
    aff = aff.at[:hidden, 0].set(s1).at[:hidden, 1].set(sh1)
    aff = aff.at[:hidden, 2].set(s2).at[:hidden, 3].set(sh2)
    aff = aff.at[:Cbb, 4].set(params["fusion_b"]).at[0, 5].set(params["b3"][0])

    # HWIO (3,3,Cin,Cout) -> tap-major (9, Cout, Cin) for accumulating matmuls.
    w1_9 = params["w1"].transpose(0, 1, 3, 2).reshape(9, hidden, Cbb)
    w2_9 = params["w2"].transpose(0, 1, 3, 2).reshape(9, hidden, hidden)
    w3_9 = params["w3"].transpose(0, 1, 3, 2).reshape(9, 1, hidden)
    w1_9 = w1_9.astype(CONV_MXU_DTYPE)
    w2_9 = w2_9.astype(CONV_MXU_DTYPE)
    w3_9 = w3_9.astype(CONV_MXU_DTYPE)
    fwt = params["fusion_w"].astype(jnp.float32)          # (Cbb, Ccorr)

    kern = functools.partial(_mask_head_kernel, H=H, W=W)
    c2 = lambda i: (0, 0)
    c3 = lambda i: (0, 0, 0)
    out = pl.pallas_call(
        kern,
        out_shape=jax.ShapeDtypeStruct((N, 1, HW), jnp.float32),
        grid=(n_blocks,),
        in_specs=[
            pl.BlockSpec((bpb, Cbb, HW), lambda i: (i, 0, 0)),     # featbb
            pl.BlockSpec((bpb, Ccorr, HcWc), lambda i: (i, 0, 0)),  # featcorr
            pl.BlockSpec((9, bpb * HW), c2),                        # shift masks
            pl.BlockSpec((HcWc, HW), c2),                           # upsample mat
            pl.BlockSpec((Cbb, Ccorr), c2),                         # fusion W
            pl.BlockSpec((9, hidden, Cbb), c3),                     # w1 taps
            pl.BlockSpec((9, hidden, hidden), c3),                  # w2 taps
            pl.BlockSpec((9, 1, hidden), c3),                       # w3 taps
            pl.BlockSpec((P, 6), c2),                               # packed affine
        ],
        out_specs=pl.BlockSpec((bpb, 1, HW), lambda i: (i, 0, 0)),
        compiler_params=pltpu.CompilerParams(
            dimension_semantics=("parallel",)),
    )(featbb, featcorr, masks, rt, fwt, w1_9, w2_9, w3_9, aff)

    # (N, 1, H*W) -> NCHW (N, 1, H, W): free reshape.
    return out.reshape(N, 1, H, W)


# ---------------------------------------------------------------------------
# Parameters (deterministic synthetic init, shapes from the module __init__)
# ---------------------------------------------------------------------------
def init_params(key, chan_inbb, chan_incorr, hidden):
    ks = jax.random.split(key, 4)
    lin = lambda n: jnp.linspace(-1.0, 1.0, n, dtype=jnp.float32)
    return {
        # fusion: Conv2d(chan_incorr -> chan_inbb, k=1, bias=True); (out, in)
        "fusion_w": 0.1 * jax.random.normal(ks[0], (chan_inbb, chan_incorr), jnp.float32),
        "fusion_b": 0.05 * lin(chan_inbb),
        # head1[0]: Conv2d(chan_inbb -> hidden, k=3, pad=1, no bias); HWIO
        "w1": 0.1 * jax.random.normal(ks[1], (3, 3, chan_inbb, hidden), jnp.float32),
        "bn1": {
            "gamma": 1.0 + 0.1 * lin(hidden),
            "beta": 0.02 * lin(hidden),
            "mean": 0.01 * lin(hidden),
            "var": 1.0 + 0.05 * jnp.abs(lin(hidden)),
        },
        # head1[3]: Conv2d(hidden -> hidden, k=3, pad=1, no bias); HWIO
        "w2": 0.1 * jax.random.normal(ks[2], (3, 3, hidden, hidden), jnp.float32),
        "bn2": {
            "gamma": 1.0 - 0.05 * lin(hidden),
            "beta": -0.03 * lin(hidden),
            "mean": 0.02 * lin(hidden),
            "var": 1.0 + 0.1 * jnp.abs(lin(hidden)),
        },
        # head1[6]: Conv2d(hidden -> 1, k=3, pad=1, bias=True); HWIO
        "w3": 0.1 * jax.random.normal(ks[3], (3, 3, hidden, 1), jnp.float32),
        "b3": jnp.array([0.1], dtype=jnp.float32),
    }


# ---------------------------------------------------------------------------
# Pure-JAX reference (independent of the kernel's roll/matrix tricks)
# ---------------------------------------------------------------------------
def _bilinear_resize_nchw(x, out_h, out_w):
    N, C, H, W = x.shape

    def coords(o, i):
        scale = i / o
        v = jnp.arange(o, dtype=jnp.float32)
        src = jnp.maximum(scale * (v + 0.5) - 0.5, 0.0)
        i0 = jnp.minimum(jnp.floor(src).astype(jnp.int32), i - 1)
        i1 = jnp.minimum(i0 + 1, i - 1)
        lam = src - i0.astype(jnp.float32)
        return i0, i1, lam

    y0, y1, ly = coords(out_h, H)
    x0, x1, lx = coords(out_w, W)
    rows = (x[:, :, y0, :] * (1.0 - ly)[None, None, :, None]
            + x[:, :, y1, :] * ly[None, None, :, None])
    return (rows[:, :, :, x0] * (1.0 - lx)[None, None, None, :]
            + rows[:, :, :, x1] * lx[None, None, None, :])


def reference_forward(featbb, featcorr, params):
    hi = jax.lax.Precision.HIGHEST
    fusion = jnp.einsum("oc,nchw->nohw", params["fusion_w"], featcorr,
                        precision=hi) + params["fusion_b"][None, :, None, None]
    H, W = featbb.shape[2:]
    fusion = _bilinear_resize_nchw(fusion, H, W)
    feat = featbb * (1.0 / (1.0 + jnp.exp(-fusion)))

    def conv3x3(x, w):
        return jax.lax.conv_general_dilated(
            x, w, window_strides=(1, 1), padding="SAME",
            dimension_numbers=("NCHW", "HWIO", "NCHW"), precision=hi)

    s1, sh1 = fold_bn(params["bn1"])
    s2, sh2 = fold_bn(params["bn2"])
    h1 = jnp.maximum(conv3x3(feat, params["w1"]) * s1[None, :, None, None]
                     + sh1[None, :, None, None], 0.0)
    h2 = jnp.maximum(conv3x3(h1, params["w2"]) * s2[None, :, None, None]
                     + sh2[None, :, None, None], 0.0)
    return conv3x3(h2, params["w3"]) + params["b3"][None, :, None, None]


# ---------------------------------------------------------------------------
# Main
# ---------------------------------------------------------------------------
if __name__ == "__main__":
    key = jax.random.PRNGKey(0)
    k_bb, k_corr, k_params = jax.random.split(key, 3)

    # Shapes consistent with the module: chan_inbb=8, chan_incorr=4, hidden=16
    #   featbb:   (N=2, C=8, H=16, W=16)  NCHW
    #   featcorr: (N=2, C=4, H=8,  W=8)   NCHW (lower resolution -> upsampled)
    chan_inbb, chan_incorr, hidden = 8, 4, 16
    featbb = jax.random.normal(k_bb, (2, chan_inbb, 16, 16), jnp.float32)
    featcorr = jax.random.normal(k_corr, (2, chan_incorr, 8, 8), jnp.float32)

    params = init_params(k_params, chan_inbb, chan_incorr, hidden)

    fwd = jax.jit(lambda a, b: mask_pred_head_forward(a, b, params))
    mask = fwd(featbb, featcorr)
    jax.block_until_ready(mask)

    assert mask.shape == (2, 1, 16, 16), mask.shape
    assert bool(jnp.all(jnp.isfinite(mask)))

    # Numerical check against an independent pure-JAX implementation.
    # (Tolerance kept conservative to stay robust to the MXU's f32 pass
    #  configuration; the sigmoid is now exact and all math is f32.)
    ref = reference_forward(featbb, featcorr, params)
    err = float(jnp.max(jnp.abs(mask - ref)))
    assert err < 1e-2, f"max abs diff vs reference: {err}"

    print("KERNEL_OK")
</pallas_src>

<mosaic_0001>
module attributes {stable_mosaic.version = 11 : i64} {
  func.func @_mask_head_kernel(%arg0: i32, %arg1: memref<2x8x256xf32, #tpu.memory_space<vmem>>, %arg2: memref<2x4x64xf32, #tpu.memory_space<vmem>>, %arg3: memref<9x512xf32, #tpu.memory_space<vmem>>, %arg4: memref<64x256xf32, #tpu.memory_space<vmem>>, %arg5: memref<8x4xf32, #tpu.memory_space<vmem>>, %arg6: memref<9x16x8xf32, #tpu.memory_space<vmem>>, %arg7: memref<9x16x16xf32, #tpu.memory_space<vmem>>, %arg8: memref<9x1x16xf32, #tpu.memory_space<vmem>>, %arg9: memref<16x6xf32, #tpu.memory_space<vmem>>, %arg10: memref<2x1x256xf32, #tpu.memory_space<vmem>>) attributes {dimension_semantics = [#tpu.dimension_semantics<parallel>], iteration_bounds = array<i64: 1>, scalar_prefetch = 0 : i64, scratch_operands = 0 : i64, tpu.core_type = #tpu.core_type<tc>, window_params = [{transform_indices = @transform_0, window_bounds = array<i64: 2, 8, 256>}, {transform_indices = @transform_1, window_bounds = array<i64: 2, 4, 64>}, {pipeline_mode = #tpu.pipeline_mode<synchronous>, transform_indices = @transform_2, window_bounds = array<i64: 9, 512>}, {pipeline_mode = #tpu.pipeline_mode<synchronous>, transform_indices = @transform_3, window_bounds = array<i64: 64, 256>}, {pipeline_mode = #tpu.pipeline_mode<synchronous>, transform_indices = @transform_4, window_bounds = array<i64: 8, 4>}, {pipeline_mode = #tpu.pipeline_mode<synchronous>, transform_indices = @transform_5, window_bounds = array<i64: 9, 16, 8>}, {pipeline_mode = #tpu.pipeline_mode<synchronous>, transform_indices = @transform_6, window_bounds = array<i64: 9, 16, 16>}, {pipeline_mode = #tpu.pipeline_mode<synchronous>, transform_indices = @transform_7, window_bounds = array<i64: 9, 1, 16>}, {pipeline_mode = #tpu.pipeline_mode<synchronous>, transform_indices = @transform_8, window_bounds = array<i64: 16, 6>}, {transform_indices = @transform_9, window_bounds = array<i64: 2, 1, 256>}]} {
    %c0 = arith.constant 0 : index
    %c0_0 = arith.constant 0 : index
    %0 = vector.load %arg9[%c0, %c0_0] : memref<16x6xf32, #tpu.memory_space<vmem>>, vector<16x1xf32>
    %c0_1 = arith.constant 0 : index
    %c1 = arith.constant 1 : index
    %1 = vector.load %arg9[%c0_1, %c1] : memref<16x6xf32, #tpu.memory_space<vmem>>, vector<16x1xf32>
    %c0_2 = arith.constant 0 : index
    %c2 = arith.constant 2 : index
    %2 = vector.load %arg9[%c0_2, %c2] : memref<16x6xf32, #tpu.memory_space<vmem>>, vector<16x1xf32>
    %c0_3 = arith.constant 0 : index
    %c3 = arith.constant 3 : index
    %3 = vector.load %arg9[%c0_3, %c3] : memref<16x6xf32, #tpu.memory_space<vmem>>, vector<16x1xf32>
    %c0_4 = arith.constant 0 : index
    %c4 = arith.constant 4 : index
    %4 = vector.load %arg9[%c0_4, %c4] : memref<16x6xf32, #tpu.memory_space<vmem>>, vector<8x1xf32>
    %c0_5 = arith.constant 0 : index
    %c5 = arith.constant 5 : index
    %5 = vector.load %arg9[%c0_5, %c5] : memref<16x6xf32, #tpu.memory_space<vmem>>, vector<1x1xf32>
    %c0_6 = arith.constant 0 : index
    %c0_7 = arith.constant 0 : index
    %c0_8 = arith.constant 0 : index
    %6 = vector.load %arg2[%c0_6, %c0_7, %c0_8] : memref<2x4x64xf32, #tpu.memory_space<vmem>>, vector<1x4x64xf32>
    %7 = vector.shape_cast %6 : vector<1x4x64xf32> to vector<4x64xf32>
    %c0_9 = arith.constant 0 : index
    %c0_10 = arith.constant 0 : index
    %8 = vector.load %arg4[%c0_9, %c0_10] : memref<64x256xf32, #tpu.memory_space<vmem>>, vector<64x256xf32>
    %cst = arith.constant dense<0.000000e+00> : vector<4x256xf32>
    %9 = tpu.matmul %7, %8, %cst {dimension_numbers = #tpu.dot_dimension_numbers<[1], [0], [0], [1], [0, 0, 1, 1], [], []>} : vector<4x64xf32>, vector<64x256xf32>, vector<4x256xf32> -> vector<4x256xf32>
    %c1_11 = arith.constant 1 : index
    %c0_12 = arith.constant 0 : index
    %c0_13 = arith.constant 0 : index
    %10 = vector.load %arg2[%c1_11, %c0_12, %c0_13] : memref<2x4x64xf32, #tpu.memory_space<vmem>>, vector<1x4x64xf32>
    %11 = vector.shape_cast %10 : vector<1x4x64xf32> to vector<4x64xf32>
    %c0_14 = arith.constant 0 : index
    %c0_15 = arith.constant 0 : index
    %12 = vector.load %arg4[%c0_14, %c0_15] : memref<64x256xf32, #tpu.memory_space<vmem>>, vector<64x256xf32>
    %cst_16 = arith.constant dense<0.000000e+00> : vector<4x256xf32>
    %13 = tpu.matmul %11, %12, %cst_16 {dimension_numbers = #tpu.dot_dimension_numbers<[1], [0], [0], [1], [0, 0, 1, 1], [], []>} : vector<4x64xf32>, vector<64x256xf32>, vector<4x256xf32> -> vector<4x256xf32>
    %14 = tpu.concatenate %9, %13 in 1 : vector<4x256xf32>, vector<4x256xf32> -> vector<4x512xf32>
    %c0_17 = arith.constant 0 : index
    %c0_18 = arith.constant 0 : index
    %15 = vector.load %arg5[%c0_17, %c0_18] : memref<8x4xf32, #tpu.memory_space<vmem>>, vector<8x4xf32>
    %cst_19 = arith.constant dense<0.000000e+00> : vector<8x512xf32>
    %16 = tpu.matmul %15, %14, %cst_19 {dimension_numbers = #tpu.dot_dimension_numbers<[1], [0], [0], [1], [0, 0, 1, 1], [], []>} : vector<8x4xf32>, vector<4x512xf32>, vector<8x512xf32> -> vector<8x512xf32>
    %17 = vector.broadcast %4 : vector<8x1xf32> to vector<8x512xf32>
    %18 = arith.addf %16, %17 : vector<8x512xf32>
    %c0_20 = arith.constant 0 : index
    %c0_21 = arith.constant 0 : index
    %c0_22 = arith.constant 0 : index
    %19 = vector.load %arg1[%c0_20, %c0_21, %c0_22] : memref<2x8x256xf32, #tpu.memory_space<vmem>>, vector<1x8x256xf32>
    %20 = vector.shape_cast %19 : vector<1x8x256xf32> to vector<8x256xf32>
    %c1_23 = arith.constant 1 : index
    %c0_24 = arith.constant 0 : index
    %c0_25 = arith.constant 0 : index
    %21 = vector.load %arg1[%c1_23, %c0_24, %c0_25] : memref<2x8x256xf32, #tpu.memory_space<vmem>>, vector<1x8x256xf32>
    %22 = vector.shape_cast %21 : vector<1x8x256xf32> to vector<8x256xf32>
    %23 = tpu.concatenate %20, %22 in 1 : vector<8x256xf32>, vector<8x256xf32> -> vector<8x512xf32>
    %cst_26 = arith.constant 0.000000e+00 : f32
    %24 = vector.broadcast %cst_26 : f32 to vector<8x512xf32>
    %25 = arith.subf %24, %18 : vector<8x512xf32>
    %26 = math.exp %25 : vector<8x512xf32>
    %cst_27 = arith.constant 1.000000e+00 : f32
    %27 = vector.broadcast %cst_27 : f32 to vector<8x512xf32>
    %28 = arith.addf %27, %26 : vector<8x512xf32>
    %cst_28 = arith.constant 1.000000e+00 : f32
    %29 = vector.broadcast %cst_28 : f32 to vector<8x512xf32>
    %30 = arith.divf %29, %28 : vector<8x512xf32>
    %31 = arith.mulf %23, %30 : vector<8x512xf32>
    %c17_i32 = arith.constant 17 : i32
    %32 = tpu.dynamic_rotate %31 by %c17_i32 dim 1 : vector<8x512xf32>, i32 -> vector<8x512xf32>
    %c0_29 = arith.constant 0 : index
    %c0_30 = arith.constant 0 : index
    %33 = vector.load %arg3[%c0_29, %c0_30] : memref<9x512xf32, #tpu.memory_space<vmem>>, vector<1x512xf32>
    %34 = vector.broadcast %33 : vector<1x512xf32> to vector<8x512xf32>
    %35 = arith.mulf %32, %34 : vector<8x512xf32>
    %c0_31 = arith.constant 0 : index
    %c0_32 = arith.constant 0 : index
    %c0_33 = arith.constant 0 : index
    %36 = vector.load %arg6[%c0_31, %c0_32, %c0_33] : memref<9x16x8xf32, #tpu.memory_space<vmem>>, vector<1x16x8xf32>
    %37 = vector.shape_cast %36 : vector<1x16x8xf32> to vector<16x8xf32>
    %cst_34 = arith.constant dense<0.000000e+00> : vector<16x512xf32>
    %38 = tpu.matmul %37, %35, %cst_34 {dimension_numbers = #tpu.dot_dimension_numbers<[1], [0], [0], [1], [0, 0, 1, 1], [], []>} : vector<16x8xf32>, vector<8x512xf32>, vector<16x512xf32> -> vector<16x512xf32>
    %c16_i32 = arith.constant 16 : i32
    %39 = tpu.dynamic_rotate %31 by %c16_i32 dim 1 : vector<8x512xf32>, i32 -> vector<8x512xf32>
    %c1_35 = arith.constant 1 : index
    %c0_36 = arith.constant 0 : index
    %40 = vector.load %arg3[%c1_35, %c0_36] : memref<9x512xf32, #tpu.memory_space<vmem>>, vector<1x512xf32>
    %41 = vector.broadcast %40 : vector<1x512xf32> to vector<8x512xf32>
    %42 = arith.mulf %39, %41 : vector<8x512xf32>
    %c1_37 = arith.constant 1 : index
    %c0_38 = arith.constant 0 : index
    %c0_39 = arith.constant 0 : index
    %43 = vector.load %arg6[%c1_37, %c0_38, %c0_39] : memref<9x16x8xf32, #tpu.memory_space<vmem>>, vector<1x16x8xf32>
    %44 = vector.shape_cast %43 : vector<1x16x8xf32> to vector<16x8xf32>
    %cst_40 = arith.constant dense<0.000000e+00> : vector<16x512xf32>
    %45 = tpu.matmul %44, %42, %cst_40 {dimension_numbers = #tpu.dot_dimension_numbers<[1], [0], [0], [1], [0, 0, 1, 1], [], []>} : vector<16x8xf32>, vector<8x512xf32>, vector<16x512xf32> -> vector<16x512xf32>
    %46 = arith.addf %38, %45 : vector<16x512xf32>
    %c15_i32 = arith.constant 15 : i32
    %47 = tpu.dynamic_rotate %31 by %c15_i32 dim 1 : vector<8x512xf32>, i32 -> vector<8x512xf32>
    %c2_41 = arith.constant 2 : index
    %c0_42 = arith.constant 0 : index
    %48 = vector.load %arg3[%c2_41, %c0_42] : memref<9x512xf32, #tpu.memory_space<vmem>>, vector<1x512xf32>
    %49 = vector.broadcast %48 : vector<1x512xf32> to vector<8x512xf32>
    %50 = arith.mulf %47, %49 : vector<8x512xf32>
    %c2_43 = arith.constant 2 : index
    %c0_44 = arith.constant 0 : index
    %c0_45 = arith.constant 0 : index
    %51 = vector.load %arg6[%c2_43, %c0_44, %c0_45] : memref<9x16x8xf32, #tpu.memory_space<vmem>>, vector<1x16x8xf32>
    %52 = vector.shape_cast %51 : vector<1x16x8xf32> to vector<16x8xf32>
    %cst_46 = arith.constant dense<0.000000e+00> : vector<16x512xf32>
    %53 = tpu.matmul %52, %50, %cst_46 {dimension_numbers = #tpu.dot_dimension_numbers<[1], [0], [0], [1], [0, 0, 1, 1], [], []>} : vector<16x8xf32>, vector<8x512xf32>, vector<16x512xf32> -> vector<16x512xf32>
    %54 = arith.addf %46, %53 : vector<16x512xf32>
    %c1_i32 = arith.constant 1 : i32
    %55 = tpu.dynamic_rotate %31 by %c1_i32 dim 1 : vector<8x512xf32>, i32 -> vector<8x512xf32>
    %c3_47 = arith.constant 3 : index
    %c0_48 = arith.constant 0 : index
    %56 = vector.load %arg3[%c3_47, %c0_48] : memref<9x512xf32, #tpu.memory_space<vmem>>, vector<1x512xf32>
    %57 = vector.broadcast %56 : vector<1x512xf32> to vector<8x512xf32>
    %58 = arith.mulf %55, %57 : vector<8x512xf32>
    %c3_49 = arith.constant 3 : index
    %c0_50 = arith.constant 0 : index
    %c0_51 = arith.constant 0 : index
    %59 = vector.load %arg6[%c3_49, %c0_50, %c0_51] : memref<9x16x8xf32, #tpu.memory_space<vmem>>, vector<1x16x8xf32>
    %60 = vector.shape_cast %59 : vector<1x16x8xf32> to vector<16x8xf32>
    %cst_52 = arith.constant dense<0.000000e+00> : vector<16x512xf32>
    %61 = tpu.matmul %60, %58, %cst_52 {dimension_numbers = #tpu.dot_dimension_numbers<[1], [0], [0], [1], [0, 0, 1, 1], [], []>} : vector<16x8xf32>, vector<8x512xf32>, vector<16x512xf32> -> vector<16x512xf32>
    %62 = arith.addf %54, %61 : vector<16x512xf32>
    %c4_53 = arith.constant 4 : index
    %c0_54 = arith.constant 0 : index
    %c0_55 = arith.constant 0 : index
    %63 = vector.load %arg6[%c4_53, %c0_54, %c0_55] : memref<9x16x8xf32, #tpu.memory_space<vmem>>, vector<1x16x8xf32>
    %64 = vector.shape_cast %63 : vector<1x16x8xf32> to vector<16x8xf32>
    %cst_56 = arith.constant dense<0.000000e+00> : vector<16x512xf32>
    %65 = tpu.matmul %64, %31, %cst_56 {dimension_numbers = #tpu.dot_dimension_numbers<[1], [0], [0], [1], [0, 0, 1, 1], [], []>} : vector<16x8xf32>, vector<8x512xf32>, vector<16x512xf32> -> vector<16x512xf32>
    %66 = arith.addf %62, %65 : vector<16x512xf32>
    %c511_i32 = arith.constant 511 : i32
    %67 = tpu.dynamic_rotate %31 by %c511_i32 dim 1 : vector<8x512xf32>, i32 -> vector<8x512xf32>
    %c5_57 = arith.constant 5 : index
    %c0_58 = arith.constant 0 : index
    %68 = vector.load %arg3[%c5_57, %c0_58] : memref<9x512xf32, #tpu.memory_space<vmem>>, vector<1x512xf32>
    %69 = vector.broadcast %68 : vector<1x512xf32> to vector<8x512xf32>
    %70 = arith.mulf %67, %69 : vector<8x512xf32>
    %c5_59 = arith.constant 5 : index
    %c0_60 = arith.constant 0 : index
    %c0_61 = arith.constant 0 : index
    %71 = vector.load %arg6[%c5_59, %c0_60, %c0_61] : memref<9x16x8xf32, #tpu.memory_space<vmem>>, vector<1x16x8xf32>
    %72 = vector.shape_cast %71 : vector<1x16x8xf32> to vector<16x8xf32>
    %cst_62 = arith.constant dense<0.000000e+00> : vector<16x512xf32>
    %73 = tpu.matmul %72, %70, %cst_62 {dimension_numbers = #tpu.dot_dimension_numbers<[1], [0], [0], [1], [0, 0, 1, 1], [], []>} : vector<16x8xf32>, vector<8x512xf32>, vector<16x512xf32> -> vector<16x512xf32>
    %74 = arith.addf %66, %73 : vector<16x512xf32>
    %c497_i32 = arith.constant 497 : i32
    %75 = tpu.dynamic_rotate %31 by %c497_i32 dim 1 : vector<8x512xf32>, i32 -> vector<8x512xf32>
    %c6 = arith.constant 6 : index
    %c0_63 = arith.constant 0 : index
    %76 = vector.load %arg3[%c6, %c0_63] : memref<9x512xf32, #tpu.memory_space<vmem>>, vector<1x512xf32>
    %77 = vector.broadcast %76 : vector<1x512xf32> to vector<8x512xf32>
    %78 = arith.mulf %75, %77 : vector<8x512xf32>
    %c6_64 = arith.constant 6 : index
    %c0_65 = arith.constant 0 : index
    %c0_66 = arith.constant 0 : index
    %79 = vector.load %arg6[%c6_64, %c0_65, %c0_66] : memref<9x16x8xf32, #tpu.memory_space<vmem>>, vector<1x16x8xf32>
    %80 = vector.shape_cast %79 : vector<1x16x8xf32> to vector<16x8xf32>
    %cst_67 = arith.constant dense<0.000000e+00> : vector<16x512xf32>
    %81 = tpu.matmul %80, %78, %cst_67 {dimension_numbers = #tpu.dot_dimension_numbers<[1], [0], [0], [1], [0, 0, 1, 1], [], []>} : vector<16x8xf32>, vector<8x512xf32>, vector<16x512xf32> -> vector<16x512xf32>
    %82 = arith.addf %74, %81 : vector<16x512xf32>
    %c496_i32 = arith.constant 496 : i32
    %83 = tpu.dynamic_rotate %31 by %c496_i32 dim 1 : vector<8x512xf32>, i32 -> vector<8x512xf32>
    %c7 = arith.constant 7 : index
    %c0_68 = arith.constant 0 : index
    %84 = vector.load %arg3[%c7, %c0_68] : memref<9x512xf32, #tpu.memory_space<vmem>>, vector<1x512xf32>
    %85 = vector.broadcast %84 : vector<1x512xf32> to vector<8x512xf32>
    %86 = arith.mulf %83, %85 : vector<8x512xf32>
    %c7_69 = arith.constant 7 : index
    %c0_70 = arith.constant 0 : index
    %c0_71 = arith.constant 0 : index
    %87 = vector.load %arg6[%c7_69, %c0_70, %c0_71] : memref<9x16x8xf32, #tpu.memory_space<vmem>>, vector<1x16x8xf32>
    %88 = vector.shape_cast %87 : vector<1x16x8xf32> to vector<16x8xf32>
    %cst_72 = arith.constant dense<0.000000e+00> : vector<16x512xf32>
    %89 = tpu.matmul %88, %86, %cst_72 {dimension_numbers = #tpu.dot_dimension_numbers<[1], [0], [0], [1], [0, 0, 1, 1], [], []>} : vector<16x8xf32>, vector<8x512xf32>, vector<16x512xf32> -> vector<16x512xf32>
    %90 = arith.addf %82, %89 : vector<16x512xf32>
    %c495_i32 = arith.constant 495 : i32
    %91 = tpu.dynamic_rotate %31 by %c495_i32 dim 1 : vector<8x512xf32>, i32 -> vector<8x512xf32>
    %c8 = arith.constant 8 : index
    %c0_73 = arith.constant 0 : index
    %92 = vector.load %arg3[%c8, %c0_73] : memref<9x512xf32, #tpu.memory_space<vmem>>, vector<1x512xf32>
    %93 = vector.broadcast %92 : vector<1x512xf32> to vector<8x512xf32>
    %94 = arith.mulf %91, %93 : vector<8x512xf32>
    %c8_74 = arith.constant 8 : index
    %c0_75 = arith.constant 0 : index
    %c0_76 = arith.constant 0 : index
    %95 = vector.load %arg6[%c8_74, %c0_75, %c0_76] : memref<9x16x8xf32, #tpu.memory_space<vmem>>, vector<1x16x8xf32>
    %96 = vector.shape_cast %95 : vector<1x16x8xf32> to vector<16x8xf32>
    %cst_77 = arith.constant dense<0.000000e+00> : vector<16x512xf32>
    %97 = tpu.matmul %96, %94, %cst_77 {dimension_numbers = #tpu.dot_dimension_numbers<[1], [0], [0], [1], [0, 0, 1, 1], [], []>} : vector<16x8xf32>, vector<8x512xf32>, vector<16x512xf32> -> vector<16x512xf32>
    %98 = arith.addf %90, %97 : vector<16x512xf32>
    %99 = vector.broadcast %0 : vector<16x1xf32> to vector<16x512xf32>
    %100 = arith.mulf %98, %99 : vector<16x512xf32>
    %101 = vector.broadcast %1 : vector<16x1xf32> to vector<16x512xf32>
    %102 = arith.addf %100, %101 : vector<16x512xf32>
    %cst_78 = arith.constant 0.000000e+00 : f32
    %103 = vector.broadcast %cst_78 : f32 to vector<16x512xf32>
    %104 = arith.maximumf %102, %103 : vector<16x512xf32>
    %c17_i32_79 = arith.constant 17 : i32
    %105 = tpu.dynamic_rotate %104 by %c17_i32_79 dim 1 : vector<16x512xf32>, i32 -> vector<16x512xf32>
    %c0_80 = arith.constant 0 : index
    %c0_81 = arith.constant 0 : index
    %106 = vector.load %arg3[%c0_80, %c0_81] : memref<9x512xf32, #tpu.memory_space<vmem>>, vector<1x512xf32>
    %107 = vector.broadcast %106 : vector<1x512xf32> to vector<16x512xf32>
    %108 = arith.mulf %105, %107 : vector<16x512xf32>
    %c0_82 = arith.constant 0 : index
    %c0_83 = arith.constant 0 : index
    %c0_84 = arith.constant 0 : index
    %109 = vector.load %arg7[%c0_82, %c0_83, %c0_84] : memref<9x16x16xf32, #tpu.memory_space<vmem>>, vector<1x16x16xf32>
    %110 = vector.shape_cast %109 : vector<1x16x16xf32> to vector<16x16xf32>
    %cst_85 = arith.constant dense<0.000000e+00> : vector<16x512xf32>
    %111 = tpu.matmul %110, %108, %cst_85 {dimension_numbers = #tpu.dot_dimension_numbers<[1], [0], [0], [1], [0, 0, 1, 1], [], []>} : vector<16x16xf32>, vector<16x512xf32>, vector<16x512xf32> -> vector<16x512xf32>
    %c16_i32_86 = arith.constant 16 : i32
    %112 = tpu.dynamic_rotate %104 by %c16_i32_86 dim 1 : vector<16x512xf32>, i32 -> vector<16x512xf32>
    %c1_87 = arith.constant 1 : index
    %c0_88 = arith.constant 0 : index
    %113 = vector.load %arg3[%c1_87, %c0_88] : memref<9x512xf32, #tpu.memory_space<vmem>>, vector<1x512xf32>
    %114 = vector.broadcast %113 : vector<1x512xf32> to vector<16x512xf32>
    %115 = arith.mulf %112, %114 : vector<16x512xf32>
    %c1_89 = arith.constant 1 : index
    %c0_90 = arith.constant 0 : index
    %c0_91 = arith.constant 0 : index
    %116 = vector.load %arg7[%c1_89, %c0_90, %c0_91] : memref<9x16x16xf32, #tpu.memory_space<vmem>>, vector<1x16x16xf32>
    %117 = vector.shape_cast %116 : vector<1x16x16xf32> to vector<16x16xf32>
    %cst_92 = arith.constant dense<0.000000e+00> : vector<16x512xf32>
    %118 = tpu.matmul %117, %115, %cst_92 {dimension_numbers = #tpu.dot_dimension_numbers<[1], [0], [0], [1], [0, 0, 1, 1], [], []>} : vector<16x16xf32>, vector<16x512xf32>, vector<16x512xf32> -> vector<16x512xf32>
    %119 = arith.addf %111, %118 : vector<16x512xf32>
    %c15_i32_93 = arith.constant 15 : i32
    %120 = tpu.dynamic_rotate %104 by %c15_i32_93 dim 1 : vector<16x512xf32>, i32 -> vector<16x512xf32>
    %c2_94 = arith.constant 2 : index
    %c0_95 = arith.constant 0 : index
    %121 = vector.load %arg3[%c2_94, %c0_95] : memref<9x512xf32, #tpu.memory_space<vmem>>, vector<1x512xf32>
    %122 = vector.broadcast %121 : vector<1x512xf32> to vector<16x512xf32>
    %123 = arith.mulf %120, %122 : vector<16x512xf32>
    %c2_96 = arith.constant 2 : index
    %c0_97 = arith.constant 0 : index
    %c0_98 = arith.constant 0 : index
    %124 = vector.load %arg7[%c2_96, %c0_97, %c0_98] : memref<9x16x16xf32, #tpu.memory_space<vmem>>, vector<1x16x16xf32>
    %125 = vector.shape_cast %124 : vector<1x16x16xf32> to vector<16x16xf32>
    %cst_99 = arith.constant dense<0.000000e+00> : vector<16x512xf32>
    %126 = tpu.matmul %125, %123, %cst_99 {dimension_numbers = #tpu.dot_dimension_numbers<[1], [0], [0], [1], [0, 0, 1, 1], [], []>} : vector<16x16xf32>, vector<16x512xf32>, vector<16x512xf32> -> vector<16x512xf32>
    %127 = arith.addf %119, %126 : vector<16x512xf32>
    %c1_i32_100 = arith.constant 1 : i32
    %128 = tpu.dynamic_rotate %104 by %c1_i32_100 dim 1 : vector<16x512xf32>, i32 -> vector<16x512xf32>
    %c3_101 = arith.constant 3 : index
    %c0_102 = arith.constant 0 : index
    %129 = vector.load %arg3[%c3_101, %c0_102] : memref<9x512xf32, #tpu.memory_space<vmem>>, vector<1x512xf32>
    %130 = vector.broadcast %129 : vector<1x512xf32> to vector<16x512xf32>
    %131 = arith.mulf %128, %130 : vector<16x512xf32>
    %c3_103 = arith.constant 3 : index
    %c0_104 = arith.constant 0 : index
    %c0_105 = arith.constant 0 : index
    %132 = vector.load %arg7[%c3_103, %c0_104, %c0_105] : memref<9x16x16xf32, #tpu.memory_space<vmem>>, vector<1x16x16xf32>
    %133 = vector.shape_cast %132 : vector<1x16x16xf32> to vector<16x16xf32>
    %cst_106 = arith.constant dense<0.000000e+00> : vector<16x512xf32>
    %134 = tpu.matmul %133, %131, %cst_106 {dimension_numbers = #tpu.dot_dimension_numbers<[1], [0], [0], [1], [0, 0, 1, 1], [], []>} : vector<16x16xf32>, vector<16x512xf32>, vector<16x512xf32> -> vector<16x512xf32>
    %135 = arith.addf %127, %134 : vector<16x512xf32>
    %c4_107 = arith.constant 4 : index
    %c0_108 = arith.constant 0 : index
    %c0_109 = arith.constant 0 : index
    %136 = vector.load %arg7[%c4_107, %c0_108, %c0_109] : memref<9x16x16xf32, #tpu.memory_space<vmem>>, vector<1x16x16xf32>
    %137 = vector.shape_cast %136 : vector<1x16x16xf32> to vector<16x16xf32>
    %cst_110 = arith.constant dense<0.000000e+00> : vector<16x512xf32>
    %138 = tpu.matmul %137, %104, %cst_110 {dimension_numbers = #tpu.dot_dimension_numbers<[1], [0], [0], [1], [0, 0, 1, 1], [], []>} : vector<16x16xf32>, vector<16x512xf32>, vector<16x512xf32> -> vector<16x512xf32>
    %139 = arith.addf %135, %138 : vector<16x512xf32>
    %c511_i32_111 = arith.constant 511 : i32
    %140 = tpu.dynamic_rotate %104 by %c511_i32_111 dim 1 : vector<16x512xf32>, i32 -> vector<16x512xf32>
    %c5_112 = arith.constant 5 : index
    %c0_113 = arith.constant 0 : index
    %141 = vector.load %arg3[%c5_112, %c0_113] : memref<9x512xf32, #tpu.memory_space<vmem>>, vector<1x512xf32>
    %142 = vector.broadcast %141 : vector<1x512xf32> to vector<16x512xf32>
    %143 = arith.mulf %140, %142 : vector<16x512xf32>
    %c5_114 = arith.constant 5 : index
    %c0_115 = arith.constant 0 : index
    %c0_116 = arith.constant 0 : index
    %144 = vector.load %arg7[%c5_114, %c0_115, %c0_116] : memref<9x16x16xf32, #tpu.memory_space<vmem>>, vector<1x16x16xf32>
    %145 = vector.shape_cast %144 : vector<1x16x16xf32> to vector<16x16xf32>
    %cst_117 = arith.constant dense<0.000000e+00> : vector<16x512xf32>
    %146 = tpu.matmul %145, %143, %cst_117 {dimension_numbers = #tpu.dot_dimension_numbers<[1], [0], [0], [1], [0, 0, 1, 1], [], []>} : vector<16x16xf32>, vector<16x512xf32>, vector<16x512xf32> -> vector<16x512xf32>
    %147 = arith.addf %139, %146 : vector<16x512xf32>
    %c497_i32_118 = arith.constant 497 : i32
    %148 = tpu.dynamic_rotate %104 by %c497_i32_118 dim 1 : vector<16x512xf32>, i32 -> vector<16x512xf32>
    %c6_119 = arith.constant 6 : index
    %c0_120 = arith.constant 0 : index
    %149 = vector.load %arg3[%c6_119, %c0_120] : memref<9x512xf32, #tpu.memory_space<vmem>>, vector<1x512xf32>
    %150 = vector.broadcast %149 : vector<1x512xf32> to vector<16x512xf32>
    %151 = arith.mulf %148, %150 : vector<16x512xf32>
    %c6_121 = arith.constant 6 : index
    %c0_122 = arith.constant 0 : index
    %c0_123 = arith.constant 0 : index
    %152 = vector.load %arg7[%c6_121, %c0_122, %c0_123] : memref<9x16x16xf32, #tpu.memory_space<vmem>>, vector<1x16x16xf32>
    %153 = vector.shape_cast %152 : vector<1x16x16xf32> to vector<16x16xf32>
    %cst_124 = arith.constant dense<0.000000e+00> : vector<16x512xf32>
    %154 = tpu.matmul %153, %151, %cst_124 {dimension_numbers = #tpu.dot_dimension_numbers<[1], [0], [0], [1], [0, 0, 1, 1], [], []>} : vector<16x16xf32>, vector<16x512xf32>, vector<16x512xf32> -> vector<16x512xf32>
    %155 = arith.addf %147, %154 : vector<16x512xf32>
    %c496_i32_125 = arith.constant 496 : i32
    %156 = tpu.dynamic_rotate %104 by %c496_i32_125 dim 1 : vector<16x512xf32>, i32 -> vector<16x512xf32>
    %c7_126 = arith.constant 7 : index
    %c0_127 = arith.constant 0 : index
    %157 = vector.load %arg3[%c7_126, %c0_127] : memref<9x512xf32, #tpu.memory_space<vmem>>, vector<1x512xf32>
    %158 = vector.broadcast %157 : vector<1x512xf32> to vector<16x512xf32>
    %159 = arith.mulf %156, %158 : vector<16x512xf32>
    %c7_128 = arith.constant 7 : index
    %c0_129 = arith.constant 0 : index
    %c0_130 = arith.constant 0 : index
    %160 = vector.load %arg7[%c7_128, %c0_129, %c0_130] : memref<9x16x16xf32, #tpu.memory_space<vmem>>, vector<1x16x16xf32>
    %161 = vector.shape_cast %160 : vector<1x16x16xf32> to vector<16x16xf32>
    %cst_131 = arith.constant dense<0.000000e+00> : vector<16x512xf32>
    %162 = tpu.matmul %161, %159, %cst_131 {dimension_numbers = #tpu.dot_dimension_numbers<[1], [0], [0], [1], [0, 0, 1, 1], [], []>} : vector<16x16xf32>, vector<16x512xf32>, vector<16x512xf32> -> vector<16x512xf32>
    %163 = arith.addf %155, %162 : vector<16x512xf32>
    %c495_i32_132 = arith.constant 495 : i32
    %164 = tpu.dynamic_rotate %104 by %c495_i32_132 dim 1 : vector<16x512xf32>, i32 -> vector<16x512xf32>
    %c8_133 = arith.constant 8 : index
    %c0_134 = arith.constant 0 : index
    %165 = vector.load %arg3[%c8_133, %c0_134] : memref<9x512xf32, #tpu.memory_space<vmem>>, vector<1x512xf32>
    %166 = vector.broadcast %165 : vector<1x512xf32> to vector<16x512xf32>
    %167 = arith.mulf %164, %166 : vector<16x512xf32>
    %c8_135 = arith.constant 8 : index
    %c0_136 = arith.constant 0 : index
    %c0_137 = arith.constant 0 : index
    %168 = vector.load %arg7[%c8_135, %c0_136, %c0_137] : memref<9x16x16xf32, #tpu.memory_space<vmem>>, vector<1x16x16xf32>
    %169 = vector.shape_cast %168 : vector<1x16x16xf32> to vector<16x16xf32>
    %cst_138 = arith.constant dense<0.000000e+00> : vector<16x512xf32>
    %170 = tpu.matmul %169, %167, %cst_138 {dimension_numbers = #tpu.dot_dimension_numbers<[1], [0], [0], [1], [0, 0, 1, 1], [], []>} : vector<16x16xf32>, vector<16x512xf32>, vector<16x512xf32> -> vector<16x512xf32>
    %171 = arith.addf %163, %170 : vector<16x512xf32>
    %172 = vector.broadcast %2 : vector<16x1xf32> to vector<16x512xf32>
    %173 = arith.mulf %171, %172 : vector<16x512xf32>
    %174 = vector.broadcast %3 : vector<16x1xf32> to vector<16x512xf32>
    %175 = arith.addf %173, %174 : vector<16x512xf32>
    %cst_139 = arith.constant 0.000000e+00 : f32
    %176 = vector.broadcast %cst_139 : f32 to vector<16x512xf32>
    %177 = arith.maximumf %175, %176 : vector<16x512xf32>
    %c17_i32_140 = arith.constant 17 : i32
    %178 = tpu.dynamic_rotate %177 by %c17_i32_140 dim 1 : vector<16x512xf32>, i32 -> vector<16x512xf32>
    %c0_141 = arith.constant 0 : index
    %c0_142 = arith.constant 0 : index
    %179 = vector.load %arg3[%c0_141, %c0_142] : memref<9x512xf32, #tpu.memory_space<vmem>>, vector<1x512xf32>
    %180 = vector.broadcast %179 : vector<1x512xf32> to vector<16x512xf32>
    %181 = arith.mulf %178, %180 : vector<16x512xf32>
    %c0_143 = arith.constant 0 : index
    %c0_144 = arith.constant 0 : index
    %c0_145 = arith.constant 0 : index
    %182 = vector.load %arg8[%c0_143, %c0_144, %c0_145] : memref<9x1x16xf32, #tpu.memory_space<vmem>>, vector<1x1x16xf32>
    %183 = vector.shape_cast %182 : vector<1x1x16xf32> to vector<1x16xf32>
    %cst_146 = arith.constant dense<0.000000e+00> : vector<1x512xf32>
    %184 = tpu.matmul %183, %181, %cst_146 {dimension_numbers = #tpu.dot_dimension_numbers<[1], [0], [0], [1], [0, 0, 1, 1], [], []>} : vector<1x16xf32>, vector<16x512xf32>, vector<1x512xf32> -> vector<1x512xf32>
    %c16_i32_147 = arith.constant 16 : i32
    %185 = tpu.dynamic_rotate %177 by %c16_i32_147 dim 1 : vector<16x512xf32>, i32 -> vector<16x512xf32>
    %c1_148 = arith.constant 1 : index
    %c0_149 = arith.constant 0 : index
    %186 = vector.load %arg3[%c1_148, %c0_149] : memref<9x512xf32, #tpu.memory_space<vmem>>, vector<1x512xf32>
    %187 = vector.broadcast %186 : vector<1x512xf32> to vector<16x512xf32>
    %188 = arith.mulf %185, %187 : vector<16x512xf32>
    %c1_150 = arith.constant 1 : index
    %c0_151 = arith.constant 0 : index
    %c0_152 = arith.constant 0 : index
    %189 = vector.load %arg8[%c1_150, %c0_151, %c0_152] : memref<9x1x16xf32, #tpu.memory_space<vmem>>, vector<1x1x16xf32>
    %190 = vector.shape_cast %189 : vector<1x1x16xf32> to vector<1x16xf32>
    %cst_153 = arith.constant dense<0.000000e+00> : vector<1x512xf32>
    %191 = tpu.matmul %190, %188, %cst_153 {dimension_numbers = #tpu.dot_dimension_numbers<[1], [0], [0], [1], [0, 0, 1, 1], [], []>} : vector<1x16xf32>, vector<16x512xf32>, vector<1x512xf32> -> vector<1x512xf32>
    %192 = arith.addf %184, %191 : vector<1x512xf32>
    %c15_i32_154 = arith.constant 15 : i32
    %193 = tpu.dynamic_rotate %177 by %c15_i32_154 dim 1 : vector<16x512xf32>, i32 -> vector<16x512xf32>
    %c2_155 = arith.constant 2 : index
    %c0_156 = arith.constant 0 : index
    %194 = vector.load %arg3[%c2_155, %c0_156] : memref<9x512xf32, #tpu.memory_space<vmem>>, vector<1x512xf32>
    %195 = vector.broadcast %194 : vector<1x512xf32> to vector<16x512xf32>
    %196 = arith.mulf %193, %195 : vector<16x512xf32>
    %c2_157 = arith.constant 2 : index
    %c0_158 = arith.constant 0 : index
    %c0_159 = arith.constant 0 : index
    %197 = vector.load %arg8[%c2_157, %c0_158, %c0_159] : memref<9x1x16xf32, #tpu.memory_space<vmem>>, vector<1x1x16xf32>
    %198 = vector.shape_cast %197 : vector<1x1x16xf32> to vector<1x16xf32>
    %cst_160 = arith.constant dense<0.000000e+00> : vector<1x512xf32>
    %199 = tpu.matmul %198, %196, %cst_160 {dimension_numbers = #tpu.dot_dimension_numbers<[1], [0], [0], [1], [0, 0, 1, 1], [], []>} : vector<1x16xf32>, vector<16x512xf32>, vector<1x512xf32> -> vector<1x512xf32>
    %200 = arith.addf %192, %199 : vector<1x512xf32>
    %c1_i32_161 = arith.constant 1 : i32
    %201 = tpu.dynamic_rotate %177 by %c1_i32_161 dim 1 : vector<16x512xf32>, i32 -> vector<16x512xf32>
    %c3_162 = arith.constant 3 : index
    %c0_163 = arith.constant 0 : index
    %202 = vector.load %arg3[%c3_162, %c0_163] : memref<9x512xf32, #tpu.memory_space<vmem>>, vector<1x512xf32>
    %203 = vector.broadcast %202 : vector<1x512xf32> to vector<16x512xf32>
    %204 = arith.mulf %201, %203 : vector<16x512xf32>
    %c3_164 = arith.constant 3 : index
    %c0_165 = arith.constant 0 : index
    %c0_166 = arith.constant 0 : index
    %205 = vector.load %arg8[%c3_164, %c0_165, %c0_166] : memref<9x1x16xf32, #tpu.memory_space<vmem>>, vector<1x1x16xf32>
    %206 = vector.shape_cast %205 : vector<1x1x16xf32> to vector<1x16xf32>
    %cst_167 = arith.constant dense<0.000000e+00> : vector<1x512xf32>
    %207 = tpu.matmul %206, %204, %cst_167 {dimension_numbers = #tpu.dot_dimension_numbers<[1], [0], [0], [1], [0, 0, 1, 1], [], []>} : vector<1x16xf32>, vector<16x512xf32>, vector<1x512xf32> -> vector<1x512xf32>
    %208 = arith.addf %200, %207 : vector<1x512xf32>
    %c4_168 = arith.constant 4 : index
    %c0_169 = arith.constant 0 : index
    %c0_170 = arith.constant 0 : index
    %209 = vector.load %arg8[%c4_168, %c0_169, %c0_170] : memref<9x1x16xf32, #tpu.memory_space<vmem>>, vector<1x1x16xf32>
    %210 = vector.shape_cast %209 : vector<1x1x16xf32> to vector<1x16xf32>
    %cst_171 = arith.constant dense<0.000000e+00> : vector<1x512xf32>
    %211 = tpu.matmul %210, %177, %cst_171 {dimension_numbers = #tpu.dot_dimension_numbers<[1], [0], [0], [1], [0, 0, 1, 1], [], []>} : vector<1x16xf32>, vector<16x512xf32>, vector<1x512xf32> -> vector<1x512xf32>
    %212 = arith.addf %208, %211 : vector<1x512xf32>
    %c511_i32_172 = arith.constant 511 : i32
    %213 = tpu.dynamic_rotate %177 by %c511_i32_172 dim 1 : vector<16x512xf32>, i32 -> vector<16x512xf32>
    %c5_173 = arith.constant 5 : index
    %c0_174 = arith.constant 0 : index
    %214 = vector.load %arg3[%c5_173, %c0_174] : memref<9x512xf32, #tpu.memory_space<vmem>>, vector<1x512xf32>
    %215 = vector.broadcast %214 : vector<1x512xf32> to vector<16x512xf32>
    %216 = arith.mulf %213, %215 : vector<16x512xf32>
    %c5_175 = arith.constant 5 : index
    %c0_176 = arith.constant 0 : index
    %c0_177 = arith.constant 0 : index
    %217 = vector.load %arg8[%c5_175, %c0_176, %c0_177] : memref<9x1x16xf32, #tpu.memory_space<vmem>>, vector<1x1x16xf32>
    %218 = vector.shape_cast %217 : vector<1x1x16xf32> to vector<1x16xf32>
    %cst_178 = arith.constant dense<0.000000e+00> : vector<1x512xf32>
    %219 = tpu.matmul %218, %216, %cst_178 {dimension_numbers = #tpu.dot_dimension_numbers<[1], [0], [0], [1], [0, 0, 1, 1], [], []>} : vector<1x16xf32>, vector<16x512xf32>, vector<1x512xf32> -> vector<1x512xf32>
    %220 = arith.addf %212, %219 : vector<1x512xf32>
    %c497_i32_179 = arith.constant 497 : i32
    %221 = tpu.dynamic_rotate %177 by %c497_i32_179 dim 1 : vector<16x512xf32>, i32 -> vector<16x512xf32>
    %c6_180 = arith.constant 6 : index
    %c0_181 = arith.constant 0 : index
    %222 = vector.load %arg3[%c6_180, %c0_181] : memref<9x512xf32, #tpu.memory_space<vmem>>, vector<1x512xf32>
    %223 = vector.broadcast %222 : vector<1x512xf32> to vector<16x512xf32>
    %224 = arith.mulf %221, %223 : vector<16x512xf32>
    %c6_182 = arith.constant 6 : index
    %c0_183 = arith.constant 0 : index
    %c0_184 = arith.constant 0 : index
    %225 = vector.load %arg8[%c6_182, %c0_183, %c0_184] : memref<9x1x16xf32, #tpu.memory_space<vmem>>, vector<1x1x16xf32>
    %226 = vector.shape_cast %225 : vector<1x1x16xf32> to vector<1x16xf32>
    %cst_185 = arith.constant dense<0.000000e+00> : vector<1x512xf32>
    %227 = tpu.matmul %226, %224, %cst_185 {dimension_numbers = #tpu.dot_dimension_numbers<[1], [0], [0], [1], [0, 0, 1, 1], [], []>} : vector<1x16xf32>, vector<16x512xf32>, vector<1x512xf32> -> vector<1x512xf32>
    %228 = arith.addf %220, %227 : vector<1x512xf32>
    %c496_i32_186 = arith.constant 496 : i32
    %229 = tpu.dynamic_rotate %177 by %c496_i32_186 dim 1 : vector<16x512xf32>, i32 -> vector<16x512xf32>
    %c7_187 = arith.constant 7 : index
    %c0_188 = arith.constant 0 : index
    %230 = vector.load %arg3[%c7_187, %c0_188] : memref<9x512xf32, #tpu.memory_space<vmem>>, vector<1x512xf32>
    %231 = vector.broadcast %230 : vector<1x512xf32> to vector<16x512xf32>
    %232 = arith.mulf %229, %231 : vector<16x512xf32>
    %c7_189 = arith.constant 7 : index
    %c0_190 = arith.constant 0 : index
    %c0_191 = arith.constant 0 : index
    %233 = vector.load %arg8[%c7_189, %c0_190, %c0_191] : memref<9x1x16xf32, #tpu.memory_space<vmem>>, vector<1x1x16xf32>
    %234 = vector.shape_cast %233 : vector<1x1x16xf32> to vector<1x16xf32>
    %cst_192 = arith.constant dense<0.000000e+00> : vector<1x512xf32>
    %235 = tpu.matmul %234, %232, %cst_192 {dimension_numbers = #tpu.dot_dimension_numbers<[1], [0], [0], [1], [0, 0, 1, 1], [], []>} : vector<1x16xf32>, vector<16x512xf32>, vector<1x512xf32> -> vector<1x512xf32>
    %236 = arith.addf %228, %235 : vector<1x512xf32>
    %c495_i32_193 = arith.constant 495 : i32
    %237 = tpu.dynamic_rotate %177 by %c495_i32_193 dim 1 : vector<16x512xf32>, i32 -> vector<16x512xf32>
    %c8_194 = arith.constant 8 : index
    %c0_195 = arith.constant 0 : index
    %238 = vector.load %arg3[%c8_194, %c0_195] : memref<9x512xf32, #tpu.memory_space<vmem>>, vector<1x512xf32>
    %239 = vector.broadcast %238 : vector<1x512xf32> to vector<16x512xf32>
    %240 = arith.mulf %237, %239 : vector<16x512xf32>
    %c8_196 = arith.constant 8 : index
    %c0_197 = arith.constant 0 : index
    %c0_198 = arith.constant 0 : index
    %241 = vector.load %arg8[%c8_196, %c0_197, %c0_198] : memref<9x1x16xf32, #tpu.memory_space<vmem>>, vector<1x1x16xf32>
    %242 = vector.shape_cast %241 : vector<1x1x16xf32> to vector<1x16xf32>
    %cst_199 = arith.constant dense<0.000000e+00> : vector<1x512xf32>
    %243 = tpu.matmul %242, %240, %cst_199 {dimension_numbers = #tpu.dot_dimension_numbers<[1], [0], [0], [1], [0, 0, 1, 1], [], []>} : vector<1x16xf32>, vector<16x512xf32>, vector<1x512xf32> -> vector<1x512xf32>
    %244 = arith.addf %236, %243 : vector<1x512xf32>
    %245 = vector.broadcast %5 : vector<1x1xf32> to vector<1x512xf32>
    %246 = arith.addf %244, %245 : vector<1x512xf32>
    %247 = vector.extract_strided_slice %246 {offsets = [0, 0], sizes = [1, 256], strides = [1, 1]} : vector<1x512xf32> to vector<1x256xf32>
    %c0_200 = arith.constant 0 : index
    %c0_201 = arith.constant 0 : index
    %c0_202 = arith.constant 0 : index
    %248 = vector.load %arg10[%c0_200, %c0_201, %c0_202] : memref<2x1x256xf32, #tpu.memory_space<vmem>>, vector<1x1x256xf32>
    %249 = vector.shape_cast %248 : vector<1x1x256xf32> to vector<1x256xf32>
    %250 = vector.shape_cast %247 : vector<1x256xf32> to vector<1x1x256xf32>
    tpu.vector_store %arg10[%c0_200, %c0_201, %c0_202], %250 {strides = array<i32>} : memref<2x1x256xf32, #tpu.memory_space<vmem>>, vector<1x1x256xf32>,
    %251 = vector.extract_strided_slice %246 {offsets = [0, 256], sizes = [1, 256], strides = [1, 1]} : vector<1x512xf32> to vector<1x256xf32>
    %c1_203 = arith.constant 1 : index
    %c0_204 = arith.constant 0 : index
    %c0_205 = arith.constant 0 : index
    %252 = vector.load %arg10[%c1_203, %c0_204, %c0_205] : memref<2x1x256xf32, #tpu.memory_space<vmem>>, vector<1x1x256xf32>
    %253 = vector.shape_cast %252 : vector<1x1x256xf32> to vector<1x256xf32>
    %254 = vector.shape_cast %251 : vector<1x256xf32> to vector<1x1x256xf32>
    tpu.vector_store %arg10[%c1_203, %c0_204, %c0_205], %254 {strides = array<i32>} : memref<2x1x256xf32, #tpu.memory_space<vmem>>, vector<1x1x256xf32>,
    return
  }
  func.func @transform_0(%arg0: i32) -> (i32, i32, i32) {
    %c0_i32 = arith.constant 0 : i32
    %c0_i32_0 = arith.constant 0 : i32
    %c0_i32_1 = arith.constant 0 : i32
    return %arg0, %c0_i32, %c0_i32_0 : i32, i32, i32
  }
  func.func @transform_1(%arg0: i32) -> (i32, i32, i32) {
    %c0_i32 = arith.constant 0 : i32
    %c0_i32_0 = arith.constant 0 : i32
    %c0_i32_1 = arith.constant 0 : i32
    return %arg0, %c0_i32, %c0_i32_0 : i32, i32, i32
  }
  func.func @transform_2(%arg0: i32) -> (i32, i32) {
    %c0_i32 = arith.constant 0 : i32
    %c0_i32_0 = arith.constant 0 : i32
    %c0_i32_1 = arith.constant 0 : i32
    return %c0_i32, %c0_i32_0 : i32, i32
  }
  func.func @transform_3(%arg0: i32) -> (i32, i32) {
    %c0_i32 = arith.constant 0 : i32
    %c0_i32_0 = arith.constant 0 : i32
    %c0_i32_1 = arith.constant 0 : i32
    return %c0_i32, %c0_i32_0 : i32, i32
  }
  func.func @transform_4(%arg0: i32) -> (i32, i32) {
    %c0_i32 = arith.constant 0 : i32
    %c0_i32_0 = arith.constant 0 : i32
    %c0_i32_1 = arith.constant 0 : i32
    return %c0_i32, %c0_i32_0 : i32, i32
  }
  func.func @transform_5(%arg0: i32) -> (i32, i32, i32) {
    %c0_i32 = arith.constant 0 : i32
    %c0_i32_0 = arith.constant 0 : i32
    %c0_i32_1 = arith.constant 0 : i32
    %c0_i32_2 = arith.constant 0 : i32
    return %c0_i32, %c0_i32_0, %c0_i32_1 : i32, i32, i32
  }
  func.func @transform_6(%arg0: i32) -> (i32, i32, i32) {
    %c0_i32 = arith.constant 0 : i32
    %c0_i32_0 = arith.constant 0 : i32
    %c0_i32_1 = arith.constant 0 : i32
    %c0_i32_2 = arith.constant 0 : i32
    return %c0_i32, %c0_i32_0, %c0_i32_1 : i32, i32, i32
  }
  func.func @transform_7(%arg0: i32) -> (i32, i32, i32) {
    %c0_i32 = arith.constant 0 : i32
    %c0_i32_0 = arith.constant 0 : i32
    %c0_i32_1 = arith.constant 0 : i32
    %c0_i32_2 = arith.constant 0 : i32
    return %c0_i32, %c0_i32_0, %c0_i32_1 : i32, i32, i32
  }
  func.func @transform_8(%arg0: i32) -> (i32, i32) {
    %c0_i32 = arith.constant 0 : i32
    %c0_i32_0 = arith.constant 0 : i32
    %c0_i32_1 = arith.constant 0 : i32
    return %c0_i32, %c0_i32_0 : i32, i32
  }
  func.func @transform_9(%arg0: i32) -> (i32, i32, i32) {
    %c0_i32 = arith.constant 0 : i32
    %c0_i32_0 = arith.constant 0 : i32
    %c0_i32_1 = arith.constant 0 : i32
    return %arg0, %c0_i32, %c0_i32_0 : i32, i32, i32
  }
}

</mosaic_0001>

<llo_original>
// kernel: _lambda_.1
$region0: #{_lambda_.1}
  #allocation0 [shape = 'u32[]', space=smem, size = 0x4, offset = 0x4, fixed_abs, tag = 'smem constant byte address 0x4 - core index']
  #allocation1 [shape = 'u32[144,128]{1,0:T(1,128)}', space=vmem, size = 0x12000, scoped, tag = 'internal scratch']
  %s0 = inlined_call_operand.vmem [shape: f32[2,8,256], index: 0, kind: input, shape index: {}]
  %s1 = inlined_call_operand.vmem [shape: f32[2,4,64], index: 1, kind: input, shape index: {}]
  %s2 = inlined_call_operand.vmem [shape: f32[9,512], index: 2, kind: input, shape index: {}]
  %s3 = inlined_call_operand.vmem [shape: f32[64,256], index: 3, kind: input, shape index: {}]
  %s4 = inlined_call_operand.hbm [shape: f32[8,4], index: 4, kind: input, shape index: {}]
  %s5 = inlined_call_operand.vmem [shape: f32[9,16,8], index: 5, kind: input, shape index: {}]
  %s6 = inlined_call_operand.vmem [shape: f32[9,16,16], index: 6, kind: input, shape index: {}]
  %s7 = inlined_call_operand.hbm [shape: f32[9,1,16], index: 7, kind: input, shape index: {}]
  %s8 = inlined_call_operand.vmem [shape: f32[16,6], index: 8, kind: input, shape index: {}]
  %s9 = inlined_call_operand.vmem [shape: f32[2,1,256], index: 9, kind: output, shape index: {}]
  %s10 = sld [smem:[#allocation0]]
  $region54: #{_lambda_.1} parent=0
    _
  %s12 = ssub.s32 1, %s10
  %s13 = scalar_select 0, %s12, %s10
  $region1: #{_lambda_.1} parent=0
    #allocation2 [shape = 'u8[4096]{0}', space=vmem, size = 0x1000, scoped, tag = 'input window, operand 4, single buffered']
    #allocation3 [shape = 's32[1]{0}', space=sflag, size = 0x4, scoped, tag = 'scoped memory for _lambda_.1']
    #allocation4 [shape = 'u8[4608]{0}', space=vmem, size = 0x1400, scoped, tag = 'input window, operand 7, single buffered']
    #allocation5 [shape = 's32[1]{0}', space=sflag, size = 0x4, scoped, tag = 'scoped memory for _lambda_.1']
    %14 = vsyncpa [#allocation3], 0
    %15 = vsyncpa [#allocation5], 0
    // Predicated region
    $region2: #{_lambda_.1} parent=1 // pred_check
      _
    $region3: #{_lambda_.1} parent=1 // pred_check_branch
      %17 = sbr.rel (0) target = $region5
    $region4: #{_lambda_.1} parent=1 // pred_region
      _
    $region5: #{_lambda_.1} parent=1 // pred_fallthru
      _
    // Predicated region
    $region6: #{_lambda_.1} parent=1 // pred_check
      _
    $region7: #{_lambda_.1} parent=1 // pred_check_branch
      %19 = sbr.rel (0) target = $region9
    $region8: #{_lambda_.1} parent=1 // pred_region
      _
    $region9: #{_lambda_.1} parent=1 // pred_fallthru
      _
    // Predicated region
    $region10: #{_lambda_.1} parent=1 // pred_check
      _
    $region11: #{_lambda_.1} parent=1 // pred_check_branch
      %21 = sbr.rel (0) target = $region13
    $region12: #{_lambda_.1} parent=1 // pred_region
      _
    $region13: #{_lambda_.1} parent=1 // pred_fallthru
      _
    // Predicated region
    $region14: #{_lambda_.1} parent=1 // pred_check
      _
    $region15: #{_lambda_.1} parent=1 // pred_check_branch
      %23 = sbr.rel (0) target = $region17
    $region16: #{_lambda_.1} parent=1 // pred_region
      _
    $region17: #{_lambda_.1} parent=1 // pred_fallthru
      _
    // Predicated region
    $region18: #{_lambda_.1} parent=1 // pred_check
      _
    $region19: #{_lambda_.1} parent=1 // pred_check_branch
      %25 = sbr.rel (0) target = $region21
    $region20: #{_lambda_.1} parent=1 // pred_region
      %s27 = ssub.s32 128, 128
      %28 = vsyncadd [#allocation3], %s27
      %s30 = sshll.u32 [#allocation2], 4
      %s31 = int_to_ptr.vmem [resolvable:$true] %s30
      %33 = dma.hbm_to_vmem [thread:$0]  %s4, 128, %s31, [#allocation3]
    $region21: #{_lambda_.1} parent=1 // pred_fallthru
      _
    // Predicated region
    $region22: #{_lambda_.1} parent=1 // pred_check
      _
    $region23: #{_lambda_.1} parent=1 // pred_check_branch
      %35 = sbr.rel (0) target = $region25
    $region24: #{_lambda_.1} parent=1 // pred_region
      _
    $region25: #{_lambda_.1} parent=1 // pred_fallthru
      _
    // Predicated region
    $region26: #{_lambda_.1} parent=1 // pred_check
      _
    $region27: #{_lambda_.1} parent=1 // pred_check_branch
      %37 = sbr.rel (0) target = $region29
    $region28: #{_lambda_.1} parent=1 // pred_region
      _
    $region29: #{_lambda_.1} parent=1 // pred_fallthru
      _
    // Predicated region
    $region30: #{_lambda_.1} parent=1 // pred_check
      _
    $region31: #{_lambda_.1} parent=1 // pred_check_branch
      %39 = sbr.rel (0) target = $region33
    $region32: #{_lambda_.1} parent=1 // pred_region
      %s41 = ssub.s32 144, 144
      %42 = vsyncadd [#allocation5], %s41
      %s43 = sshll.u32 [#allocation4], 4
      %s44 = int_to_ptr.vmem [resolvable:$true] %s43
      %49 = dma.hbm_to_vmem [thread:$0]  %s7, 144, %s44, [#allocation5], 16, 16, 1
    $region33: #{_lambda_.1} parent=1 // pred_fallthru
      _
    // Predicated region
    $region34: #{_lambda_.1} parent=1 // pred_check
      _
    $region35: #{_lambda_.1} parent=1 // pred_check_branch
      %51 = sbr.rel (0) target = $region37
    $region36: #{_lambda_.1} parent=1 // pred_region
      _
    $region37: #{_lambda_.1} parent=1 // pred_fallthru
      _
    // Predicated region
    $region38: #{_lambda_.1} parent=1 // pred_check
      _
    $region39: #{_lambda_.1} parent=1 // pred_check_branch
      %53 = sbr.rel (0) target = $region41
    $region40: #{_lambda_.1} parent=1 // pred_region
      %54 = dma.done [#allocation3], 128
    $region41: #{_lambda_.1} parent=1 // pred_fallthru
      _
    // Predicated region
    $region42: #{_lambda_.1} parent=1 // pred_check
      _
    $region43: #{_lambda_.1} parent=1 // pred_check_branch
      %56 = sbr.rel (0) target = $region45
    $region44: #{_lambda_.1} parent=1 // pred_region
      %57 = dma.done [#allocation5], 144
    $region45: #{_lambda_.1} parent=1 // pred_fallthru
      _
    %v58 = vld [vmem:[%s8] sm:$0xff]
    %v59 = vld [vmem:[%s8 + $0x8] sm:$0xff]
    %v60 = vld [vmem:[%s8] sm:$0x1]
    %v61 = vld [vmem:[%s1] sm:$0xf]
    %v62 = vld [vmem:[%s3] sm:$0xff]
    %v63 = vld [vmem:[%s3 + $0x8] sm:$0xff]
    %v64 = vld [vmem:[%s3 + $0x10] sm:$0xff]
    %v65 = vld [vmem:[%s3 + $0x18] sm:$0xff]
    %v66 = vld [vmem:[%s3 + $0x20] sm:$0xff]
    %v67 = vld [vmem:[%s3 + $0x28] sm:$0xff]
    %v68 = vld [vmem:[%s3 + $0x30] sm:$0xff]
    %v69 = vld [vmem:[%s3 + $0x38] sm:$0xff]
    %v70 = vld [vmem:[%s3 + $0x40] sm:$0xff]
    %v71 = vld [vmem:[%s3 + $0x48] sm:$0xff]
    %v72 = vld [vmem:[%s3 + $0x50] sm:$0xff]
    %v73 = vld [vmem:[%s3 + $0x58] sm:$0xff]
    %v74 = vld [vmem:[%s3 + $0x60] sm:$0xff]
    %v75 = vld [vmem:[%s3 + $0x68] sm:$0xff]
    %v76 = vld [vmem:[%s3 + $0x70] sm:$0xff]
    %v77 = vld [vmem:[%s3 + $0x78] sm:$0xff]
    %vm78 = vcmask 523264
    %v80 = vsel %vm78, %v61, 0
    %82 = vmatprep.subr.mxu0 0.0
    %83 = vmatpush1.msra.mxu0 0.0
    %84 = vmatprep.subr.mxu0 0.0
    %85 = vmatpush1.msra.mxu0 0.0
    %86 = vmatprep.subr.mxu0 0.0
    %87 = vmatpush1.msra.mxu0 0.0
    %88 = vmatprep.subr.mxu0 0.0
    %89 = vmatpush1.msra.mxu0 0.0
    %90 = vmatprep.subr.mxu0 0.0
    %91 = vmatpush1.msra.mxu0 0.0
    %92 = vmatprep.subr.mxu0 0.0
    %93 = vmatpush1.msra.mxu0 0.0
    %94 = vmatprep.subr.mxu0 0.0
    %95 = vmatpush1.msra.mxu0 0.0
    %96 = vmatprep.subr.mxu0 0.0
    %97 = vmatpush1.msra.mxu0 0.0
    %98 = vmatprep.subr.mxu0 %v77
    %99 = vmatpush1.msra.mxu0 %v76
    %100 = vmatprep.subr.mxu0 %v75
    %101 = vmatpush1.msra.mxu0 %v74
    %102 = vmatprep.subr.mxu0 %v73
    %103 = vmatpush1.msra.mxu0 %v72
    %104 = vmatprep.subr.mxu0 %v71
    %105 = vmatpush1.msra.mxu0 %v70
    %106 = vmatprep.subr.mxu0 %v69
    %107 = vmatpush1.msra.mxu0 %v68
    %108 = vmatprep.subr.mxu0 %v67
    %109 = vmatpush1.msra.mxu0 %v66
    %110 = vmatprep.subr.mxu0 %v65
    %111 = vmatpush1.msra.mxu0 %v64
    %112 = vmatprep.subr.mxu0 %v63
    %113 = vmatpush1.msra.mxu0 %v62
    %114 = vmatprep.subr.mxu0 0.0
    %115 = vmatpush2.msra.mxu0 0.0
    %116 = vmatprep.subr.mxu0 0.0
    %117 = vmatpush2.msra.mxu0 0.0
    %118 = vmatprep.subr.mxu0 0.0
    %119 = vmatpush2.msra.mxu0 0.0
    %120 = vmatprep.subr.mxu0 0.0
    %121 = vmatpush2.msra.mxu0 0.0
    %122 = vmatprep.subr.mxu0 0.0
    %123 = vmatpush2.msra.mxu0 0.0
    %124 = vmatprep.subr.mxu0 0.0
    %125 = vmatpush2.msra.mxu0 0.0
    %126 = vmatprep.subr.mxu0 0.0
    %127 = vmatpush2.msra.mxu0 0.0
    %128 = vmatprep.subr.mxu0 0.0
    %129 = vmatpush2.msra.mxu0 0.0
    %130 = vmatprep.subr.mxu0 0.0
    %131 = vmatpush2.msra.mxu0 0.0
    %132 = vmatprep.subr.mxu0 0.0
    %133 = vmatpush2.msra.mxu0 0.0
    %134 = vmatprep.subr.mxu0 0.0
    %135 = vmatpush2.msra.mxu0 0.0
    %136 = vmatprep.subr.mxu0 0.0
    %137 = vmatpush2.msra.mxu0 0.0
    %138 = vmatprep.subr.mxu0 0.0
    %139 = vmatpush2.msra.mxu0 0.0
    %140 = vmatprep.subr.mxu0 0.0
    %141 = vmatpush2.msra.mxu0 0.0
    %142 = vmatprep.subr.mxu0 0.0
    %143 = vmatpush2.msra.mxu0 0.0
    %144 = vmatprep.subr.mxu0 0.0
    %145 = vmatpush2.msra.mxu0 0.0
    %146 = vmatprep.mubr.f32.mxu0 0.0
    %147 = vmatmul.mubr.f32.gmra.mxu0 %v80
    %v148 = vpop.f32.mrf.mxu0
    %v149 = vadd.f32 0.0, %v148
    %v150 = vpop.f32.mrf.mxu0
    %v151 = vadd.f32 0.0, %v150
    %152 = vdwg.mxu0
    %s153 = scalar_lea.vmem %s1, 4
    %v154 = vld [vmem:[%s153] sm:$0xf]
    %v156 = vsel %vm78, %v154, 0
    %158 = vmatprep.subr.mxu0 0.0
    %159 = vmatpush1.msra.mxu0 0.0
    %160 = vmatprep.subr.mxu0 0.0
    %161 = vmatpush1.msra.mxu0 0.0
    %162 = vmatprep.subr.mxu0 0.0
    %163 = vmatpush1.msra.mxu0 0.0
    %164 = vmatprep.subr.mxu0 0.0
    %165 = vmatpush1.msra.mxu0 0.0
    %166 = vmatprep.subr.mxu0 0.0
    %167 = vmatpush1.msra.mxu0 0.0
    %168 = vmatprep.subr.mxu0 0.0
    %169 = vmatpush1.msra.mxu0 0.0
    %170 = vmatprep.subr.mxu0 0.0
    %171 = vmatpush1.msra.mxu0 0.0
    %172 = vmatprep.subr.mxu0 0.0
    %173 = vmatpush1.msra.mxu0 0.0
    %174 = vmatprep.subr.mxu0 %v77
    %175 = vmatpush1.msra.mxu0 %v76
    %176 = vmatprep.subr.mxu0 %v75
    %177 = vmatpush1.msra.mxu0 %v74
    %178 = vmatprep.subr.mxu0 %v73
    %179 = vmatpush1.msra.mxu0 %v72
    %180 = vmatprep.subr.mxu0 %v71
    %181 = vmatpush1.msra.mxu0 %v70
    %182 = vmatprep.subr.mxu0 %v69
    %183 = vmatpush1.msra.mxu0 %v68
    %184 = vmatprep.subr.mxu0 %v67
    %185 = vmatpush1.msra.mxu0 %v66
    %186 = vmatprep.subr.mxu0 %v65
    %187 = vmatpush1.msra.mxu0 %v64
    %188 = vmatprep.subr.mxu0 %v63
    %189 = vmatpush1.msra.mxu0 %v62
    %190 = vmatprep.subr.mxu0 0.0
    %191 = vmatpush2.msra.mxu0 0.0
    %192 = vmatprep.subr.mxu0 0.0
    %193 = vmatpush2.msra.mxu0 0.0
    %194 = vmatprep.subr.mxu0 0.0
    %195 = vmatpush2.msra.mxu0 0.0
    %196 = vmatprep.subr.mxu0 0.0
    %197 = vmatpush2.msra.mxu0 0.0
    %198 = vmatprep.subr.mxu0 0.0
    %199 = vmatpush2.msra.mxu0 0.0
    %200 = vmatprep.subr.mxu0 0.0
    %201 = vmatpush2.msra.mxu0 0.0
    %202 = vmatprep.subr.mxu0 0.0
    %203 = vmatpush2.msra.mxu0 0.0
    %204 = vmatprep.subr.mxu0 0.0
    %205 = vmatpush2.msra.mxu0 0.0
    %206 = vmatprep.subr.mxu0 0.0
    %207 = vmatpush2.msra.mxu0 0.0
    %208 = vmatprep.subr.mxu0 0.0
    %209 = vmatpush2.msra.mxu0 0.0
    %210 = vmatprep.subr.mxu0 0.0
    %211 = vmatpush2.msra.mxu0 0.0
    %212 = vmatprep.subr.mxu0 0.0
    %213 = vmatpush2.msra.mxu0 0.0
    %214 = vmatprep.subr.mxu0 0.0
    %215 = vmatpush2.msra.mxu0 0.0
    %216 = vmatprep.subr.mxu0 0.0
    %217 = vmatpush2.msra.mxu0 0.0
    %218 = vmatprep.subr.mxu0 0.0
    %219 = vmatpush2.msra.mxu0 0.0
    %220 = vmatprep.subr.mxu0 0.0
    %221 = vmatpush2.msra.mxu0 0.0
    %222 = vmatprep.mubr.f32.mxu0 0.0
    %223 = vmatmul.mubr.f32.gmra.mxu0 %v156
    %v224 = vpop.f32.mrf.mxu0
    %v225 = vadd.f32 0.0, %v224
    %v226 = vpop.f32.mrf.mxu0
    %v227 = vadd.f32 0.0, %v226
    %228 = vdwg.mxu0
    %v229 = vld [vmem:[#allocation2] sm:$0xff]
    %231 = vset.pattern.permute.xlu0 4
    %232 = vperm.xlu0 %231, %v58
    %v233 = vpop.permute.xlu0 %232
    %vm235 = vcmask 31744
    %v237 = vsel %vm235, %v229, 0
    %vm239 = vcmask 1043456
    %v241 = vsel %vm239, %v149, 0
    %v244 = vsel %vm239, %v151, 0
    %v247 = vsel %vm239, %v225, 0
    %v250 = vsel %vm239, %v227, 0
    %252 = vmatprep.subr.mxu0 0.0
    %253 = vmatpush1.msra.mxu0 0.0
    %254 = vmatprep.subr.mxu0 0.0
    %255 = vmatpush1.msra.mxu0 0.0
    %256 = vmatprep.subr.mxu0 0.0
    %257 = vmatpush1.msra.mxu0 0.0
    %258 = vmatprep.subr.mxu0 0.0
    %259 = vmatpush1.msra.mxu0 0.0
    %260 = vmatprep.subr.mxu0 0.0
    %261 = vmatpush1.msra.mxu0 0.0
    %262 = vmatprep.subr.mxu0 0.0
    %263 = vmatpush1.msra.mxu0 0.0
    %264 = vmatprep.subr.mxu0 0.0
    %265 = vmatpush1.msra.mxu0 0.0
    %266 = vmatprep.subr.mxu0 0.0
    %267 = vmatpush1.msra.mxu0 0.0
    %268 = vmatprep.subr.mxu0 0.0
    %269 = vmatpush1.msra.mxu0 0.0
    %270 = vmatprep.subr.mxu0 0.0
    %271 = vmatpush1.msra.mxu0 0.0
    %272 = vmatprep.subr.mxu0 0.0
    %273 = vmatpush1.msra.mxu0 0.0
    %274 = vmatprep.subr.mxu0 0.0
    %275 = vmatpush1.msra.mxu0 0.0
    %276 = vmatprep.subr.mxu0 0.0
    %277 = vmatpush1.msra.mxu0 0.0
    %278 = vmatprep.subr.mxu0 0.0
    %279 = vmatpush1.msra.mxu0 0.0
    %280 = vmatprep.subr.mxu0 0.0
    %281 = vmatpush1.msra.mxu0 0.0
    %282 = vmatprep.subr.mxu0 %v244
    %283 = vmatpush1.msra.mxu0 %v241
    %284 = vmatprep.subr.mxu0 0.0
    %285 = vmatpush2.msra.mxu0 0.0
    %286 = vmatprep.subr.mxu0 0.0
    %287 = vmatpush2.msra.mxu0 0.0
    %288 = vmatprep.subr.mxu0 0.0
    %289 = vmatpush2.msra.mxu0 0.0
    %290 = vmatprep.subr.mxu0 0.0
    %291 = vmatpush2.msra.mxu0 0.0
    %292 = vmatprep.subr.mxu0 0.0
    %293 = vmatpush2.msra.mxu0 0.0
    %294 = vmatprep.subr.mxu0 0.0
    %295 = vmatpush2.msra.mxu0 0.0
    %296 = vmatprep.subr.mxu0 0.0
    %297 = vmatpush2.msra.mxu0 0.0
    %298 = vmatprep.subr.mxu0 0.0
    %299 = vmatpush2.msra.mxu0 0.0
    %300 = vmatprep.subr.mxu0 0.0
    %301 = vmatpush2.msra.mxu0 0.0
    %302 = vmatprep.subr.mxu0 0.0
    %303 = vmatpush2.msra.mxu0 0.0
    %304 = vmatprep.subr.mxu0 0.0
    %305 = vmatpush2.msra.mxu0 0.0
    %306 = vmatprep.subr.mxu0 0.0
    %307 = vmatpush2.msra.mxu0 0.0
    %308 = vmatprep.subr.mxu0 0.0
    %309 = vmatpush2.msra.mxu0 0.0
    %310 = vmatprep.subr.mxu0 0.0
    %311 = vmatpush2.msra.mxu0 0.0
    %312 = vmatprep.subr.mxu0 0.0
    %313 = vmatpush2.msra.mxu0 0.0
    %314 = vmatprep.subr.mxu0 0.0
    %315 = vmatpush2.msra.mxu0 0.0
    %316 = vmatprep.mubr.f32.mxu0 0.0
    %317 = vmatmul.mubr.f32.gmra.mxu0 %v237
    %v318 = vpop.f32.mrf.mxu0
    %v319 = vadd.f32 %v233, %v318
    %v320 = vpop.f32.mrf.mxu0
    %v321 = vadd.f32 %v233, %v320
    %322 = vdwg.mxu0
    %323 = vmatprep.subr.mxu0 0.0
    %324 = vmatpush1.msra.mxu0 0.0
    %325 = vmatprep.subr.mxu0 0.0
    %326 = vmatpush1.msra.mxu0 0.0
    %327 = vmatprep.subr.mxu0 0.0
    %328 = vmatpush1.msra.mxu0 0.0
    %329 = vmatprep.subr.mxu0 0.0
    %330 = vmatpush1.msra.mxu0 0.0
    %331 = vmatprep.subr.mxu0 0.0
    %332 = vmatpush1.msra.mxu0 0.0
    %333 = vmatprep.subr.mxu0 0.0
    %334 = vmatpush1.msra.mxu0 0.0
    %335 = vmatprep.subr.mxu0 0.0
    %336 = vmatpush1.msra.mxu0 0.0
    %337 = vmatprep.subr.mxu0 0.0
    %338 = vmatpush1.msra.mxu0 0.0
    %339 = vmatprep.subr.mxu0 0.0
    %340 = vmatpush1.msra.mxu0 0.0
    %341 = vmatprep.subr.mxu0 0.0
    %342 = vmatpush1.msra.mxu0 0.0
    %343 = vmatprep.subr.mxu0 0.0
    %344 = vmatpush1.msra.mxu0 0.0
    %345 = vmatprep.subr.mxu0 0.0
    %346 = vmatpush1.msra.mxu0 0.0
    %347 = vmatprep.subr.mxu0 0.0
    %348 = vmatpush1.msra.mxu0 0.0
    %349 = vmatprep.subr.mxu0 0.0
    %350 = vmatpush1.msra.mxu0 0.0
    %351 = vmatprep.subr.mxu0 0.0
    %352 = vmatpush1.msra.mxu0 0.0
    %353 = vmatprep.subr.mxu0 %v250
    %354 = vmatpush1.msra.mxu0 %v247
    %355 = vmatprep.subr.mxu0 0.0
    %356 = vmatpush2.msra.mxu0 0.0
    %357 = vmatprep.subr.mxu0 0.0
    %358 = vmatpush2.msra.mxu0 0.0
    %359 = vmatprep.subr.mxu0 0.0
    %360 = vmatpush2.msra.mxu0 0.0
    %361 = vmatprep.subr.mxu0 0.0
    %362 = vmatpush2.msra.mxu0 0.0
    %363 = vmatprep.subr.mxu0 0.0
    %364 = vmatpush2.msra.mxu0 0.0
    %365 = vmatprep.subr.mxu0 0.0
    %366 = vmatpush2.msra.mxu0 0.0
    %367 = vmatprep.subr.mxu0 0.0
    %368 = vmatpush2.msra.mxu0 0.0
    %369 = vmatprep.subr.mxu0 0.0
    %370 = vmatpush2.msra.mxu0 0.0
    %371 = vmatprep.subr.mxu0 0.0
    %372 = vmatpush2.msra.mxu0 0.0
    %373 = vmatprep.subr.mxu0 0.0
    %374 = vmatpush2.msra.mxu0 0.0
    %375 = vmatprep.subr.mxu0 0.0
    %376 = vmatpush2.msra.mxu0 0.0
    %377 = vmatprep.subr.mxu0 0.0
    %378 = vmatpush2.msra.mxu0 0.0
    %379 = vmatprep.subr.mxu0 0.0
    %380 = vmatpush2.msra.mxu0 0.0
    %381 = vmatprep.subr.mxu0 0.0
    %382 = vmatpush2.msra.mxu0 0.0
    %383 = vmatprep.subr.mxu0 0.0
    %384 = vmatpush2.msra.mxu0 0.0
    %385 = vmatprep.subr.mxu0 0.0
    %386 = vmatpush2.msra.mxu0 0.0
    %387 = vmatprep.mubr.f32.mxu0 0.0
    %388 = vmatmul.mubr.f32.gmra.mxu0 %v237
    %v389 = vpop.f32.mrf.mxu0
    %v390 = vadd.f32 %v233, %v389
    %v391 = vpop.f32.mrf.mxu0
    %v392 = vadd.f32 %v233, %v391
    %393 = vdwg.mxu0
    %v394 = vld [vmem:[%s0] sm:$0xff]
    %v395 = vld [vmem:[%s0 + $0x8] sm:$0xff]
    %s396 = scalar_lea.vmem %s0, 16
    %v397 = vld [vmem:[%s396] sm:$0xff]
    %v398 = vld [vmem:[%s396 + $0x8] sm:$0xff]
    %v399 = vsub.f32 0.0, %v319
    %v400 = vsub.f32 0.0, %v321
    %v401 = vsub.f32 0.0, %v390
    %v402 = vsub.f32 0.0, %v392
    %v403 = vmul.f32 %v399, 1.442695
    %v404 = vpow.pop %v403
    %v405 = vmul.f32 %v400, 1.442695
    %v406 = vpow.pop %v405
    %v407 = vmul.f32 %v401, 1.442695
    %v408 = vpow.pop %v407
    %v409 = vmul.f32 %v402, 1.442695
    %v410 = vpow.pop %v409
    %v411 = vadd.f32 %v404, 1.0
    %v412 = vadd.f32 %v406, 1.0
    %v413 = vadd.f32 %v408, 1.0
    %v414 = vadd.f32 %v410, 1.0
    %v415 = vrcp.pop %v411
    %v416 = vmul.f32 1.0, %v415
    %v417 = vrcp.pop %v412
    %v418 = vmul.f32 1.0, %v417
    %v419 = vrcp.pop %v413
    %v420 = vmul.f32 1.0, %v419
    %v421 = vrcp.pop %v414
    %v422 = vmul.f32 1.0, %v421
    %v423 = vmul.f32 %v394, %v416
    %v424 = vmul.f32 %v395, %v418
    %v425 = vmul.f32 %v397, %v420
    %v426 = vmul.f32 %v398, %v422
    %427 = vrot.lane.b32.xlu0 %v423, 17
    %v428 = vpop.permute.xlu0 %427
    %429 = vrot.lane.b32.xlu0 %v424, 17
    %v430 = vpop.permute.xlu0 %429
    %431 = vrot.lane.b32.xlu0 %v425, 17
    %v432 = vpop.permute.xlu0 %431
    %433 = vrot.lane.b32.xlu0 %v426, 17
    %v434 = vpop.permute.xlu0 %433
    %v435 = vlaneseq
    %v436 = vand.u32 %v435, 127
    %vm437 = vcmp.lt.s32.totalorder %v436, 17
    %v438 = vsel %vm437, %v432, %v434
    %v439 = vsel %vm437, %v430, %v432
    %v440 = vsel %vm437, %v428, %v430
    %v441 = vsel %vm437, %v434, %v428
    %v442 = vld [vmem:[%s2] ss:$8 sm:$0xf]
    %v444 = vlaneseq
    %v445 = vshrl.u32 %v444, 7
    %v446 = vsub.s32 0, %v445
    %v447 = vrot.slane %v442, %v446
    %v448 = vlaneseq
    %v449 = vshrl.u32 %v448, 7
    %v450 = vsub.s32 1, %v449
    %v451 = vrot.slane %v442, %v450
    %v452 = vlaneseq
    %v453 = vshrl.u32 %v452, 7
    %v454 = vsub.s32 2, %v453
    %v455 = vrot.slane %v442, %v454
    %v456 = vlaneseq
    %v457 = vshrl.u32 %v456, 7
    %v458 = vsub.s32 3, %v457
    %v459 = vrot.slane %v442, %v458
    %v464 = vmul.f32 %v441, %v447
    %v465 = vmul.f32 %v440, %v451
    %v466 = vmul.f32 %v439, %v455
    %v467 = vmul.f32 %v438, %v459
    %v468 = vld [vmem:[%s5] sm:$0xff]
    %v469 = vld [vmem:[%s5 + $0x8] sm:$0xff]
    %470 = vrot.lane.b32.xlu0 %v423, 16
    %v471 = vpop.permute.xlu0 %470
    %472 = vrot.lane.b32.xlu0 %v424, 16
    %v473 = vpop.permute.xlu0 %472
    %474 = vrot.lane.b32.xlu0 %v425, 16
    %v475 = vpop.permute.xlu0 %474
    %476 = vrot.lane.b32.xlu0 %v426, 16
    %v477 = vpop.permute.xlu0 %476
    %vm478 = vcmp.lt.s32.totalorder %v436, 16
    %v479 = vsel %vm478, %v475, %v477
    %v480 = vsel %vm478, %v473, %v475
    %v481 = vsel %vm478, %v471, %v473
    %v482 = vsel %vm478, %v477, %v471
    %s483 = scalar_lea.vmem %s2, 1
    %v484 = vld [vmem:[%s483] ss:$8 sm:$0xf]
    %v486 = vlaneseq
    %v487 = vshrl.u32 %v486, 7
    %v488 = vsub.s32 0, %v487
    %v489 = vrot.slane %v484, %v488
    %v490 = vlaneseq
    %v491 = vshrl.u32 %v490, 7
    %v492 = vsub.s32 1, %v491
    %v493 = vrot.slane %v484, %v492
    %v494 = vlaneseq
    %v495 = vshrl.u32 %v494, 7
    %v496 = vsub.s32 2, %v495
    %v497 = vrot.slane %v484, %v496
    %v498 = vlaneseq
    %v499 = vshrl.u32 %v498, 7
    %v500 = vsub.s32 3, %v499
    %v501 = vrot.slane %v484, %v500
    %v506 = vmul.f32 %v482, %v489
    %v507 = vmul.f32 %v481, %v493
    %v508 = vmul.f32 %v480, %v497
    %v509 = vmul.f32 %v479, %v501
    %s510 = scalar_lea.vmem %s5, 16
    %v511 = vld [vmem:[%s510] sm:$0xff]
    %v512 = vld [vmem:[%s510 + $0x8] sm:$0xff]
    %vm513 = vcmask 64512
    %v515 = vsel %vm513, %v511, 0
    %v518 = vsel %vm513, %v512, 0
    %520 = vmatprep.subr.mxu0 0.0
    %521 = vmatpush1.msra.mxu0 0.0
    %522 = vmatprep.subr.mxu0 0.0
    %523 = vmatpush1.msra.mxu0 0.0
    %524 = vmatprep.subr.mxu0 0.0
    %525 = vmatpush1.msra.mxu0 0.0
    %526 = vmatprep.subr.mxu0 0.0
    %527 = vmatpush1.msra.mxu0 0.0
    %528 = vmatprep.subr.mxu0 0.0
    %529 = vmatpush1.msra.mxu0 0.0
    %530 = vmatprep.subr.mxu0 0.0
    %531 = vmatpush1.msra.mxu0 0.0
    %532 = vmatprep.subr.mxu0 0.0
    %533 = vmatpush1.msra.mxu0 0.0
    %534 = vmatprep.subr.mxu0 0.0
    %535 = vmatpush1.msra.mxu0 0.0
    %536 = vmatprep.subr.mxu0 0.0
    %537 = vmatpush1.msra.mxu0 0.0
    %538 = vmatprep.subr.mxu0 0.0
    %539 = vmatpush1.msra.mxu0 0.0
    %540 = vmatprep.subr.mxu0 0.0
    %541 = vmatpush1.msra.mxu0 0.0
    %542 = vmatprep.subr.mxu0 0.0
    %543 = vmatpush1.msra.mxu0 0.0
    %544 = vmatprep.subr.mxu0 0.0
    %545 = vmatpush1.msra.mxu0 0.0
    %546 = vmatprep.subr.mxu0 0.0
    %547 = vmatpush1.msra.mxu0 0.0
    %548 = vmatprep.subr.mxu0 0.0
    %549 = vmatpush1.msra.mxu0 0.0
    %550 = vmatprep.subr.mxu0 %v507
    %551 = vmatpush1.msra.mxu0 %v506
    %552 = vmatprep.subr.mxu0 0.0
    %553 = vmatpush2.msra.mxu0 0.0
    %554 = vmatprep.subr.mxu0 0.0
    %555 = vmatpush2.msra.mxu0 0.0
    %556 = vmatprep.subr.mxu0 0.0
    %557 = vmatpush2.msra.mxu0 0.0
    %558 = vmatprep.subr.mxu0 0.0
    %559 = vmatpush2.msra.mxu0 0.0
    %560 = vmatprep.subr.mxu0 0.0
    %561 = vmatpush2.msra.mxu0 0.0
    %562 = vmatprep.subr.mxu0 0.0
    %563 = vmatpush2.msra.mxu0 0.0
    %564 = vmatprep.subr.mxu0 0.0
    %565 = vmatpush2.msra.mxu0 0.0
    %566 = vmatprep.subr.mxu0 0.0
    %567 = vmatpush2.msra.mxu0 0.0
    %568 = vmatprep.subr.mxu0 0.0
    %569 = vmatpush2.msra.mxu0 0.0
    %570 = vmatprep.subr.mxu0 0.0
    %571 = vmatpush2.msra.mxu0 0.0
    %572 = vmatprep.subr.mxu0 0.0
    %573 = vmatpush2.msra.mxu0 0.0
    %574 = vmatprep.subr.mxu0 0.0
    %575 = vmatpush2.msra.mxu0 0.0
    %576 = vmatprep.subr.mxu0 0.0
    %577 = vmatpush2.msra.mxu0 0.0
    %578 = vmatprep.subr.mxu0 0.0
    %579 = vmatpush2.msra.mxu0 0.0
    %580 = vmatprep.subr.mxu0 0.0
    %581 = vmatpush2.msra.mxu0 0.0
    %582 = vmatprep.subr.mxu0 0.0
    %583 = vmatpush2.msra.mxu0 0.0
    %584 = vmatprep.mubr.f32.mxu0 0.0
    %585 = vmatmul.mubr.f32.gmra.mxu0 %v515
    %v586 = vpop.f32.mrf.mxu0
    %v587 = vadd.f32 0.0, %v586
    %v588 = vpop.f32.mrf.mxu0
    %v589 = vadd.f32 0.0, %v588
    %590 = vmatprep.mubr.f32.mxu0 0.0
    %591 = vmatmul.mubr.f32.gmra.mxu0 %v518
    %v592 = vpop.f32.mrf.mxu0
    %v593 = vadd.f32 0.0, %v592
    %v594 = vpop.f32.mrf.mxu0
    %v595 = vadd.f32 0.0, %v594
    %596 = vdwg.mxu0
    %597 = vmatprep.subr.mxu0 0.0
    %598 = vmatpush1.msra.mxu0 0.0
    %599 = vmatprep.subr.mxu0 0.0
    %600 = vmatpush1.msra.mxu0 0.0
    %601 = vmatprep.subr.mxu0 0.0
    %602 = vmatpush1.msra.mxu0 0.0
    %603 = vmatprep.subr.mxu0 0.0
    %604 = vmatpush1.msra.mxu0 0.0
    %605 = vmatprep.subr.mxu0 0.0
    %606 = vmatpush1.msra.mxu0 0.0
    %607 = vmatprep.subr.mxu0 0.0
    %608 = vmatpush1.msra.mxu0 0.0
    %609 = vmatprep.subr.mxu0 0.0
    %610 = vmatpush1.msra.mxu0 0.0
    %611 = vmatprep.subr.mxu0 0.0
    %612 = vmatpush1.msra.mxu0 0.0
    %613 = vmatprep.subr.mxu0 0.0
    %614 = vmatpush1.msra.mxu0 0.0
    %615 = vmatprep.subr.mxu0 0.0
    %616 = vmatpush1.msra.mxu0 0.0
    %617 = vmatprep.subr.mxu0 0.0
    %618 = vmatpush1.msra.mxu0 0.0
    %619 = vmatprep.subr.mxu0 0.0
    %620 = vmatpush1.msra.mxu0 0.0
    %621 = vmatprep.subr.mxu0 0.0
    %622 = vmatpush1.msra.mxu0 0.0
    %623 = vmatprep.subr.mxu0 0.0
    %624 = vmatpush1.msra.mxu0 0.0
    %625 = vmatprep.subr.mxu0 0.0
    %626 = vmatpush1.msra.mxu0 0.0
    %627 = vmatprep.subr.mxu0 %v509
    %628 = vmatpush1.msra.mxu0 %v508
    %629 = vmatprep.subr.mxu0 0.0
    %630 = vmatpush2.msra.mxu0 0.0
    %631 = vmatprep.subr.mxu0 0.0
    %632 = vmatpush2.msra.mxu0 0.0
    %633 = vmatprep.subr.mxu0 0.0
    %634 = vmatpush2.msra.mxu0 0.0
    %635 = vmatprep.subr.mxu0 0.0
    %636 = vmatpush2.msra.mxu0 0.0
    %637 = vmatprep.subr.mxu0 0.0
    %638 = vmatpush2.msra.mxu0 0.0
    %639 = vmatprep.subr.mxu0 0.0
    %640 = vmatpush2.msra.mxu0 0.0
    %641 = vmatprep.subr.mxu0 0.0
    %642 = vmatpush2.msra.mxu0 0.0
    %643 = vmatprep.subr.mxu0 0.0
    %644 = vmatpush2.msra.mxu0 0.0
    %645 = vmatprep.subr.mxu0 0.0
    %646 = vmatpush2.msra.mxu0 0.0
    %647 = vmatprep.subr.mxu0 0.0
    %648 = vmatpush2.msra.mxu0 0.0
    %649 = vmatprep.subr.mxu0 0.0
    %650 = vmatpush2.msra.mxu0 0.0
    %651 = vmatprep.subr.mxu0 0.0
    %652 = vmatpush2.msra.mxu0 0.0
    %653 = vmatprep.subr.mxu0 0.0
    %654 = vmatpush2.msra.mxu0 0.0
    %655 = vmatprep.subr.mxu0 0.0
    %656 = vmatpush2.msra.mxu0 0.0
    %657 = vmatprep.subr.mxu0 0.0
    %658 = vmatpush2.msra.mxu0 0.0
    %659 = vmatprep.subr.mxu0 0.0
    %660 = vmatpush2.msra.mxu0 0.0
    %661 = vmatprep.mubr.f32.mxu0 0.0
    %662 = vmatmul.mubr.f32.gmra.mxu0 %v515
    %v663 = vpop.f32.mrf.mxu0
    %v664 = vadd.f32 0.0, %v663
    %v665 = vpop.f32.mrf.mxu0
    %v666 = vadd.f32 0.0, %v665
    %667 = vmatprep.mubr.f32.mxu0 0.0
    %668 = vmatmul.mubr.f32.gmra.mxu0 %v518
    %v669 = vpop.f32.mrf.mxu0
    %v670 = vadd.f32 0.0, %v669
    %v671 = vpop.f32.mrf.mxu0
    %v672 = vadd.f32 0.0, %v671
    %673 = vdwg.mxu0
    %v675 = vsel %vm513, %v468, 0
    %v678 = vsel %vm513, %v469, 0
    %680 = vmatprep.subr.mxu0 0.0
    %681 = vmatpush1.msra.mxu0 0.0
    %682 = vmatprep.subr.mxu0 0.0
    %683 = vmatpush1.msra.mxu0 0.0
    %684 = vmatprep.subr.mxu0 0.0
    %685 = vmatpush1.msra.mxu0 0.0
    %686 = vmatprep.subr.mxu0 0.0
    %687 = vmatpush1.msra.mxu0 0.0
    %688 = vmatprep.subr.mxu0 0.0
    %689 = vmatpush1.msra.mxu0 0.0
    %690 = vmatprep.subr.mxu0 0.0
    %691 = vmatpush1.msra.mxu0 0.0
    %692 = vmatprep.subr.mxu0 0.0
    %693 = vmatpush1.msra.mxu0 0.0
    %694 = vmatprep.subr.mxu0 0.0
    %695 = vmatpush1.msra.mxu0 0.0
    %696 = vmatprep.subr.mxu0 0.0
    %697 = vmatpush1.msra.mxu0 0.0
    %698 = vmatprep.subr.mxu0 0.0
    %699 = vmatpush1.msra.mxu0 0.0
    %700 = vmatprep.subr.mxu0 0.0
    %701 = vmatpush1.msra.mxu0 0.0
    %702 = vmatprep.subr.mxu0 0.0
    %703 = vmatpush1.msra.mxu0 0.0
    %704 = vmatprep.subr.mxu0 0.0
    %705 = vmatpush1.msra.mxu0 0.0
    %706 = vmatprep.subr.mxu0 0.0
    %707 = vmatpush1.msra.mxu0 0.0
    %708 = vmatprep.subr.mxu0 0.0
    %709 = vmatpush1.msra.mxu0 0.0
    %710 = vmatprep.subr.mxu0 %v465
    %711 = vmatpush1.msra.mxu0 %v464
    %712 = vmatprep.subr.mxu0 0.0
    %713 = vmatpush2.msra.mxu0 0.0
    %714 = vmatprep.subr.mxu0 0.0
    %715 = vmatpush2.msra.mxu0 0.0
    %716 = vmatprep.subr.mxu0 0.0
    %717 = vmatpush2.msra.mxu0 0.0
    %718 = vmatprep.subr.mxu0 0.0
    %719 = vmatpush2.msra.mxu0 0.0
    %720 = vmatprep.subr.mxu0 0.0
    %721 = vmatpush2.msra.mxu0 0.0
    %722 = vmatprep.subr.mxu0 0.0
    %723 = vmatpush2.msra.mxu0 0.0
    %724 = vmatprep.subr.mxu0 0.0
    %725 = vmatpush2.msra.mxu0 0.0
    %726 = vmatprep.subr.mxu0 0.0
    %727 = vmatpush2.msra.mxu0 0.0
    %728 = vmatprep.subr.mxu0 0.0
    %729 = vmatpush2.msra.mxu0 0.0
    %730 = vmatprep.subr.mxu0 0.0
    %731 = vmatpush2.msra.mxu0 0.0
    %732 = vmatprep.subr.mxu0 0.0
    %733 = vmatpush2.msra.mxu0 0.0
    %734 = vmatprep.subr.mxu0 0.0
    %735 = vmatpush2.msra.mxu0 0.0
    %736 = vmatprep.subr.mxu0 0.0
    %737 = vmatpush2.msra.mxu0 0.0
    %738 = vmatprep.subr.mxu0 0.0
    %739 = vmatpush2.msra.mxu0 0.0
    %740 = vmatprep.subr.mxu0 0.0
    %741 = vmatpush2.msra.mxu0 0.0
    %742 = vmatprep.subr.mxu0 0.0
    %743 = vmatpush2.msra.mxu0 0.0
    %744 = vmatprep.mubr.f32.mxu0 0.0
    %745 = vmatmul.mubr.f32.gmra.mxu0 %v675
    %v746 = vpop.f32.mrf.mxu0
    %v747 = vadd.f32 %v587, %v746
    %v748 = vpop.f32.mrf.mxu0
    %v749 = vadd.f32 %v589, %v748
    %750 = vmatprep.mubr.f32.mxu0 0.0
    %751 = vmatmul.mubr.f32.gmra.mxu0 %v678
    %v752 = vpop.f32.mrf.mxu0
    %v753 = vadd.f32 %v593, %v752
    %v754 = vpop.f32.mrf.mxu0
    %v755 = vadd.f32 %v595, %v754
    %756 = vdwg.mxu0
    %757 = vmatprep.subr.mxu0 0.0
    %758 = vmatpush1.msra.mxu0 0.0
    %759 = vmatprep.subr.mxu0 0.0
    %760 = vmatpush1.msra.mxu0 0.0
    %761 = vmatprep.subr.mxu0 0.0
    %762 = vmatpush1.msra.mxu0 0.0
    %763 = vmatprep.subr.mxu0 0.0
    %764 = vmatpush1.msra.mxu0 0.0
    %765 = vmatprep.subr.mxu0 0.0
    %766 = vmatpush1.msra.mxu0 0.0
    %767 = vmatprep.subr.mxu0 0.0
    %768 = vmatpush1.msra.mxu0 0.0
    %769 = vmatprep.subr.mxu0 0.0
    %770 = vmatpush1.msra.mxu0 0.0
    %771 = vmatprep.subr.mxu0 0.0
    %772 = vmatpush1.msra.mxu0 0.0
    %773 = vmatprep.subr.mxu0 0.0
    %774 = vmatpush1.msra.mxu0 0.0
    %775 = vmatprep.subr.mxu0 0.0
    %776 = vmatpush1.msra.mxu0 0.0
    %777 = vmatprep.subr.mxu0 0.0
    %778 = vmatpush1.msra.mxu0 0.0
    %779 = vmatprep.subr.mxu0 0.0
    %780 = vmatpush1.msra.mxu0 0.0
    %781 = vmatprep.subr.mxu0 0.0
    %782 = vmatpush1.msra.mxu0 0.0
    %783 = vmatprep.subr.mxu0 0.0
    %784 = vmatpush1.msra.mxu0 0.0
    %785 = vmatprep.subr.mxu0 0.0
    %786 = vmatpush1.msra.mxu0 0.0
    %787 = vmatprep.subr.mxu0 %v467
    %788 = vmatpush1.msra.mxu0 %v466
    %789 = vmatprep.subr.mxu0 0.0
    %790 = vmatpush2.msra.mxu0 0.0
    %791 = vmatprep.subr.mxu0 0.0
    %792 = vmatpush2.msra.mxu0 0.0
    %793 = vmatprep.subr.mxu0 0.0
    %794 = vmatpush2.msra.mxu0 0.0
    %795 = vmatprep.subr.mxu0 0.0
    %796 = vmatpush2.msra.mxu0 0.0
    %797 = vmatprep.subr.mxu0 0.0
    %798 = vmatpush2.msra.mxu0 0.0
    %799 = vmatprep.subr.mxu0 0.0
    %800 = vmatpush2.msra.mxu0 0.0
    %801 = vmatprep.subr.mxu0 0.0
    %802 = vmatpush2.msra.mxu0 0.0
    %803 = vmatprep.subr.mxu0 0.0
    %804 = vmatpush2.msra.mxu0 0.0
    %805 = vmatprep.subr.mxu0 0.0
    %806 = vmatpush2.msra.mxu0 0.0
    %807 = vmatprep.subr.mxu0 0.0
    %808 = vmatpush2.msra.mxu0 0.0
    %809 = vmatprep.subr.mxu0 0.0
    %810 = vmatpush2.msra.mxu0 0.0
    %811 = vmatprep.subr.mxu0 0.0
    %812 = vmatpush2.msra.mxu0 0.0
    %813 = vmatprep.subr.mxu0 0.0
    %814 = vmatpush2.msra.mxu0 0.0
    %815 = vmatprep.subr.mxu0 0.0
    %816 = vmatpush2.msra.mxu0 0.0
    %817 = vmatprep.subr.mxu0 0.0
    %818 = vmatpush2.msra.mxu0 0.0
    %819 = vmatprep.subr.mxu0 0.0
    %820 = vmatpush2.msra.mxu0 0.0
    %821 = vmatprep.mubr.f32.mxu0 0.0
    %822 = vmatmul.mubr.f32.gmra.mxu0 %v675
    %v823 = vpop.f32.mrf.mxu0
    %v824 = vadd.f32 %v664, %v823
    %v825 = vpop.f32.mrf.mxu0
    %v826 = vadd.f32 %v666, %v825
    %827 = vmatprep.mubr.f32.mxu0 0.0
    %828 = vmatmul.mubr.f32.gmra.mxu0 %v678
    %v829 = vpop.f32.mrf.mxu0
    %v830 = vadd.f32 %v670, %v829
    %v831 = vpop.f32.mrf.mxu0
    %v832 = vadd.f32 %v672, %v831
    %833 = vdwg.mxu0
    %834 = vrot.lane.b32.xlu0 %v423, 15
    %v835 = vpop.permute.xlu0 %834
    %836 = vrot.lane.b32.xlu0 %v424, 15
    %v837 = vpop.permute.xlu0 %836
    %838 = vrot.lane.b32.xlu0 %v425, 15
    %v839 = vpop.permute.xlu0 %838
    %840 = vrot.lane.b32.xlu0 %v426, 15
    %v841 = vpop.permute.xlu0 %840
    %vm842 = vcmp.lt.s32.totalorder %v436, 15
    %v843 = vsel %vm842, %v839, %v841
    %v844 = vsel %vm842, %v837, %v839
    %v845 = vsel %vm842, %v835, %v837
    %v846 = vsel %vm842, %v841, %v835
    %s847 = scalar_lea.vmem %s2, 2
    %v848 = vld [vmem:[%s847] ss:$8 sm:$0xf]
    %v850 = vlaneseq
    %v851 = vshrl.u32 %v850, 7
    %v852 = vsub.s32 0, %v851
    %v853 = vrot.slane %v848, %v852
    %v854 = vlaneseq
    %v855 = vshrl.u32 %v854, 7
    %v856 = vsub.s32 1, %v855
    %v857 = vrot.slane %v848, %v856
    %v858 = vlaneseq
    %v859 = vshrl.u32 %v858, 7
    %v860 = vsub.s32 2, %v859
    %v861 = vrot.slane %v848, %v860
    %v862 = vlaneseq
    %v863 = vshrl.u32 %v862, 7
    %v864 = vsub.s32 3, %v863
    %v865 = vrot.slane %v848, %v864
    %v870 = vmul.f32 %v846, %v853
    %v871 = vmul.f32 %v845, %v857
    %v872 = vmul.f32 %v844, %v861
    %v873 = vmul.f32 %v843, %v865
    %s874 = scalar_lea.vmem %s5, 32
    %v875 = vld [vmem:[%s874] sm:$0xff]
    %v876 = vld [vmem:[%s874 + $0x8] sm:$0xff]
    %v878 = vsel %vm513, %v875, 0
    %v881 = vsel %vm513, %v876, 0
    %883 = vmatprep.subr.mxu0 0.0
    %884 = vmatpush1.msra.mxu0 0.0
    %885 = vmatprep.subr.mxu0 0.0
    %886 = vmatpush1.msra.mxu0 0.0
    %887 = vmatprep.subr.mxu0 0.0
    %888 = vmatpush1.msra.mxu0 0.0
    %889 = vmatprep.subr.mxu0 0.0
    %890 = vmatpush1.msra.mxu0 0.0
    %891 = vmatprep.subr.mxu0 0.0
    %892 = vmatpush1.msra.mxu0 0.0
    %893 = vmatprep.subr.mxu0 0.0
    %894 = vmatpush1.msra.mxu0 0.0
    %895 = vmatprep.subr.mxu0 0.0
    %896 = vmatpush1.msra.mxu0 0.0
    %897 = vmatprep.subr.mxu0 0.0
    %898 = vmatpush1.msra.mxu0 0.0
    %899 = vmatprep.subr.mxu0 0.0
    %900 = vmatpush1.msra.mxu0 0.0
    %901 = vmatprep.subr.mxu0 0.0
    %902 = vmatpush1.msra.mxu0 0.0
    %903 = vmatprep.subr.mxu0 0.0
    %904 = vmatpush1.msra.mxu0 0.0
    %905 = vmatprep.subr.mxu0 0.0
    %906 = vmatpush1.msra.mxu0 0.0
    %907 = vmatprep.subr.mxu0 0.0
    %908 = vmatpush1.msra.mxu0 0.0
    %909 = vmatprep.subr.mxu0 0.0
    %910 = vmatpush1.msra.mxu0 0.0
    %911 = vmatprep.subr.mxu0 0.0
    %912 = vmatpush1.msra.mxu0 0.0
    %913 = vmatprep.subr.mxu0 %v871
    %914 = vmatpush1.msra.mxu0 %v870
    %915 = vmatprep.subr.mxu0 0.0
    %916 = vmatpush2.msra.mxu0 0.0
    %917 = vmatprep.subr.mxu0 0.0
    %918 = vmatpush2.msra.mxu0 0.0
    %919 = vmatprep.subr.mxu0 0.0
    %920 = vmatpush2.msra.mxu0 0.0
    %921 = vmatprep.subr.mxu0 0.0
    %922 = vmatpush2.msra.mxu0 0.0
    %923 = vmatprep.subr.mxu0 0.0
    %924 = vmatpush2.msra.mxu0 0.0
    %925 = vmatprep.subr.mxu0 0.0
    %926 = vmatpush2.msra.mxu0 0.0
    %927 = vmatprep.subr.mxu0 0.0
    %928 = vmatpush2.msra.mxu0 0.0
    %929 = vmatprep.subr.mxu0 0.0
    %930 = vmatpush2.msra.mxu0 0.0
    %931 = vmatprep.subr.mxu0 0.0
    %932 = vmatpush2.msra.mxu0 0.0
    %933 = vmatprep.subr.mxu0 0.0
    %934 = vmatpush2.msra.mxu0 0.0
    %935 = vmatprep.subr.mxu0 0.0
    %936 = vmatpush2.msra.mxu0 0.0
    %937 = vmatprep.subr.mxu0 0.0
    %938 = vmatpush2.msra.mxu0 0.0
    %939 = vmatprep.subr.mxu0 0.0
    %940 = vmatpush2.msra.mxu0 0.0
    %941 = vmatprep.subr.mxu0 0.0
    %942 = vmatpush2.msra.mxu0 0.0
    %943 = vmatprep.subr.mxu0 0.0
    %944 = vmatpush2.msra.mxu0 0.0
    %945 = vmatprep.subr.mxu0 0.0
    %946 = vmatpush2.msra.mxu0 0.0
    %947 = vmatprep.mubr.f32.mxu0 0.0
    %948 = vmatmul.mubr.f32.gmra.mxu0 %v878
    %v949 = vpop.f32.mrf.mxu0
    %v950 = vadd.f32 0.0, %v949
    %v951 = vpop.f32.mrf.mxu0
    %v952 = vadd.f32 0.0, %v951
    %953 = vmatprep.mubr.f32.mxu0 0.0
    %954 = vmatmul.mubr.f32.gmra.mxu0 %v881
    %v955 = vpop.f32.mrf.mxu0
    %v956 = vadd.f32 0.0, %v955
    %v957 = vpop.f32.mrf.mxu0
    %v958 = vadd.f32 0.0, %v957
    %959 = vdwg.mxu0
    %960 = vmatprep.subr.mxu0 0.0
    %961 = vmatpush1.msra.mxu0 0.0
    %962 = vmatprep.subr.mxu0 0.0
    %963 = vmatpush1.msra.mxu0 0.0
    %964 = vmatprep.subr.mxu0 0.0
    %965 = vmatpush1.msra.mxu0 0.0
    %966 = vmatprep.subr.mxu0 0.0
    %967 = vmatpush1.msra.mxu0 0.0
    %968 = vmatprep.subr.mxu0 0.0
    %969 = vmatpush1.msra.mxu0 0.0
    %970 = vmatprep.subr.mxu0 0.0
    %971 = vmatpush1.msra.mxu0 0.0
    %972 = vmatprep.subr.mxu0 0.0
    %973 = vmatpush1.msra.mxu0 0.0
    %974 = vmatprep.subr.mxu0 0.0
    %975 = vmatpush1.msra.mxu0 0.0
    %976 = vmatprep.subr.mxu0 0.0
    %977 = vmatpush1.msra.mxu0 0.0
    %978 = vmatprep.subr.mxu0 0.0
    %979 = vmatpush1.msra.mxu0 0.0
    %980 = vmatprep.subr.mxu0 0.0
    %981 = vmatpush1.msra.mxu0 0.0
    %982 = vmatprep.subr.mxu0 0.0
    %983 = vmatpush1.msra.mxu0 0.0
    %984 = vmatprep.subr.mxu0 0.0
    %985 = vmatpush1.msra.mxu0 0.0
    %986 = vmatprep.subr.mxu0 0.0
    %987 = vmatpush1.msra.mxu0 0.0
    %988 = vmatprep.subr.mxu0 0.0
    %989 = vmatpush1.msra.mxu0 0.0
    %990 = vmatprep.subr.mxu0 %v873
    %991 = vmatpush1.msra.mxu0 %v872
    %992 = vmatprep.subr.mxu0 0.0
    %993 = vmatpush2.msra.mxu0 0.0
    %994 = vmatprep.subr.mxu0 0.0
    %995 = vmatpush2.msra.mxu0 0.0
    %996 = vmatprep.subr.mxu0 0.0
    %997 = vmatpush2.msra.mxu0 0.0
    %998 = vmatprep.subr.mxu0 0.0
    %999 = vmatpush2.msra.mxu0 0.0
    %1000 = vmatprep.subr.mxu0 0.0
    %1001 = vmatpush2.msra.mxu0 0.0
    %1002 = vmatprep.subr.mxu0 0.0
    %1003 = vmatpush2.msra.mxu0 0.0
    %1004 = vmatprep.subr.mxu0 0.0
    %1005 = vmatpush2.msra.mxu0 0.0
    %1006 = vmatprep.subr.mxu0 0.0
    %1007 = vmatpush2.msra.mxu0 0.0
    %1008 = vmatprep.subr.mxu0 0.0
    %1009 = vmatpush2.msra.mxu0 0.0
    %1010 = vmatprep.subr.mxu0 0.0
    %1011 = vmatpush2.msra.mxu0 0.0
    %1012 = vmatprep.subr.mxu0 0.0
    %1013 = vmatpush2.msra.mxu0 0.0
    %1014 = vmatprep.subr.mxu0 0.0
    %1015 = vmatpush2.msra.mxu0 0.0
    %1016 = vmatprep.subr.mxu0 0.0
    %1017 = vmatpush2.msra.mxu0 0.0
    %1018 = vmatprep.subr.mxu0 0.0
    %1019 = vmatpush2.msra.mxu0 0.0
    %1020 = vmatprep.subr.mxu0 0.0
    %1021 = vmatpush2.msra.mxu0 0.0
    %1022 = vmatprep.subr.mxu0 0.0
    %1023 = vmatpush2.msra.mxu0 0.0
    %1024 = vmatprep.mubr.f32.mxu0 0.0
    %1025 = vmatmul.mubr.f32.gmra.mxu0 %v878
    %v1026 = vpop.f32.mrf.mxu0
    %v1027 = vadd.f32 0.0, %v1026
    %v1028 = vpop.f32.mrf.mxu0
    %v1029 = vadd.f32 0.0, %v1028
    %1030 = vmatprep.mubr.f32.mxu0 0.0
    %1031 = vmatmul.mubr.f32.gmra.mxu0 %v881
    %v1032 = vpop.f32.mrf.mxu0
    %v1033 = vadd.f32 0.0, %v1032
    %v1034 = vpop.f32.mrf.mxu0
    %v1035 = vadd.f32 0.0, %v1034
    %1036 = vdwg.mxu0
    %v1037 = vadd.f32 %v747, %v950
    %v1038 = vadd.f32 %v749, %v952
    %v1039 = vadd.f32 %v824, %v1027
    %v1040 = vadd.f32 %v826, %v1029
    %v1041 = vadd.f32 %v753, %v956
    %v1042 = vadd.f32 %v755, %v958
    %v1043 = vadd.f32 %v830, %v1033
    %v1044 = vadd.f32 %v832, %v1035
    %1045 = vrot.lane.b32.xlu0 %v423, 1
    %v1046 = vpop.permute.xlu0 %1045
    %1047 = vrot.lane.b32.xlu0 %v424, 1
    %v1048 = vpop.permute.xlu0 %1047
    %1049 = vrot.lane.b32.xlu0 %v425, 1
    %v1050 = vpop.permute.xlu0 %1049
    %1051 = vrot.lane.b32.xlu0 %v426, 1
    %v1052 = vpop.permute.xlu0 %1051
    %vm1053 = vcmp.lt.s32.totalorder %v436, 1
    %v1054 = vsel %vm1053, %v1050, %v1052
    %v1055 = vsel %vm1053, %v1048, %v1050
    %v1056 = vsel %vm1053, %v1046, %v1048
    %v1057 = vsel %vm1053, %v1052, %v1046
    %s1058 = scalar_lea.vmem %s2, 3
    %v1059 = vld [vmem:[%s1058] ss:$8 sm:$0xf]
    %v1061 = vlaneseq
    %v1062 = vshrl.u32 %v1061, 7
    %v1063 = vsub.s32 0, %v1062
    %v1064 = vrot.slane %v1059, %v1063
    %v1065 = vlaneseq
    %v1066 = vshrl.u32 %v1065, 7
    %v1067 = vsub.s32 1, %v1066
    %v1068 = vrot.slane %v1059, %v1067
    %v1069 = vlaneseq
    %v1070 = vshrl.u32 %v1069, 7
    %v1071 = vsub.s32 2, %v1070
    %v1072 = vrot.slane %v1059, %v1071
    %v1073 = vlaneseq
    %v1074 = vshrl.u32 %v1073, 7
    %v1075 = vsub.s32 3, %v1074
    %v1076 = vrot.slane %v1059, %v1075
    %v1081 = vmul.f32 %v1057, %v1064
    %v1082 = vmul.f32 %v1056, %v1068
    %v1083 = vmul.f32 %v1055, %v1072
    %v1084 = vmul.f32 %v1054, %v1076
    %s1085 = scalar_lea.vmem %s5, 48
    %v1086 = vld [vmem:[%s1085] sm:$0xff]
    %v1087 = vld [vmem:[%s1085 + $0x8] sm:$0xff]
    %v1089 = vsel %vm513, %v1086, 0
    %v1092 = vsel %vm513, %v1087, 0
    %1094 = vmatprep.subr.mxu0 0.0
    %1095 = vmatpush1.msra.mxu0 0.0
    %1096 = vmatprep.subr.mxu0 0.0
    %1097 = vmatpush1.msra.mxu0 0.0
    %1098 = vmatprep.subr.mxu0 0.0
    %1099 = vmatpush1.msra.mxu0 0.0
    %1100 = vmatprep.subr.mxu0 0.0
    %1101 = vmatpush1.msra.mxu0 0.0
    %1102 = vmatprep.subr.mxu0 0.0
    %1103 = vmatpush1.msra.mxu0 0.0
    %1104 = vmatprep.subr.mxu0 0.0
    %1105 = vmatpush1.msra.mxu0 0.0
    %1106 = vmatprep.subr.mxu0 0.0
    %1107 = vmatpush1.msra.mxu0 0.0
    %1108 = vmatprep.subr.mxu0 0.0
    %1109 = vmatpush1.msra.mxu0 0.0
    %1110 = vmatprep.subr.mxu0 0.0
    %1111 = vmatpush1.msra.mxu0 0.0
    %1112 = vmatprep.subr.mxu0 0.0
    %1113 = vmatpush1.msra.mxu0 0.0
    %1114 = vmatprep.subr.mxu0 0.0
    %1115 = vmatpush1.msra.mxu0 0.0
    %1116 = vmatprep.subr.mxu0 0.0
    %1117 = vmatpush1.msra.mxu0 0.0
    %1118 = vmatprep.subr.mxu0 0.0
    %1119 = vmatpush1.msra.mxu0 0.0
    %1120 = vmatprep.subr.mxu0 0.0
    %1121 = vmatpush1.msra.mxu0 0.0
    %1122 = vmatprep.subr.mxu0 0.0
    %1123 = vmatpush1.msra.mxu0 0.0
    %1124 = vmatprep.subr.mxu0 %v1082
    %1125 = vmatpush1.msra.mxu0 %v1081
    %1126 = vmatprep.subr.mxu0 0.0
    %1127 = vmatpush2.msra.mxu0 0.0
    %1128 = vmatprep.subr.mxu0 0.0
    %1129 = vmatpush2.msra.mxu0 0.0
    %1130 = vmatprep.subr.mxu0 0.0
    %1131 = vmatpush2.msra.mxu0 0.0
    %1132 = vmatprep.subr.mxu0 0.0
    %1133 = vmatpush2.msra.mxu0 0.0
    %1134 = vmatprep.subr.mxu0 0.0
    %1135 = vmatpush2.msra.mxu0 0.0
    %1136 = vmatprep.subr.mxu0 0.0
    %1137 = vmatpush2.msra.mxu0 0.0
    %1138 = vmatprep.subr.mxu0 0.0
    %1139 = vmatpush2.msra.mxu0 0.0
    %1140 = vmatprep.subr.mxu0 0.0
    %1141 = vmatpush2.msra.mxu0 0.0
    %1142 = vmatprep.subr.mxu0 0.0
    %1143 = vmatpush2.msra.mxu0 0.0
    %1144 = vmatprep.subr.mxu0 0.0
    %1145 = vmatpush2.msra.mxu0 0.0
    %1146 = vmatprep.subr.mxu0 0.0
    %1147 = vmatpush2.msra.mxu0 0.0
    %1148 = vmatprep.subr.mxu0 0.0
    %1149 = vmatpush2.msra.mxu0 0.0
    %1150 = vmatprep.subr.mxu0 0.0
    %1151 = vmatpush2.msra.mxu0 0.0
    %1152 = vmatprep.subr.mxu0 0.0
    %1153 = vmatpush2.msra.mxu0 0.0
    %1154 = vmatprep.subr.mxu0 0.0
    %1155 = vmatpush2.msra.mxu0 0.0
    %1156 = vmatprep.subr.mxu0 0.0
    %1157 = vmatpush2.msra.mxu0 0.0
    %1158 = vmatprep.mubr.f32.mxu0 0.0
    %1159 = vmatmul.mubr.f32.gmra.mxu0 %v1089
    %v1160 = vpop.f32.mrf.mxu0
    %v1161 = vadd.f32 0.0, %v1160
    %v1162 = vpop.f32.mrf.mxu0
    %v1163 = vadd.f32 0.0, %v1162
    %1164 = vmatprep.mubr.f32.mxu0 0.0
    %1165 = vmatmul.mubr.f32.gmra.mxu0 %v1092
    %v1166 = vpop.f32.mrf.mxu0
    %v1167 = vadd.f32 0.0, %v1166
    %v1168 = vpop.f32.mrf.mxu0
    %v1169 = vadd.f32 0.0, %v1168
    %1170 = vdwg.mxu0
    %1171 = vmatprep.subr.mxu0 0.0
    %1172 = vmatpush1.msra.mxu0 0.0
    %1173 = vmatprep.subr.mxu0 0.0
    %1174 = vmatpush1.msra.mxu0 0.0
    %1175 = vmatprep.subr.mxu0 0.0
    %1176 = vmatpush1.msra.mxu0 0.0
    %1177 = vmatprep.subr.mxu0 0.0
    %1178 = vmatpush1.msra.mxu0 0.0
    %1179 = vmatprep.subr.mxu0 0.0
    %1180 = vmatpush1.msra.mxu0 0.0
    %1181 = vmatprep.subr.mxu0 0.0
    %1182 = vmatpush1.msra.mxu0 0.0
    %1183 = vmatprep.subr.mxu0 0.0
    %1184 = vmatpush1.msra.mxu0 0.0
    %1185 = vmatprep.subr.mxu0 0.0
    %1186 = vmatpush1.msra.mxu0 0.0
    %1187 = vmatprep.subr.mxu0 0.0
    %1188 = vmatpush1.msra.mxu0 0.0
    %1189 = vmatprep.subr.mxu0 0.0
    %1190 = vmatpush1.msra.mxu0 0.0
    %1191 = vmatprep.subr.mxu0 0.0
    %1192 = vmatpush1.msra.mxu0 0.0
    %1193 = vmatprep.subr.mxu0 0.0
    %1194 = vmatpush1.msra.mxu0 0.0
    %1195 = vmatprep.subr.mxu0 0.0
    %1196 = vmatpush1.msra.mxu0 0.0
    %1197 = vmatprep.subr.mxu0 0.0
    %1198 = vmatpush1.msra.mxu0 0.0
    %1199 = vmatprep.subr.mxu0 0.0
    %1200 = vmatpush1.msra.mxu0 0.0
    %1201 = vmatprep.subr.mxu0 %v1084
    %1202 = vmatpush1.msra.mxu0 %v1083
    %1203 = vmatprep.subr.mxu0 0.0
    %1204 = vmatpush2.msra.mxu0 0.0
    %1205 = vmatprep.subr.mxu0 0.0
    %1206 = vmatpush2.msra.mxu0 0.0
    %1207 = vmatprep.subr.mxu0 0.0
    %1208 = vmatpush2.msra.mxu0 0.0
    %1209 = vmatprep.subr.mxu0 0.0
    %1210 = vmatpush2.msra.mxu0 0.0
    %1211 = vmatprep.subr.mxu0 0.0
    %1212 = vmatpush2.msra.mxu0 0.0
    %1213 = vmatprep.subr.mxu0 0.0
    %1214 = vmatpush2.msra.mxu0 0.0
    %1215 = vmatprep.subr.mxu0 0.0
    %1216 = vmatpush2.msra.mxu0 0.0
    %1217 = vmatprep.subr.mxu0 0.0
    %1218 = vmatpush2.msra.mxu0 0.0
    %1219 = vmatprep.subr.mxu0 0.0
    %1220 = vmatpush2.msra.mxu0 0.0
    %1221 = vmatprep.subr.mxu0 0.0
    %1222 = vmatpush2.msra.mxu0 0.0
    %1223 = vmatprep.subr.mxu0 0.0
    %1224 = vmatpush2.msra.mxu0 0.0
    %1225 = vmatprep.subr.mxu0 0.0
    %1226 = vmatpush2.msra.mxu0 0.0
    %1227 = vmatprep.subr.mxu0 0.0
    %1228 = vmatpush2.msra.mxu0 0.0
    %1229 = vmatprep.subr.mxu0 0.0
    %1230 = vmatpush2.msra.mxu0 0.0
    %1231 = vmatprep.subr.mxu0 0.0
    %1232 = vmatpush2.msra.mxu0 0.0
    %1233 = vmatprep.subr.mxu0 0.0
    %1234 = vmatpush2.msra.mxu0 0.0
    %1235 = vmatprep.mubr.f32.mxu0 0.0
    %1236 = vmatmul.mubr.f32.gmra.mxu0 %v1089
    %v1237 = vpop.f32.mrf.mxu0
    %v1238 = vadd.f32 0.0, %v1237
    %v1239 = vpop.f32.mrf.mxu0
    %v1240 = vadd.f32 0.0, %v1239
    %1241 = vmatprep.mubr.f32.mxu0 0.0
    %1242 = vmatmul.mubr.f32.gmra.mxu0 %v1092
    %v1243 = vpop.f32.mrf.mxu0
    %v1244 = vadd.f32 0.0, %v1243
    %v1245 = vpop.f32.mrf.mxu0
    %v1246 = vadd.f32 0.0, %v1245
    %1247 = vdwg.mxu0
    %v1248 = vadd.f32 %v1037, %v1161
    %v1249 = vadd.f32 %v1038, %v1163
    %v1250 = vadd.f32 %v1039, %v1238
    %v1251 = vadd.f32 %v1040, %v1240
    %v1252 = vadd.f32 %v1041, %v1167
    %v1253 = vadd.f32 %v1042, %v1169
    %v1254 = vadd.f32 %v1043, %v1244
    %v1255 = vadd.f32 %v1044, %v1246
    %s1256 = scalar_lea.vmem %s5, 64
    %v1257 = vld [vmem:[%s1256] sm:$0xff]
    %v1258 = vld [vmem:[%s1256 + $0x8] sm:$0xff]
    %v1260 = vsel %vm513, %v1257, 0
    %v1263 = vsel %vm513, %v1258, 0
    %1265 = vmatprep.subr.mxu0 0.0
    %1266 = vmatpush1.msra.mxu0 0.0
    %1267 = vmatprep.subr.mxu0 0.0
    %1268 = vmatpush1.msra.mxu0 0.0
    %1269 = vmatprep.subr.mxu0 0.0
    %1270 = vmatpush1.msra.mxu0 0.0
    %1271 = vmatprep.subr.mxu0 0.0
    %1272 = vmatpush1.msra.mxu0 0.0
    %1273 = vmatprep.subr.mxu0 0.0
    %1274 = vmatpush1.msra.mxu0 0.0
    %1275 = vmatprep.subr.mxu0 0.0
    %1276 = vmatpush1.msra.mxu0 0.0
    %1277 = vmatprep.subr.mxu0 0.0
    %1278 = vmatpush1.msra.mxu0 0.0
    %1279 = vmatprep.subr.mxu0 0.0
    %1280 = vmatpush1.msra.mxu0 0.0
    %1281 = vmatprep.subr.mxu0 0.0
    %1282 = vmatpush1.msra.mxu0 0.0
    %1283 = vmatprep.subr.mxu0 0.0
    %1284 = vmatpush1.msra.mxu0 0.0
    %1285 = vmatprep.subr.mxu0 0.0
    %1286 = vmatpush1.msra.mxu0 0.0
    %1287 = vmatprep.subr.mxu0 0.0
    %1288 = vmatpush1.msra.mxu0 0.0
    %1289 = vmatprep.subr.mxu0 0.0
    %1290 = vmatpush1.msra.mxu0 0.0
    %1291 = vmatprep.subr.mxu0 0.0
    %1292 = vmatpush1.msra.mxu0 0.0
    %1293 = vmatprep.subr.mxu0 0.0
    %1294 = vmatpush1.msra.mxu0 0.0
    %1295 = vmatprep.subr.mxu0 %v424
    %1296 = vmatpush1.msra.mxu0 %v423
    %1297 = vmatprep.subr.mxu0 0.0
    %1298 = vmatpush2.msra.mxu0 0.0
    %1299 = vmatprep.subr.mxu0 0.0
    %1300 = vmatpush2.msra.mxu0 0.0
    %1301 = vmatprep.subr.mxu0 0.0
    %1302 = vmatpush2.msra.mxu0 0.0
    %1303 = vmatprep.subr.mxu0 0.0
    %1304 = vmatpush2.msra.mxu0 0.0
    %1305 = vmatprep.subr.mxu0 0.0
    %1306 = vmatpush2.msra.mxu0 0.0
    %1307 = vmatprep.subr.mxu0 0.0
    %1308 = vmatpush2.msra.mxu0 0.0
    %1309 = vmatprep.subr.mxu0 0.0
    %1310 = vmatpush2.msra.mxu0 0.0
    %1311 = vmatprep.subr.mxu0 0.0
    %1312 = vmatpush2.msra.mxu0 0.0
    %1313 = vmatprep.subr.mxu0 0.0
    %1314 = vmatpush2.msra.mxu0 0.0
    %1315 = vmatprep.subr.mxu0 0.0
    %1316 = vmatpush2.msra.mxu0 0.0
    %1317 = vmatprep.subr.mxu0 0.0
    %1318 = vmatpush2.msra.mxu0 0.0
    %1319 = vmatprep.subr.mxu0 0.0
    %1320 = vmatpush2.msra.mxu0 0.0
    %1321 = vmatprep.subr.mxu0 0.0
    %1322 = vmatpush2.msra.mxu0 0.0
    %1323 = vmatprep.subr.mxu0 0.0
    %1324 = vmatpush2.msra.mxu0 0.0
    %1325 = vmatprep.subr.mxu0 0.0
    %1326 = vmatpush2.msra.mxu0 0.0
    %1327 = vmatprep.subr.mxu0 0.0
    %1328 = vmatpush2.msra.mxu0 0.0
    %1329 = vmatprep.mubr.f32.mxu0 0.0
    %1330 = vmatmul.mubr.f32.gmra.mxu0 %v1260
    %v1331 = vpop.f32.mrf.mxu0
    %v1332 = vadd.f32 0.0, %v1331
    %v1333 = vpop.f32.mrf.mxu0
    %v1334 = vadd.f32 0.0, %v1333
    %1335 = vmatprep.mubr.f32.mxu0 0.0
    %1336 = vmatmul.mubr.f32.gmra.mxu0 %v1263
    %v1337 = vpop.f32.mrf.mxu0
    %v1338 = vadd.f32 0.0, %v1337
    %v1339 = vpop.f32.mrf.mxu0
    %v1340 = vadd.f32 0.0, %v1339
    %1341 = vdwg.mxu0
    %1342 = vmatprep.subr.mxu0 0.0
    %1343 = vmatpush1.msra.mxu0 0.0
    %1344 = vmatprep.subr.mxu0 0.0
    %1345 = vmatpush1.msra.mxu0 0.0
    %1346 = vmatprep.subr.mxu0 0.0
    %1347 = vmatpush1.msra.mxu0 0.0
    %1348 = vmatprep.subr.mxu0 0.0
    %1349 = vmatpush1.msra.mxu0 0.0
    %1350 = vmatprep.subr.mxu0 0.0
    %1351 = vmatpush1.msra.mxu0 0.0
    %1352 = vmatprep.subr.mxu0 0.0
    %1353 = vmatpush1.msra.mxu0 0.0
    %1354 = vmatprep.subr.mxu0 0.0
    %1355 = vmatpush1.msra.mxu0 0.0
    %1356 = vmatprep.subr.mxu0 0.0
    %1357 = vmatpush1.msra.mxu0 0.0
    %1358 = vmatprep.subr.mxu0 0.0
    %1359 = vmatpush1.msra.mxu0 0.0
    %1360 = vmatprep.subr.mxu0 0.0
    %1361 = vmatpush1.msra.mxu0 0.0
    %1362 = vmatprep.subr.mxu0 0.0
    %1363 = vmatpush1.msra.mxu0 0.0
    %1364 = vmatprep.subr.mxu0 0.0
    %1365 = vmatpush1.msra.mxu0 0.0
    %1366 = vmatprep.subr.mxu0 0.0
    %1367 = vmatpush1.msra.mxu0 0.0
    %1368 = vmatprep.subr.mxu0 0.0
    %1369 = vmatpush1.msra.mxu0 0.0
    %1370 = vmatprep.subr.mxu0 0.0
    %1371 = vmatpush1.msra.mxu0 0.0
    %1372 = vmatprep.subr.mxu0 %v426
    %1373 = vmatpush1.msra.mxu0 %v425
    %1374 = vmatprep.subr.mxu0 0.0
    %1375 = vmatpush2.msra.mxu0 0.0
    %1376 = vmatprep.subr.mxu0 0.0
    %1377 = vmatpush2.msra.mxu0 0.0
    %1378 = vmatprep.subr.mxu0 0.0
    %1379 = vmatpush2.msra.mxu0 0.0
    %1380 = vmatprep.subr.mxu0 0.0
    %1381 = vmatpush2.msra.mxu0 0.0
    %1382 = vmatprep.subr.mxu0 0.0
    %1383 = vmatpush2.msra.mxu0 0.0
    %1384 = vmatprep.subr.mxu0 0.0
    %1385 = vmatpush2.msra.mxu0 0.0
    %1386 = vmatprep.subr.mxu0 0.0
    %1387 = vmatpush2.msra.mxu0 0.0
    %1388 = vmatprep.subr.mxu0 0.0
    %1389 = vmatpush2.msra.mxu0 0.0
    %1390 = vmatprep.subr.mxu0 0.0
    %1391 = vmatpush2.msra.mxu0 0.0
    %1392 = vmatprep.subr.mxu0 0.0
    %1393 = vmatpush2.msra.mxu0 0.0
    %1394 = vmatprep.subr.mxu0 0.0
    %1395 = vmatpush2.msra.mxu0 0.0
    %1396 = vmatprep.subr.mxu0 0.0
    %1397 = vmatpush2.msra.mxu0 0.0
    %1398 = vmatprep.subr.mxu0 0.0
    %1399 = vmatpush2.msra.mxu0 0.0
    %1400 = vmatprep.subr.mxu0 0.0
    %1401 = vmatpush2.msra.mxu0 0.0
    %1402 = vmatprep.subr.mxu0 0.0
    %1403 = vmatpush2.msra.mxu0 0.0
    %1404 = vmatprep.subr.mxu0 0.0
    %1405 = vmatpush2.msra.mxu0 0.0
    %1406 = vmatprep.mubr.f32.mxu0 0.0
    %1407 = vmatmul.mubr.f32.gmra.mxu0 %v1260
    %v1408 = vpop.f32.mrf.mxu0
    %v1409 = vadd.f32 0.0, %v1408
    %v1410 = vpop.f32.mrf.mxu0
    %v1411 = vadd.f32 0.0, %v1410
    %1412 = vmatprep.mubr.f32.mxu0 0.0
    %1413 = vmatmul.mubr.f32.gmra.mxu0 %v1263
    %v1414 = vpop.f32.mrf.mxu0
    %v1415 = vadd.f32 0.0, %v1414
    %v1416 = vpop.f32.mrf.mxu0
    %v1417 = vadd.f32 0.0, %v1416
    %1418 = vdwg.mxu0
    %v1419 = vadd.f32 %v1248, %v1332
    %v1420 = vadd.f32 %v1249, %v1334
    %v1421 = vadd.f32 %v1250, %v1409
    %v1422 = vadd.f32 %v1251, %v1411
    %v1423 = vadd.f32 %v1252, %v1338
    %v1424 = vadd.f32 %v1253, %v1340
    %v1425 = vadd.f32 %v1254, %v1415
    %v1426 = vadd.f32 %v1255, %v1417
    %1427 = vrot.lane.b32.xlu0 %v423, 127
    %v1428 = vpop.permute.xlu0 %1427
    %1429 = vrot.lane.b32.xlu0 %v424, 127
    %v1430 = vpop.permute.xlu0 %1429
    %1431 = vrot.lane.b32.xlu0 %v425, 127
    %v1432 = vpop.permute.xlu0 %1431
    %1433 = vrot.lane.b32.xlu0 %v426, 127
    %v1434 = vpop.permute.xlu0 %1433
    %vm1435 = vcmp.lt.s32.totalorder %v436, 127
    %v1436 = vsel %vm1435, %v1432, %v1434
    %v1437 = vsel %vm1435, %v1430, %v1432
    %v1438 = vsel %vm1435, %v1428, %v1430
    %v1439 = vsel %vm1435, %v1434, %v1428
    %s1440 = scalar_lea.vmem %s2, 5
    %v1441 = vld [vmem:[%s1440] ss:$8 sm:$0xf]
    %v1443 = vlaneseq
    %v1444 = vshrl.u32 %v1443, 7
    %v1445 = vsub.s32 0, %v1444
    %v1446 = vrot.slane %v1441, %v1445
    %v1447 = vlaneseq
    %v1448 = vshrl.u32 %v1447, 7
    %v1449 = vsub.s32 1, %v1448
    %v1450 = vrot.slane %v1441, %v1449
    %v1451 = vlaneseq
    %v1452 = vshrl.u32 %v1451, 7
    %v1453 = vsub.s32 2, %v1452
    %v1454 = vrot.slane %v1441, %v1453
    %v1455 = vlaneseq
    %v1456 = vshrl.u32 %v1455, 7
    %v1457 = vsub.s32 3, %v1456
    %v1458 = vrot.slane %v1441, %v1457
    %v1463 = vmul.f32 %v1438, %v1446
    %v1464 = vmul.f32 %v1437, %v1450
    %v1465 = vmul.f32 %v1436, %v1454
    %v1466 = vmul.f32 %v1439, %v1458
    %s1467 = scalar_lea.vmem %s5, 80
    %v1468 = vld [vmem:[%s1467] sm:$0xff]
    %v1469 = vld [vmem:[%s1467 + $0x8] sm:$0xff]
    %v1471 = vsel %vm513, %v1468, 0
    %v1474 = vsel %vm513, %v1469, 0
    %1476 = vmatprep.subr.mxu0 0.0
    %1477 = vmatpush1.msra.mxu0 0.0
    %1478 = vmatprep.subr.mxu0 0.0
    %1479 = vmatpush1.msra.mxu0 0.0
    %1480 = vmatprep.subr.mxu0 0.0
    %1481 = vmatpush1.msra.mxu0 0.0
    %1482 = vmatprep.subr.mxu0 0.0
    %1483 = vmatpush1.msra.mxu0 0.0
    %1484 = vmatprep.subr.mxu0 0.0
    %1485 = vmatpush1.msra.mxu0 0.0
    %1486 = vmatprep.subr.mxu0 0.0
    %1487 = vmatpush1.msra.mxu0 0.0
    %1488 = vmatprep.subr.mxu0 0.0
    %1489 = vmatpush1.msra.mxu0 0.0
    %1490 = vmatprep.subr.mxu0 0.0
    %1491 = vmatpush1.msra.mxu0 0.0
    %1492 = vmatprep.subr.mxu0 0.0
    %1493 = vmatpush1.msra.mxu0 0.0
    %1494 = vmatprep.subr.mxu0 0.0
    %1495 = vmatpush1.msra.mxu0 0.0
    %1496 = vmatprep.subr.mxu0 0.0
    %1497 = vmatpush1.msra.mxu0 0.0
    %1498 = vmatprep.subr.mxu0 0.0
    %1499 = vmatpush1.msra.mxu0 0.0
    %1500 = vmatprep.subr.mxu0 0.0
    %1501 = vmatpush1.msra.mxu0 0.0
    %1502 = vmatprep.subr.mxu0 0.0
    %1503 = vmatpush1.msra.mxu0 0.0
    %1504 = vmatprep.subr.mxu0 0.0
    %1505 = vmatpush1.msra.mxu0 0.0
    %1506 = vmatprep.subr.mxu0 %v1464
    %1507 = vmatpush1.msra.mxu0 %v1463
    %1508 = vmatprep.subr.mxu0 0.0
    %1509 = vmatpush2.msra.mxu0 0.0
    %1510 = vmatprep.subr.mxu0 0.0
    %1511 = vmatpush2.msra.mxu0 0.0
    %1512 = vmatprep.subr.mxu0 0.0
    %1513 = vmatpush2.msra.mxu0 0.0
    %1514 = vmatprep.subr.mxu0 0.0
    %1515 = vmatpush2.msra.mxu0 0.0
    %1516 = vmatprep.subr.mxu0 0.0
    %1517 = vmatpush2.msra.mxu0 0.0
    %1518 = vmatprep.subr.mxu0 0.0
    %1519 = vmatpush2.msra.mxu0 0.0
    %1520 = vmatprep.subr.mxu0 0.0
    %1521 = vmatpush2.msra.mxu0 0.0
    %1522 = vmatprep.subr.mxu0 0.0
    %1523 = vmatpush2.msra.mxu0 0.0
    %1524 = vmatprep.subr.mxu0 0.0
    %1525 = vmatpush2.msra.mxu0 0.0
    %1526 = vmatprep.subr.mxu0 0.0
    %1527 = vmatpush2.msra.mxu0 0.0
    %1528 = vmatprep.subr.mxu0 0.0
    %1529 = vmatpush2.msra.mxu0 0.0
    %1530 = vmatprep.subr.mxu0 0.0
    %1531 = vmatpush2.msra.mxu0 0.0
    %1532 = vmatprep.subr.mxu0 0.0
    %1533 = vmatpush2.msra.mxu0 0.0
    %1534 = vmatprep.subr.mxu0 0.0
    %1535 = vmatpush2.msra.mxu0 0.0
    %1536 = vmatprep.subr.mxu0 0.0
    %1537 = vmatpush2.msra.mxu0 0.0
    %1538 = vmatprep.subr.mxu0 0.0
    %1539 = vmatpush2.msra.mxu0 0.0
    %1540 = vmatprep.mubr.f32.mxu0 0.0
    %1541 = vmatmul.mubr.f32.gmra.mxu0 %v1471
    %v1542 = vpop.f32.mrf.mxu0
    %v1543 = vadd.f32 0.0, %v1542
    %v1544 = vpop.f32.mrf.mxu0
    %v1545 = vadd.f32 0.0, %v1544
    %1546 = vmatprep.mubr.f32.mxu0 0.0
    %1547 = vmatmul.mubr.f32.gmra.mxu0 %v1474
    %v1548 = vpop.f32.mrf.mxu0
    %v1549 = vadd.f32 0.0, %v1548
    %v1550 = vpop.f32.mrf.mxu0
    %v1551 = vadd.f32 0.0, %v1550
    %1552 = vdwg.mxu0
    %1553 = vmatprep.subr.mxu0 0.0
    %1554 = vmatpush1.msra.mxu0 0.0
    %1555 = vmatprep.subr.mxu0 0.0
    %1556 = vmatpush1.msra.mxu0 0.0
    %1557 = vmatprep.subr.mxu0 0.0
    %1558 = vmatpush1.msra.mxu0 0.0
    %1559 = vmatprep.subr.mxu0 0.0
    %1560 = vmatpush1.msra.mxu0 0.0
    %1561 = vmatprep.subr.mxu0 0.0
    %1562 = vmatpush1.msra.mxu0 0.0
    %1563 = vmatprep.subr.mxu0 0.0
    %1564 = vmatpush1.msra.mxu0 0.0
    %1565 = vmatprep.subr.mxu0 0.0
    %1566 = vmatpush1.msra.mxu0 0.0
    %1567 = vmatprep.subr.mxu0 0.0
    %1568 = vmatpush1.msra.mxu0 0.0
    %1569 = vmatprep.subr.mxu0 0.0
    %1570 = vmatpush1.msra.mxu0 0.0
    %1571 = vmatprep.subr.mxu0 0.0
    %1572 = vmatpush1.msra.mxu0 0.0
    %1573 = vmatprep.subr.mxu0 0.0
    %1574 = vmatpush1.msra.mxu0 0.0
    %1575 = vmatprep.subr.mxu0 0.0
    %1576 = vmatpush1.msra.mxu0 0.0
    %1577 = vmatprep.subr.mxu0 0.0
    %1578 = vmatpush1.msra.mxu0 0.0
    %1579 = vmatprep.subr.mxu0 0.0
    %1580 = vmatpush1.msra.mxu0 0.0
    %1581 = vmatprep.subr.mxu0 0.0
    %1582 = vmatpush1.msra.mxu0 0.0
    %1583 = vmatprep.subr.mxu0 %v1466
    %1584 = vmatpush1.msra.mxu0 %v1465
    %1585 = vmatprep.subr.mxu0 0.0
    %1586 = vmatpush2.msra.mxu0 0.0
    %1587 = vmatprep.subr.mxu0 0.0
    %1588 = vmatpush2.msra.mxu0 0.0
    %1589 = vmatprep.subr.mxu0 0.0
    %1590 = vmatpush2.msra.mxu0 0.0
    %1591 = vmatprep.subr.mxu0 0.0
    %1592 = vmatpush2.msra.mxu0 0.0
    %1593 = vmatprep.subr.mxu0 0.0
    %1594 = vmatpush2.msra.mxu0 0.0
    %1595 = vmatprep.subr.mxu0 0.0
    %1596 = vmatpush2.msra.mxu0 0.0
    %1597 = vmatprep.subr.mxu0 0.0
    %1598 = vmatpush2.msra.mxu0 0.0
    %1599 = vmatprep.subr.mxu0 0.0
    %1600 = vmatpush2.msra.mxu0 0.0
    %1601 = vmatprep.subr.mxu0 0.0
    %1602 = vmatpush2.msra.mxu0 0.0
    %1603 = vmatprep.subr.mxu0 0.0
    %1604 = vmatpush2.msra.mxu0 0.0
    %1605 = vmatprep.subr.mxu0 0.0
    %1606 = vmatpush2.msra.mxu0 0.0
    %1607 = vmatprep.subr.mxu0 0.0
    %1608 = vmatpush2.msra.mxu0 0.0
    %1609 = vmatprep.subr.mxu0 0.0
    %1610 = vmatpush2.msra.mxu0 0.0
    %1611 = vmatprep.subr.mxu0 0.0
    %1612 = vmatpush2.msra.mxu0 0.0
    %1613 = vmatprep.subr.mxu0 0.0
    %1614 = vmatpush2.msra.mxu0 0.0
    %1615 = vmatprep.subr.mxu0 0.0
    %1616 = vmatpush2.msra.mxu0 0.0
    %1617 = vmatprep.mubr.f32.mxu0 0.0
    %1618 = vmatmul.mubr.f32.gmra.mxu0 %v1471
    %v1619 = vpop.f32.mrf.mxu0
    %v1620 = vadd.f32 0.0, %v1619
    %v1621 = vpop.f32.mrf.mxu0
    %v1622 = vadd.f32 0.0, %v1621
    %1623 = vmatprep.mubr.f32.mxu0 0.0
    %1624 = vmatmul.mubr.f32.gmra.mxu0 %v1474
    %v1625 = vpop.f32.mrf.mxu0
    %v1626 = vadd.f32 0.0, %v1625
    %v1627 = vpop.f32.mrf.mxu0
    %v1628 = vadd.f32 0.0, %v1627
    %1629 = vdwg.mxu0
    %v1630 = vadd.f32 %v1419, %v1543
    %v1631 = vadd.f32 %v1420, %v1545
    %v1632 = vadd.f32 %v1421, %v1620
    %v1633 = vadd.f32 %v1422, %v1622
    %v1634 = vadd.f32 %v1423, %v1549
    %v1635 = vadd.f32 %v1424, %v1551
    %v1636 = vadd.f32 %v1425, %v1626
    %v1637 = vadd.f32 %v1426, %v1628
    %1638 = vrot.lane.b32.xlu0 %v423, 113
    %v1639 = vpop.permute.xlu0 %1638
    %1640 = vrot.lane.b32.xlu0 %v424, 113
    %v1641 = vpop.permute.xlu0 %1640
    %1642 = vrot.lane.b32.xlu0 %v425, 113
    %v1643 = vpop.permute.xlu0 %1642
    %1644 = vrot.lane.b32.xlu0 %v426, 113
    %v1645 = vpop.permute.xlu0 %1644
    %vm1646 = vcmp.lt.s32.totalorder %v436, 113
    %v1647 = vsel %vm1646, %v1643, %v1645
    %v1648 = vsel %vm1646, %v1641, %v1643
    %v1649 = vsel %vm1646, %v1639, %v1641
    %v1650 = vsel %vm1646, %v1645, %v1639
    %s1651 = scalar_lea.vmem %s2, 6
    %v1652 = vld [vmem:[%s1651] ss:$8 sm:$0xf]
    %v1654 = vlaneseq
    %v1655 = vshrl.u32 %v1654, 7
    %v1656 = vsub.s32 0, %v1655
    %v1657 = vrot.slane %v1652, %v1656
    %v1658 = vlaneseq
    %v1659 = vshrl.u32 %v1658, 7
    %v1660 = vsub.s32 1, %v1659
    %v1661 = vrot.slane %v1652, %v1660
    %v1662 = vlaneseq
    %v1663 = vshrl.u32 %v1662, 7
    %v1664 = vsub.s32 2, %v1663
    %v1665 = vrot.slane %v1652, %v1664
    %v1666 = vlaneseq
    %v1667 = vshrl.u32 %v1666, 7
    %v1668 = vsub.s32 3, %v1667
    %v1669 = vrot.slane %v1652, %v1668
    %v1674 = vmul.f32 %v1649, %v1657
    %v1675 = vmul.f32 %v1648, %v1661
    %v1676 = vmul.f32 %v1647, %v1665
    %v1677 = vmul.f32 %v1650, %v1669
    %s1678 = scalar_lea.vmem %s5, 96
    %v1679 = vld [vmem:[%s1678] sm:$0xff]
    %v1680 = vld [vmem:[%s1678 + $0x8] sm:$0xff]
    %v1682 = vsel %vm513, %v1679, 0
    %v1685 = vsel %vm513, %v1680, 0
    %1687 = vmatprep.subr.mxu0 0.0
    %1688 = vmatpush1.msra.mxu0 0.0
    %1689 = vmatprep.subr.mxu0 0.0
    %1690 = vmatpush1.msra.mxu0 0.0
    %1691 = vmatprep.subr.mxu0 0.0
    %1692 = vmatpush1.msra.mxu0 0.0
    %1693 = vmatprep.subr.mxu0 0.0
    %1694 = vmatpush1.msra.mxu0 0.0
    %1695 = vmatprep.subr.mxu0 0.0
    %1696 = vmatpush1.msra.mxu0 0.0
    %1697 = vmatprep.subr.mxu0 0.0
    %1698 = vmatpush1.msra.mxu0 0.0
    %1699 = vmatprep.subr.mxu0 0.0
    %1700 = vmatpush1.msra.mxu0 0.0
    %1701 = vmatprep.subr.mxu0 0.0
    %1702 = vmatpush1.msra.mxu0 0.0
    %1703 = vmatprep.subr.mxu0 0.0
    %1704 = vmatpush1.msra.mxu0 0.0
    %1705 = vmatprep.subr.mxu0 0.0
    %1706 = vmatpush1.msra.mxu0 0.0
    %1707 = vmatprep.subr.mxu0 0.0
    %1708 = vmatpush1.msra.mxu0 0.0
    %1709 = vmatprep.subr.mxu0 0.0
    %1710 = vmatpush1.msra.mxu0 0.0
    %1711 = vmatprep.subr.mxu0 0.0
    %1712 = vmatpush1.msra.mxu0 0.0
    %1713 = vmatprep.subr.mxu0 0.0
    %1714 = vmatpush1.msra.mxu0 0.0
    %1715 = vmatprep.subr.mxu0 0.0
    %1716 = vmatpush1.msra.mxu0 0.0
    %1717 = vmatprep.subr.mxu0 %v1675
    %1718 = vmatpush1.msra.mxu0 %v1674
    %1719 = vmatprep.subr.mxu0 0.0
    %1720 = vmatpush2.msra.mxu0 0.0
    %1721 = vmatprep.subr.mxu0 0.0
    %1722 = vmatpush2.msra.mxu0 0.0
    %1723 = vmatprep.subr.mxu0 0.0
    %1724 = vmatpush2.msra.mxu0 0.0
    %1725 = vmatprep.subr.mxu0 0.0
    %1726 = vmatpush2.msra.mxu0 0.0
    %1727 = vmatprep.subr.mxu0 0.0
    %1728 = vmatpush2.msra.mxu0 0.0
    %1729 = vmatprep.subr.mxu0 0.0
    %1730 = vmatpush2.msra.mxu0 0.0
    %1731 = vmatprep.subr.mxu0 0.0
    %1732 = vmatpush2.msra.mxu0 0.0
    %1733 = vmatprep.subr.mxu0 0.0
    %1734 = vmatpush2.msra.mxu0 0.0
    %1735 = vmatprep.subr.mxu0 0.0
    %1736 = vmatpush2.msra.mxu0 0.0
    %1737 = vmatprep.subr.mxu0 0.0
    %1738 = vmatpush2.msra.mxu0 0.0
    %1739 = vmatprep.subr.mxu0 0.0
    %1740 = vmatpush2.msra.mxu0 0.0
    %1741 = vmatprep.subr.mxu0 0.0
    %1742 = vmatpush2.msra.mxu0 0.0
    %1743 = vmatprep.subr.mxu0 0.0
    %1744 = vmatpush2.msra.mxu0 0.0
    %1745 = vmatprep.subr.mxu0 0.0
    %1746 = vmatpush2.msra.mxu0 0.0
    %1747 = vmatprep.subr.mxu0 0.0
    %1748 = vmatpush2.msra.mxu0 0.0
    %1749 = vmatprep.subr.mxu0 0.0
    %1750 = vmatpush2.msra.mxu0 0.0
    %1751 = vmatprep.mubr.f32.mxu0 0.0
    %1752 = vmatmul.mubr.f32.gmra.mxu0 %v1682
    %v1753 = vpop.f32.mrf.mxu0
    %v1754 = vadd.f32 0.0, %v1753
    %v1755 = vpop.f32.mrf.mxu0
    %v1756 = vadd.f32 0.0, %v1755
    %1757 = vmatprep.mubr.f32.mxu0 0.0
    %1758 = vmatmul.mubr.f32.gmra.mxu0 %v1685
    %v1759 = vpop.f32.mrf.mxu0
    %v1760 = vadd.f32 0.0, %v1759
    %v1761 = vpop.f32.mrf.mxu0
    %v1762 = vadd.f32 0.0, %v1761
    %1763 = vdwg.mxu0
    %1764 = vmatprep.subr.mxu0 0.0
    %1765 = vmatpush1.msra.mxu0 0.0
    %1766 = vmatprep.subr.mxu0 0.0
    %1767 = vmatpush1.msra.mxu0 0.0
    %1768 = vmatprep.subr.mxu0 0.0
    %1769 = vmatpush1.msra.mxu0 0.0
    %1770 = vmatprep.subr.mxu0 0.0
    %1771 = vmatpush1.msra.mxu0 0.0
    %1772 = vmatprep.subr.mxu0 0.0
    %1773 = vmatpush1.msra.mxu0 0.0
    %1774 = vmatprep.subr.mxu0 0.0
    %1775 = vmatpush1.msra.mxu0 0.0
    %1776 = vmatprep.subr.mxu0 0.0
    %1777 = vmatpush1.msra.mxu0 0.0
    %1778 = vmatprep.subr.mxu0 0.0
    %1779 = vmatpush1.msra.mxu0 0.0
    %1780 = vmatprep.subr.mxu0 0.0
    %1781 = vmatpush1.msra.mxu0 0.0
    %1782 = vmatprep.subr.mxu0 0.0
    %1783 = vmatpush1.msra.mxu0 0.0
    %1784 = vmatprep.subr.mxu0 0.0
    %1785 = vmatpush1.msra.mxu0 0.0
    %1786 = vmatprep.subr.mxu0 0.0
    %1787 = vmatpush1.msra.mxu0 0.0
    %1788 = vmatprep.subr.mxu0 0.0
    %1789 = vmatpush1.msra.mxu0 0.0
    %1790 = vmatprep.subr.mxu0 0.0
    %1791 = vmatpush1.msra.mxu0 0.0
    %1792 = vmatprep.subr.mxu0 0.0
    %1793 = vmatpush1.msra.mxu0 0.0
    %1794 = vmatprep.subr.mxu0 %v1677
    %1795 = vmatpush1.msra.mxu0 %v1676
    %1796 = vmatprep.subr.mxu0 0.0
    %1797 = vmatpush2.msra.mxu0 0.0
    %1798 = vmatprep.subr.mxu0 0.0
    %1799 = vmatpush2.msra.mxu0 0.0
    %1800 = vmatprep.subr.mxu0 0.0
    %1801 = vmatpush2.msra.mxu0 0.0
    %1802 = vmatprep.subr.mxu0 0.0
    %1803 = vmatpush2.msra.mxu0 0.0
    %1804 = vmatprep.subr.mxu0 0.0
    %1805 = vmatpush2.msra.mxu0 0.0
    %1806 = vmatprep.subr.mxu0 0.0
    %1807 = vmatpush2.msra.mxu0 0.0
    %1808 = vmatprep.subr.mxu0 0.0
    %1809 = vmatpush2.msra.mxu0 0.0
    %1810 = vmatprep.subr.mxu0 0.0
    %1811 = vmatpush2.msra.mxu0 0.0
    %1812 = vmatprep.subr.mxu0 0.0
    %1813 = vmatpush2.msra.mxu0 0.0
    %1814 = vmatprep.subr.mxu0 0.0
    %1815 = vmatpush2.msra.mxu0 0.0
    %1816 = vmatprep.subr.mxu0 0.0
    %1817 = vmatpush2.msra.mxu0 0.0
    %1818 = vmatprep.subr.mxu0 0.0
    %1819 = vmatpush2.msra.mxu0 0.0
    %1820 = vmatprep.subr.mxu0 0.0
    %1821 = vmatpush2.msra.mxu0 0.0
    %1822 = vmatprep.subr.mxu0 0.0
    %1823 = vmatpush2.msra.mxu0 0.0
    %1824 = vmatprep.subr.mxu0 0.0
    %1825 = vmatpush2.msra.mxu0 0.0
    %1826 = vmatprep.subr.mxu0 0.0
    %1827 = vmatpush2.msra.mxu0 0.0
    %1828 = vmatprep.mubr.f32.mxu0 0.0
    %1829 = vmatmul.mubr.f32.gmra.mxu0 %v1682
    %v1830 = vpop.f32.mrf.mxu0
    %v1831 = vadd.f32 0.0, %v1830
    %v1832 = vpop.f32.mrf.mxu0
    %v1833 = vadd.f32 0.0, %v1832
    %1834 = vmatprep.mubr.f32.mxu0 0.0
    %1835 = vmatmul.mubr.f32.gmra.mxu0 %v1685
    %v1836 = vpop.f32.mrf.mxu0
    %v1837 = vadd.f32 0.0, %v1836
    %v1838 = vpop.f32.mrf.mxu0
    %v1839 = vadd.f32 0.0, %v1838
    %1840 = vdwg.mxu0
    %v1841 = vadd.f32 %v1630, %v1754
    %v1842 = vadd.f32 %v1631, %v1756
    %v1843 = vadd.f32 %v1632, %v1831
    %v1844 = vadd.f32 %v1633, %v1833
    %v1845 = vadd.f32 %v1634, %v1760
    %v1846 = vadd.f32 %v1635, %v1762
    %v1847 = vadd.f32 %v1636, %v1837
    %v1848 = vadd.f32 %v1637, %v1839
    %1849 = vrot.lane.b32.xlu0 %v423, 112
    %v1850 = vpop.permute.xlu0 %1849
    %1851 = vrot.lane.b32.xlu0 %v424, 112
    %v1852 = vpop.permute.xlu0 %1851
    %1853 = vrot.lane.b32.xlu0 %v425, 112
    %v1854 = vpop.permute.xlu0 %1853
    %1855 = vrot.lane.b32.xlu0 %v426, 112
    %v1856 = vpop.permute.xlu0 %1855
    %vm1857 = vcmp.lt.s32.totalorder %v436, 112
    %v1858 = vsel %vm1857, %v1854, %v1856
    %v1859 = vsel %vm1857, %v1852, %v1854
    %v1860 = vsel %vm1857, %v1850, %v1852
    %v1861 = vsel %vm1857, %v1856, %v1850
    %s1862 = scalar_lea.vmem %s2, 7
    %v1863 = vld [vmem:[%s1862] ss:$8 sm:$0xf]
    %v1865 = vlaneseq
    %v1866 = vshrl.u32 %v1865, 7
    %v1867 = vsub.s32 0, %v1866
    %v1868 = vrot.slane %v1863, %v1867
    %v1869 = vlaneseq
    %v1870 = vshrl.u32 %v1869, 7
    %v1871 = vsub.s32 1, %v1870
    %v1872 = vrot.slane %v1863, %v1871
    %v1873 = vlaneseq
    %v1874 = vshrl.u32 %v1873, 7
    %v1875 = vsub.s32 2, %v1874
    %v1876 = vrot.slane %v1863, %v1875
    %v1877 = vlaneseq
    %v1878 = vshrl.u32 %v1877, 7
    %v1879 = vsub.s32 3, %v1878
    %v1880 = vrot.slane %v1863, %v1879
    %v1885 = vmul.f32 %v1860, %v1868
    %v1886 = vmul.f32 %v1859, %v1872
    %v1887 = vmul.f32 %v1858, %v1876
    %v1888 = vmul.f32 %v1861, %v1880
    %s1889 = scalar_lea.vmem %s5, 112
    %v1890 = vld [vmem:[%s1889] sm:$0xff]
    %v1891 = vld [vmem:[%s1889 + $0x8] sm:$0xff]
    %v1893 = vsel %vm513, %v1890, 0
    %v1896 = vsel %vm513, %v1891, 0
    %1898 = vmatprep.subr.mxu0 0.0
    %1899 = vmatpush1.msra.mxu0 0.0
    %1900 = vmatprep.subr.mxu0 0.0
    %1901 = vmatpush1.msra.mxu0 0.0
    %1902 = vmatprep.subr.mxu0 0.0
    %1903 = vmatpush1.msra.mxu0 0.0
    %1904 = vmatprep.subr.mxu0 0.0
    %1905 = vmatpush1.msra.mxu0 0.0
    %1906 = vmatprep.subr.mxu0 0.0
    %1907 = vmatpush1.msra.mxu0 0.0
    %1908 = vmatprep.subr.mxu0 0.0
    %1909 = vmatpush1.msra.mxu0 0.0
    %1910 = vmatprep.subr.mxu0 0.0
    %1911 = vmatpush1.msra.mxu0 0.0
    %1912 = vmatprep.subr.mxu0 0.0
    %1913 = vmatpush1.msra.mxu0 0.0
    %1914 = vmatprep.subr.mxu0 0.0
    %1915 = vmatpush1.msra.mxu0 0.0
    %1916 = vmatprep.subr.mxu0 0.0
    %1917 = vmatpush1.msra.mxu0 0.0
    %1918 = vmatprep.subr.mxu0 0.0
    %1919 = vmatpush1.msra.mxu0 0.0
    %1920 = vmatprep.subr.mxu0 0.0
    %1921 = vmatpush1.msra.mxu0 0.0
    %1922 = vmatprep.subr.mxu0 0.0
    %1923 = vmatpush1.msra.mxu0 0.0
    %1924 = vmatprep.subr.mxu0 0.0
    %1925 = vmatpush1.msra.mxu0 0.0
    %1926 = vmatprep.subr.mxu0 0.0
    %1927 = vmatpush1.msra.mxu0 0.0
    %1928 = vmatprep.subr.mxu0 %v1886
    %1929 = vmatpush1.msra.mxu0 %v1885
    %1930 = vmatprep.subr.mxu0 0.0
    %1931 = vmatpush2.msra.mxu0 0.0
    %1932 = vmatprep.subr.mxu0 0.0
    %1933 = vmatpush2.msra.mxu0 0.0
    %1934 = vmatprep.subr.mxu0 0.0
    %1935 = vmatpush2.msra.mxu0 0.0
    %1936 = vmatprep.subr.mxu0 0.0
    %1937 = vmatpush2.msra.mxu0 0.0
    %1938 = vmatprep.subr.mxu0 0.0
    %1939 = vmatpush2.msra.mxu0 0.0
    %1940 = vmatprep.subr.mxu0 0.0
    %1941 = vmatpush2.msra.mxu0 0.0
    %1942 = vmatprep.subr.mxu0 0.0
    %1943 = vmatpush2.msra.mxu0 0.0
    %1944 = vmatprep.subr.mxu0 0.0
    %1945 = vmatpush2.msra.mxu0 0.0
    %1946 = vmatprep.subr.mxu0 0.0
    %1947 = vmatpush2.msra.mxu0 0.0
    %1948 = vmatprep.subr.mxu0 0.0
    %1949 = vmatpush2.msra.mxu0 0.0
    %1950 = vmatprep.subr.mxu0 0.0
    %1951 = vmatpush2.msra.mxu0 0.0
    %1952 = vmatprep.subr.mxu0 0.0
    %1953 = vmatpush2.msra.mxu0 0.0
    %1954 = vmatprep.subr.mxu0 0.0
    %1955 = vmatpush2.msra.mxu0 0.0
    %1956 = vmatprep.subr.mxu0 0.0
    %1957 = vmatpush2.msra.mxu0 0.0
    %1958 = vmatprep.subr.mxu0 0.0
    %1959 = vmatpush2.msra.mxu0 0.0
    %1960 = vmatprep.subr.mxu0 0.0
    %1961 = vmatpush2.msra.mxu0 0.0
    %1962 = vmatprep.mubr.f32.mxu0 0.0
    %1963 = vmatmul.mubr.f32.gmra.mxu0 %v1893
    %v1964 = vpop.f32.mrf.mxu0
    %v1965 = vadd.f32 0.0, %v1964
    %v1966 = vpop.f32.mrf.mxu0
    %v1967 = vadd.f32 0.0, %v1966
    %1968 = vmatprep.mubr.f32.mxu0 0.0
    %1969 = vmatmul.mubr.f32.gmra.mxu0 %v1896
    %v1970 = vpop.f32.mrf.mxu0
    %v1971 = vadd.f32 0.0, %v1970
    %v1972 = vpop.f32.mrf.mxu0
    %v1973 = vadd.f32 0.0, %v1972
    %1974 = vdwg.mxu0
    %1975 = vmatprep.subr.mxu0 0.0
    %1976 = vmatpush1.msra.mxu0 0.0
    %1977 = vmatprep.subr.mxu0 0.0
    %1978 = vmatpush1.msra.mxu0 0.0
    %1979 = vmatprep.subr.mxu0 0.0
    %1980 = vmatpush1.msra.mxu0 0.0
    %1981 = vmatprep.subr.mxu0 0.0
    %1982 = vmatpush1.msra.mxu0 0.0
    %1983 = vmatprep.subr.mxu0 0.0
    %1984 = vmatpush1.msra.mxu0 0.0
    %1985 = vmatprep.subr.mxu0 0.0
    %1986 = vmatpush1.msra.mxu0 0.0
    %1987 = vmatprep.subr.mxu0 0.0
    %1988 = vmatpush1.msra.mxu0 0.0
    %1989 = vmatprep.subr.mxu0 0.0
    %1990 = vmatpush1.msra.mxu0 0.0
    %1991 = vmatprep.subr.mxu0 0.0
    %1992 = vmatpush1.msra.mxu0 0.0
    %1993 = vmatprep.subr.mxu0 0.0
    %1994 = vmatpush1.msra.mxu0 0.0
    %1995 = vmatprep.subr.mxu0 0.0
    %1996 = vmatpush1.msra.mxu0 0.0
    %1997 = vmatprep.subr.mxu0 0.0
    %1998 = vmatpush1.msra.mxu0 0.0
    %1999 = vmatprep.subr.mxu0 0.0
    %2000 = vmatpush1.msra.mxu0 0.0
    %2001 = vmatprep.subr.mxu0 0.0
    %2002 = vmatpush1.msra.mxu0 0.0
    %2003 = vmatprep.subr.mxu0 0.0
    %2004 = vmatpush1.msra.mxu0 0.0
    %2005 = vmatprep.subr.mxu0 %v1888
    %2006 = vmatpush1.msra.mxu0 %v1887
    %2007 = vmatprep.subr.mxu0 0.0
    %2008 = vmatpush2.msra.mxu0 0.0
    %2009 = vmatprep.subr.mxu0 0.0
    %2010 = vmatpush2.msra.mxu0 0.0
    %2011 = vmatprep.subr.mxu0 0.0
    %2012 = vmatpush2.msra.mxu0 0.0
    %2013 = vmatprep.subr.mxu0 0.0
    %2014 = vmatpush2.msra.mxu0 0.0
    %2015 = vmatprep.subr.mxu0 0.0
    %2016 = vmatpush2.msra.mxu0 0.0
    %2017 = vmatprep.subr.mxu0 0.0
    %2018 = vmatpush2.msra.mxu0 0.0
    %2019 = vmatprep.subr.mxu0 0.0
    %2020 = vmatpush2.msra.mxu0 0.0
    %2021 = vmatprep.subr.mxu0 0.0
    %2022 = vmatpush2.msra.mxu0 0.0
    %2023 = vmatprep.subr.mxu0 0.0
    %2024 = vmatpush2.msra.mxu0 0.0
    %2025 = vmatprep.subr.mxu0 0.0
    %2026 = vmatpush2.msra.mxu0 0.0
    %2027 = vmatprep.subr.mxu0 0.0
    %2028 = vmatpush2.msra.mxu0 0.0
    %2029 = vmatprep.subr.mxu0 0.0
    %2030 = vmatpush2.msra.mxu0 0.0
    %2031 = vmatprep.subr.mxu0 0.0
    %2032 = vmatpush2.msra.mxu0 0.0
    %2033 = vmatprep.subr.mxu0 0.0
    %2034 = vmatpush2.msra.mxu0 0.0
    %2035 = vmatprep.subr.mxu0 0.0
    %2036 = vmatpush2.msra.mxu0 0.0
    %2037 = vmatprep.subr.mxu0 0.0
    %2038 = vmatpush2.msra.mxu0 0.0
    %2039 = vmatprep.mubr.f32.mxu0 0.0
    %2040 = vmatmul.mubr.f32.gmra.mxu0 %v1893
    %v2041 = vpop.f32.mrf.mxu0
    %v2042 = vadd.f32 0.0, %v2041
    %v2043 = vpop.f32.mrf.mxu0
    %v2044 = vadd.f32 0.0, %v2043
    %2045 = vmatprep.mubr.f32.mxu0 0.0
    %2046 = vmatmul.mubr.f32.gmra.mxu0 %v1896
    %v2047 = vpop.f32.mrf.mxu0
    %v2048 = vadd.f32 0.0, %v2047
    %v2049 = vpop.f32.mrf.mxu0
    %v2050 = vadd.f32 0.0, %v2049
    %2051 = vdwg.mxu0
    %v2052 = vadd.f32 %v1841, %v1965
    %v2053 = vadd.f32 %v1842, %v1967
    %v2054 = vadd.f32 %v1843, %v2042
    %v2055 = vadd.f32 %v1844, %v2044
    %v2056 = vadd.f32 %v1845, %v1971
    %v2057 = vadd.f32 %v1846, %v1973
    %v2058 = vadd.f32 %v1847, %v2048
    %v2059 = vadd.f32 %v1848, %v2050
    %2060 = vrot.lane.b32.xlu0 %v423, 111
    %v2061 = vpop.permute.xlu0 %2060
    %2062 = vrot.lane.b32.xlu0 %v424, 111
    %v2063 = vpop.permute.xlu0 %2062
    %2064 = vrot.lane.b32.xlu0 %v425, 111
    %v2065 = vpop.permute.xlu0 %2064
    %2066 = vrot.lane.b32.xlu0 %v426, 111
    %v2067 = vpop.permute.xlu0 %2066
    %vm2068 = vcmp.lt.s32.totalorder %v436, 111
    %v2069 = vsel %vm2068, %v2065, %v2067
    %v2070 = vsel %vm2068, %v2063, %v2065
    %v2071 = vsel %vm2068, %v2061, %v2063
    %v2072 = vsel %vm2068, %v2067, %v2061
    %s2073 = scalar_lea.vmem %s2, 32
    %v2074 = vld [vmem:[%s2073] ss:$8 sm:$0xf]
    %v2076 = vlaneseq
    %v2077 = vshrl.u32 %v2076, 7
    %v2078 = vsub.s32 0, %v2077
    %v2079 = vrot.slane %v2074, %v2078
    %v2080 = vlaneseq
    %v2081 = vshrl.u32 %v2080, 7
    %v2082 = vsub.s32 1, %v2081
    %v2083 = vrot.slane %v2074, %v2082
    %v2084 = vlaneseq
    %v2085 = vshrl.u32 %v2084, 7
    %v2086 = vsub.s32 2, %v2085
    %v2087 = vrot.slane %v2074, %v2086
    %v2088 = vlaneseq
    %v2089 = vshrl.u32 %v2088, 7
    %v2090 = vsub.s32 3, %v2089
    %v2091 = vrot.slane %v2074, %v2090
    %v2096 = vmul.f32 %v2071, %v2079
    %v2097 = vmul.f32 %v2070, %v2083
    %v2098 = vmul.f32 %v2069, %v2087
    %v2099 = vmul.f32 %v2072, %v2091
    %s2100 = scalar_lea.vmem %s5, 128
    %v2101 = vld [vmem:[%s2100] sm:$0xff]
    %v2102 = vld [vmem:[%s2100 + $0x8] sm:$0xff]
    %v2104 = vsel %vm513, %v2101, 0
    %v2107 = vsel %vm513, %v2102, 0
    %2109 = vmatprep.subr.mxu0 0.0
    %2110 = vmatpush1.msra.mxu0 0.0
    %2111 = vmatprep.subr.mxu0 0.0
    %2112 = vmatpush1.msra.mxu0 0.0
    %2113 = vmatprep.subr.mxu0 0.0
    %2114 = vmatpush1.msra.mxu0 0.0
    %2115 = vmatprep.subr.mxu0 0.0
    %2116 = vmatpush1.msra.mxu0 0.0
    %2117 = vmatprep.subr.mxu0 0.0
    %2118 = vmatpush1.msra.mxu0 0.0
    %2119 = vmatprep.subr.mxu0 0.0
    %2120 = vmatpush1.msra.mxu0 0.0
    %2121 = vmatprep.subr.mxu0 0.0
    %2122 = vmatpush1.msra.mxu0 0.0
    %2123 = vmatprep.subr.mxu0 0.0
    %2124 = vmatpush1.msra.mxu0 0.0
    %2125 = vmatprep.subr.mxu0 0.0
    %2126 = vmatpush1.msra.mxu0 0.0
    %2127 = vmatprep.subr.mxu0 0.0
    %2128 = vmatpush1.msra.mxu0 0.0
    %2129 = vmatprep.subr.mxu0 0.0
    %2130 = vmatpush1.msra.mxu0 0.0
    %2131 = vmatprep.subr.mxu0 0.0
    %2132 = vmatpush1.msra.mxu0 0.0
    %2133 = vmatprep.subr.mxu0 0.0
    %2134 = vmatpush1.msra.mxu0 0.0
    %2135 = vmatprep.subr.mxu0 0.0
    %2136 = vmatpush1.msra.mxu0 0.0
    %2137 = vmatprep.subr.mxu0 0.0
    %2138 = vmatpush1.msra.mxu0 0.0
    %2139 = vmatprep.subr.mxu0 %v2097
    %2140 = vmatpush1.msra.mxu0 %v2096
    %2141 = vmatprep.subr.mxu0 0.0
    %2142 = vmatpush2.msra.mxu0 0.0
    %2143 = vmatprep.subr.mxu0 0.0
    %2144 = vmatpush2.msra.mxu0 0.0
    %2145 = vmatprep.subr.mxu0 0.0
    %2146 = vmatpush2.msra.mxu0 0.0
    %2147 = vmatprep.subr.mxu0 0.0
    %2148 = vmatpush2.msra.mxu0 0.0
    %2149 = vmatprep.subr.mxu0 0.0
    %2150 = vmatpush2.msra.mxu0 0.0
    %2151 = vmatprep.subr.mxu0 0.0
    %2152 = vmatpush2.msra.mxu0 0.0
    %2153 = vmatprep.subr.mxu0 0.0
    %2154 = vmatpush2.msra.mxu0 0.0
    %2155 = vmatprep.subr.mxu0 0.0
    %2156 = vmatpush2.msra.mxu0 0.0
    %2157 = vmatprep.subr.mxu0 0.0
    %2158 = vmatpush2.msra.mxu0 0.0
    %2159 = vmatprep.subr.mxu0 0.0
    %2160 = vmatpush2.msra.mxu0 0.0
    %2161 = vmatprep.subr.mxu0 0.0
    %2162 = vmatpush2.msra.mxu0 0.0
    %2163 = vmatprep.subr.mxu0 0.0
    %2164 = vmatpush2.msra.mxu0 0.0
    %2165 = vmatprep.subr.mxu0 0.0
    %2166 = vmatpush2.msra.mxu0 0.0
    %2167 = vmatprep.subr.mxu0 0.0
    %2168 = vmatpush2.msra.mxu0 0.0
    %2169 = vmatprep.subr.mxu0 0.0
    %2170 = vmatpush2.msra.mxu0 0.0
    %2171 = vmatprep.subr.mxu0 0.0
    %2172 = vmatpush2.msra.mxu0 0.0
    %2173 = vmatprep.mubr.f32.mxu0 0.0
    %2174 = vmatmul.mubr.f32.gmra.mxu0 %v2104
    %v2175 = vpop.f32.mrf.mxu0
    %v2176 = vadd.f32 0.0, %v2175
    %v2177 = vpop.f32.mrf.mxu0
    %v2178 = vadd.f32 0.0, %v2177
    %2179 = vmatprep.mubr.f32.mxu0 0.0
    %2180 = vmatmul.mubr.f32.gmra.mxu0 %v2107
    %v2181 = vpop.f32.mrf.mxu0
    %v2182 = vadd.f32 0.0, %v2181
    %v2183 = vpop.f32.mrf.mxu0
    %v2184 = vadd.f32 0.0, %v2183
    %2185 = vdwg.mxu0
    %2186 = vmatprep.subr.mxu0 0.0
    %2187 = vmatpush1.msra.mxu0 0.0
    %2188 = vmatprep.subr.mxu0 0.0
    %2189 = vmatpush1.msra.mxu0 0.0
    %2190 = vmatprep.subr.mxu0 0.0
    %2191 = vmatpush1.msra.mxu0 0.0
    %2192 = vmatprep.subr.mxu0 0.0
    %2193 = vmatpush1.msra.mxu0 0.0
    %2194 = vmatprep.subr.mxu0 0.0
    %2195 = vmatpush1.msra.mxu0 0.0
    %2196 = vmatprep.subr.mxu0 0.0
    %2197 = vmatpush1.msra.mxu0 0.0
    %2198 = vmatprep.subr.mxu0 0.0
    %2199 = vmatpush1.msra.mxu0 0.0
    %2200 = vmatprep.subr.mxu0 0.0
    %2201 = vmatpush1.msra.mxu0 0.0
    %2202 = vmatprep.subr.mxu0 0.0
    %2203 = vmatpush1.msra.mxu0 0.0
    %2204 = vmatprep.subr.mxu0 0.0
    %2205 = vmatpush1.msra.mxu0 0.0
    %2206 = vmatprep.subr.mxu0 0.0
    %2207 = vmatpush1.msra.mxu0 0.0
    %2208 = vmatprep.subr.mxu0 0.0
    %2209 = vmatpush1.msra.mxu0 0.0
    %2210 = vmatprep.subr.mxu0 0.0
    %2211 = vmatpush1.msra.mxu0 0.0
    %2212 = vmatprep.subr.mxu0 0.0
    %2213 = vmatpush1.msra.mxu0 0.0
    %2214 = vmatprep.subr.mxu0 0.0
    %2215 = vmatpush1.msra.mxu0 0.0
    %2216 = vmatprep.subr.mxu0 %v2099
    %2217 = vmatpush1.msra.mxu0 %v2098
    %2218 = vmatprep.subr.mxu0 0.0
    %2219 = vmatpush2.msra.mxu0 0.0
    %2220 = vmatprep.subr.mxu0 0.0
    %2221 = vmatpush2.msra.mxu0 0.0
    %2222 = vmatprep.subr.mxu0 0.0
    %2223 = vmatpush2.msra.mxu0 0.0
    %2224 = vmatprep.subr.mxu0 0.0
    %2225 = vmatpush2.msra.mxu0 0.0
    %2226 = vmatprep.subr.mxu0 0.0
    %2227 = vmatpush2.msra.mxu0 0.0
    %2228 = vmatprep.subr.mxu0 0.0
    %2229 = vmatpush2.msra.mxu0 0.0
    %2230 = vmatprep.subr.mxu0 0.0
    %2231 = vmatpush2.msra.mxu0 0.0
    %2232 = vmatprep.subr.mxu0 0.0
    %2233 = vmatpush2.msra.mxu0 0.0
    %2234 = vmatprep.subr.mxu0 0.0
    %2235 = vmatpush2.msra.mxu0 0.0
    %2236 = vmatprep.subr.mxu0 0.0
    %2237 = vmatpush2.msra.mxu0 0.0
    %2238 = vmatprep.subr.mxu0 0.0
    %2239 = vmatpush2.msra.mxu0 0.0
    %2240 = vmatprep.subr.mxu0 0.0
    %2241 = vmatpush2.msra.mxu0 0.0
    %2242 = vmatprep.subr.mxu0 0.0
    %2243 = vmatpush2.msra.mxu0 0.0
    %2244 = vmatprep.subr.mxu0 0.0
    %2245 = vmatpush2.msra.mxu0 0.0
    %2246 = vmatprep.subr.mxu0 0.0
    %2247 = vmatpush2.msra.mxu0 0.0
    %2248 = vmatprep.subr.mxu0 0.0
    %2249 = vmatpush2.msra.mxu0 0.0
    %2250 = vmatprep.mubr.f32.mxu0 0.0
    %2251 = vmatmul.mubr.f32.gmra.mxu0 %v2104
    %v2252 = vpop.f32.mrf.mxu0
    %v2253 = vadd.f32 0.0, %v2252
    %v2254 = vpop.f32.mrf.mxu0
    %v2255 = vadd.f32 0.0, %v2254
    %2256 = vmatprep.mubr.f32.mxu0 0.0
    %2257 = vmatmul.mubr.f32.gmra.mxu0 %v2107
    %v2258 = vpop.f32.mrf.mxu0
    %v2259 = vadd.f32 0.0, %v2258
    %v2260 = vpop.f32.mrf.mxu0
    %v2261 = vadd.f32 0.0, %v2260
    %2262 = vdwg.mxu0
    %v2263 = vadd.f32 %v2052, %v2176
    %v2264 = vadd.f32 %v2053, %v2178
    %v2265 = vadd.f32 %v2054, %v2253
    %v2266 = vadd.f32 %v2055, %v2255
    %v2267 = vadd.f32 %v2056, %v2182
    %v2268 = vadd.f32 %v2057, %v2184
    %v2269 = vadd.f32 %v2058, %v2259
    %v2270 = vadd.f32 %v2059, %v2261
    %2271 = vset.pattern.permute.xlu0 0
    %2272 = vperm.xlu0 %2271, %v58
    %v2273 = vpop.permute.xlu0 %2272
    %2276 = vset.pattern.permute.xlu0 0
    %2277 = vperm.xlu0 %2276, %v59
    %v2278 = vpop.permute.xlu0 %2277
    %v2280 = vmul.f32 %v2263, %v2273
    %v2281 = vmul.f32 %v2264, %v2273
    %v2282 = vmul.f32 %v2265, %v2273
    %v2283 = vmul.f32 %v2266, %v2273
    %v2284 = vmul.f32 %v2267, %v2278
    %v2285 = vmul.f32 %v2268, %v2278
    %v2286 = vmul.f32 %v2269, %v2278
    %v2287 = vmul.f32 %v2270, %v2278
    %2288 = vset.pattern.permute.xlu0 1
    %2289 = vperm.xlu0 %2288, %v58
    %v2290 = vpop.permute.xlu0 %2289
    %2292 = vset.pattern.permute.xlu0 1
    %2293 = vperm.xlu0 %2292, %v59
    %v2294 = vpop.permute.xlu0 %2293
    %v2296 = vadd.f32 %v2280, %v2290
    %v2297 = vadd.f32 %v2281, %v2290
    %v2298 = vadd.f32 %v2282, %v2290
    %v2299 = vadd.f32 %v2283, %v2290
    %v2300 = vadd.f32 %v2284, %v2294
    %v2301 = vadd.f32 %v2285, %v2294
    %v2302 = vadd.f32 %v2286, %v2294
    %v2303 = vadd.f32 %v2287, %v2294
    %v2304 = vmax.f32 %v2296, 0.0
    %v2305 = vmax.f32 %v2297, 0.0
    %v2306 = vmax.f32 %v2298, 0.0
    %v2307 = vmax.f32 %v2299, 0.0
    %v2308 = vmax.f32 %v2300, 0.0
    %v2309 = vmax.f32 %v2301, 0.0
    %v2310 = vmax.f32 %v2302, 0.0
    %v2311 = vmax.f32 %v2303, 0.0
    %2312 = vrot.lane.b32.xlu0 %v2304, 17
    %v2313 = vpop.permute.xlu0 %2312
    %2314 = vrot.lane.b32.xlu0 %v2308, 17
    %v2315 = vpop.permute.xlu0 %2314
    %2316 = vrot.lane.b32.xlu0 %v2305, 17
    %v2317 = vpop.permute.xlu0 %2316
    %2318 = vrot.lane.b32.xlu0 %v2309, 17
    %v2319 = vpop.permute.xlu0 %2318
    %2320 = vrot.lane.b32.xlu0 %v2306, 17
    %v2321 = vpop.permute.xlu0 %2320
    %2322 = vrot.lane.b32.xlu0 %v2310, 17
    %v2323 = vpop.permute.xlu0 %2322
    %2324 = vrot.lane.b32.xlu0 %v2307, 17
    %v2325 = vpop.permute.xlu0 %2324
    %2326 = vrot.lane.b32.xlu0 %v2311, 17
    %v2327 = vpop.permute.xlu0 %2326
    %v2328 = vsel %vm437, %v2321, %v2325
    %v2329 = vsel %vm437, %v2323, %v2327
    %v2330 = vsel %vm437, %v2317, %v2321
    %v2331 = vsel %vm437, %v2319, %v2323
    %v2332 = vsel %vm437, %v2313, %v2317
    %v2333 = vsel %vm437, %v2315, %v2319
    %v2334 = vsel %vm437, %v2325, %v2313
    %v2335 = vsel %vm437, %v2327, %v2315
    %v2336 = vmul.f32 %v2334, %v447
    %v2337 = vmul.f32 %v2332, %v451
    %v2338 = vmul.f32 %v2330, %v455
    %v2339 = vmul.f32 %v2328, %v459
    %v2340 = vmul.f32 %v2335, %v447
    %v2341 = vmul.f32 %v2333, %v451
    %v2342 = vmul.f32 %v2331, %v455
    %v2343 = vmul.f32 %v2329, %v459
    %v2344 = vld [vmem:[%s6] sm:$0xff]
    %v2345 = vld [vmem:[%s6 + $0x8] sm:$0xff]
    %2346 = vrot.lane.b32.xlu0 %v2304, 16
    %v2347 = vpop.permute.xlu0 %2346
    %2348 = vrot.lane.b32.xlu0 %v2308, 16
    %v2349 = vpop.permute.xlu0 %2348
    %2350 = vrot.lane.b32.xlu0 %v2305, 16
    %v2351 = vpop.permute.xlu0 %2350
    %2352 = vrot.lane.b32.xlu0 %v2309, 16
    %v2353 = vpop.permute.xlu0 %2352
    %2354 = vrot.lane.b32.xlu0 %v2306, 16
    %v2355 = vpop.permute.xlu0 %2354
    %2356 = vrot.lane.b32.xlu0 %v2310, 16
    %v2357 = vpop.permute.xlu0 %2356
    %2358 = vrot.lane.b32.xlu0 %v2307, 16
    %v2359 = vpop.permute.xlu0 %2358
    %2360 = vrot.lane.b32.xlu0 %v2311, 16
    %v2361 = vpop.permute.xlu0 %2360
    %v2362 = vsel %vm478, %v2355, %v2359
    %v2363 = vsel %vm478, %v2357, %v2361
    %v2364 = vsel %vm478, %v2351, %v2355
    %v2365 = vsel %vm478, %v2353, %v2357
    %v2366 = vsel %vm478, %v2347, %v2351
    %v2367 = vsel %vm478, %v2349, %v2353
    %v2368 = vsel %vm478, %v2359, %v2347
    %v2369 = vsel %vm478, %v2361, %v2349
    %v2370 = vmul.f32 %v2368, %v489
    %v2371 = vmul.f32 %v2366, %v493
    %v2372 = vmul.f32 %v2364, %v497
    %v2373 = vmul.f32 %v2362, %v501
    %v2374 = vmul.f32 %v2369, %v489
    %v2375 = vmul.f32 %v2367, %v493
    %v2376 = vmul.f32 %v2365, %v497
    %v2377 = vmul.f32 %v2363, %v501
    %s2378 = scalar_lea.vmem %s6, 16
    %v2379 = vld [vmem:[%s2378] sm:$0xff]
    %v2380 = vld [vmem:[%s2378 + $0x8] sm:$0xff]
    %vm2381 = vcmask 130048
    %v2383 = vsel %vm2381, %v2379, 0
    %v2386 = vsel %vm2381, %v2380, 0
    %2388 = vmatprep.subr.mxu0 0.0
    %2389 = vmatpush1.msra.mxu0 0.0
    %2390 = vmatprep.subr.mxu0 0.0
    %2391 = vmatpush1.msra.mxu0 0.0
    %2392 = vmatprep.subr.mxu0 0.0
    %2393 = vmatpush1.msra.mxu0 0.0
    %2394 = vmatprep.subr.mxu0 0.0
    %2395 = vmatpush1.msra.mxu0 0.0
    %2396 = vmatprep.subr.mxu0 0.0
    %2397 = vmatpush1.msra.mxu0 0.0
    %2398 = vmatprep.subr.mxu0 0.0
    %2399 = vmatpush1.msra.mxu0 0.0
    %2400 = vmatprep.subr.mxu0 0.0
    %2401 = vmatpush1.msra.mxu0 0.0
    %2402 = vmatprep.subr.mxu0 0.0
    %2403 = vmatpush1.msra.mxu0 0.0
    %2404 = vmatprep.subr.mxu0 0.0
    %2405 = vmatpush1.msra.mxu0 0.0
    %2406 = vmatprep.subr.mxu0 0.0
    %2407 = vmatpush1.msra.mxu0 0.0
    %2408 = vmatprep.subr.mxu0 0.0
    %2409 = vmatpush1.msra.mxu0 0.0
    %2410 = vmatprep.subr.mxu0 0.0
    %2411 = vmatpush1.msra.mxu0 0.0
    %2412 = vmatprep.subr.mxu0 0.0
    %2413 = vmatpush1.msra.mxu0 0.0
    %2414 = vmatprep.subr.mxu0 0.0
    %2415 = vmatpush1.msra.mxu0 0.0
    %2416 = vmatprep.subr.mxu0 %v2375
    %2417 = vmatpush1.msra.mxu0 %v2374
    %2418 = vmatprep.subr.mxu0 %v2371
    %2419 = vmatpush1.msra.mxu0 %v2370
    %2420 = vmatprep.subr.mxu0 0.0
    %2421 = vmatpush2.msra.mxu0 0.0
    %2422 = vmatprep.subr.mxu0 0.0
    %2423 = vmatpush2.msra.mxu0 0.0
    %2424 = vmatprep.subr.mxu0 0.0
    %2425 = vmatpush2.msra.mxu0 0.0
    %2426 = vmatprep.subr.mxu0 0.0
    %2427 = vmatpush2.msra.mxu0 0.0
    %2428 = vmatprep.subr.mxu0 0.0
    %2429 = vmatpush2.msra.mxu0 0.0
    %2430 = vmatprep.subr.mxu0 0.0
    %2431 = vmatpush2.msra.mxu0 0.0
    %2432 = vmatprep.subr.mxu0 0.0
    %2433 = vmatpush2.msra.mxu0 0.0
    %2434 = vmatprep.subr.mxu0 0.0
    %2435 = vmatpush2.msra.mxu0 0.0
    %2436 = vmatprep.subr.mxu0 0.0
    %2437 = vmatpush2.msra.mxu0 0.0
    %2438 = vmatprep.subr.mxu0 0.0
    %2439 = vmatpush2.msra.mxu0 0.0
    %2440 = vmatprep.subr.mxu0 0.0
    %2441 = vmatpush2.msra.mxu0 0.0
    %2442 = vmatprep.subr.mxu0 0.0
    %2443 = vmatpush2.msra.mxu0 0.0
    %2444 = vmatprep.subr.mxu0 0.0
    %2445 = vmatpush2.msra.mxu0 0.0
    %2446 = vmatprep.subr.mxu0 0.0
    %2447 = vmatpush2.msra.mxu0 0.0
    %2448 = vmatprep.subr.mxu0 0.0
    %2449 = vmatpush2.msra.mxu0 0.0
    %2450 = vmatprep.subr.mxu0 0.0
    %2451 = vmatpush2.msra.mxu0 0.0
    %2452 = vmatprep.mubr.f32.mxu0 0.0
    %2453 = vmatmul.mubr.f32.gmra.mxu0 %v2383
    %v2454 = vpop.f32.mrf.mxu0
    %v2455 = vadd.f32 0.0, %v2454
    %v2456 = vpop.f32.mrf.mxu0
    %v2457 = vadd.f32 0.0, %v2456
    %2458 = vmatprep.mubr.f32.mxu0 0.0
    %2459 = vmatmul.mubr.f32.gmra.mxu0 %v2386
    %v2460 = vpop.f32.mrf.mxu0
    %v2461 = vadd.f32 0.0, %v2460
    %v2462 = vpop.f32.mrf.mxu0
    %v2463 = vadd.f32 0.0, %v2462
    %2464 = vdwg.mxu0
    %2465 = vmatprep.subr.mxu0 0.0
    %2466 = vmatpush1.msra.mxu0 0.0
    %2467 = vmatprep.subr.mxu0 0.0
    %2468 = vmatpush1.msra.mxu0 0.0
    %2469 = vmatprep.subr.mxu0 0.0
    %2470 = vmatpush1.msra.mxu0 0.0
    %2471 = vmatprep.subr.mxu0 0.0
    %2472 = vmatpush1.msra.mxu0 0.0
    %2473 = vmatprep.subr.mxu0 0.0
    %2474 = vmatpush1.msra.mxu0 0.0
    %2475 = vmatprep.subr.mxu0 0.0
    %2476 = vmatpush1.msra.mxu0 0.0
    %2477 = vmatprep.subr.mxu0 0.0
    %2478 = vmatpush1.msra.mxu0 0.0
    %2479 = vmatprep.subr.mxu0 0.0
    %2480 = vmatpush1.msra.mxu0 0.0
    %2481 = vmatprep.subr.mxu0 0.0
    %2482 = vmatpush1.msra.mxu0 0.0
    %2483 = vmatprep.subr.mxu0 0.0
    %2484 = vmatpush1.msra.mxu0 0.0
    %2485 = vmatprep.subr.mxu0 0.0
    %2486 = vmatpush1.msra.mxu0 0.0
    %2487 = vmatprep.subr.mxu0 0.0
    %2488 = vmatpush1.msra.mxu0 0.0
    %2489 = vmatprep.subr.mxu0 0.0
    %2490 = vmatpush1.msra.mxu0 0.0
    %2491 = vmatprep.subr.mxu0 0.0
    %2492 = vmatpush1.msra.mxu0 0.0
    %2493 = vmatprep.subr.mxu0 %v2377
    %2494 = vmatpush1.msra.mxu0 %v2376
    %2495 = vmatprep.subr.mxu0 %v2373
    %2496 = vmatpush1.msra.mxu0 %v2372
    %2497 = vmatprep.subr.mxu0 0.0
    %2498 = vmatpush2.msra.mxu0 0.0
    %2499 = vmatprep.subr.mxu0 0.0
    %2500 = vmatpush2.msra.mxu0 0.0
    %2501 = vmatprep.subr.mxu0 0.0
    %2502 = vmatpush2.msra.mxu0 0.0
    %2503 = vmatprep.subr.mxu0 0.0
    %2504 = vmatpush2.msra.mxu0 0.0
    %2505 = vmatprep.subr.mxu0 0.0
    %2506 = vmatpush2.msra.mxu0 0.0
    %2507 = vmatprep.subr.mxu0 0.0
    %2508 = vmatpush2.msra.mxu0 0.0
    %2509 = vmatprep.subr.mxu0 0.0
    %2510 = vmatpush2.msra.mxu0 0.0
    %2511 = vmatprep.subr.mxu0 0.0
    %2512 = vmatpush2.msra.mxu0 0.0
    %2513 = vmatprep.subr.mxu0 0.0
    %2514 = vmatpush2.msra.mxu0 0.0
    %2515 = vmatprep.subr.mxu0 0.0
    %2516 = vmatpush2.msra.mxu0 0.0
    %2517 = vmatprep.subr.mxu0 0.0
    %2518 = vmatpush2.msra.mxu0 0.0
    %2519 = vmatprep.subr.mxu0 0.0
    %2520 = vmatpush2.msra.mxu0 0.0
    %2521 = vmatprep.subr.mxu0 0.0
    %2522 = vmatpush2.msra.mxu0 0.0
    %2523 = vmatprep.subr.mxu0 0.0
    %2524 = vmatpush2.msra.mxu0 0.0
    %2525 = vmatprep.subr.mxu0 0.0
    %2526 = vmatpush2.msra.mxu0 0.0
    %2527 = vmatprep.subr.mxu0 0.0
    %2528 = vmatpush2.msra.mxu0 0.0
    %2529 = vmatprep.mubr.f32.mxu0 0.0
    %2530 = vmatmul.mubr.f32.gmra.mxu0 %v2383
    %v2531 = vpop.f32.mrf.mxu0
    %v2532 = vadd.f32 0.0, %v2531
    %v2533 = vpop.f32.mrf.mxu0
    %v2534 = vadd.f32 0.0, %v2533
    %2535 = vmatprep.mubr.f32.mxu0 0.0
    %2536 = vmatmul.mubr.f32.gmra.mxu0 %v2386
    %v2537 = vpop.f32.mrf.mxu0
    %v2538 = vadd.f32 0.0, %v2537
    %v2539 = vpop.f32.mrf.mxu0
    %v2540 = vadd.f32 0.0, %v2539
    %2541 = vdwg.mxu0
    %v2543 = vsel %vm2381, %v2344, 0
    %v2546 = vsel %vm2381, %v2345, 0
    %2548 = vmatprep.subr.mxu0 0.0
    %2549 = vmatpush1.msra.mxu0 0.0
    %2550 = vmatprep.subr.mxu0 0.0
    %2551 = vmatpush1.msra.mxu0 0.0
    %2552 = vmatprep.subr.mxu0 0.0
    %2553 = vmatpush1.msra.mxu0 0.0
    %2554 = vmatprep.subr.mxu0 0.0
    %2555 = vmatpush1.msra.mxu0 0.0
    %2556 = vmatprep.subr.mxu0 0.0
    %2557 = vmatpush1.msra.mxu0 0.0
    %2558 = vmatprep.subr.mxu0 0.0
    %2559 = vmatpush1.msra.mxu0 0.0
    %2560 = vmatprep.subr.mxu0 0.0
    %2561 = vmatpush1.msra.mxu0 0.0
    %2562 = vmatprep.subr.mxu0 0.0
    %2563 = vmatpush1.msra.mxu0 0.0
    %2564 = vmatprep.subr.mxu0 0.0
    %2565 = vmatpush1.msra.mxu0 0.0
    %2566 = vmatprep.subr.mxu0 0.0
    %2567 = vmatpush1.msra.mxu0 0.0
    %2568 = vmatprep.subr.mxu0 0.0
    %2569 = vmatpush1.msra.mxu0 0.0
    %2570 = vmatprep.subr.mxu0 0.0
    %2571 = vmatpush1.msra.mxu0 0.0
    %2572 = vmatprep.subr.mxu0 0.0
    %2573 = vmatpush1.msra.mxu0 0.0
    %2574 = vmatprep.subr.mxu0 0.0
    %2575 = vmatpush1.msra.mxu0 0.0
    %2576 = vmatprep.subr.mxu0 %v2341
    %2577 = vmatpush1.msra.mxu0 %v2340
    %2578 = vmatprep.subr.mxu0 %v2337
    %2579 = vmatpush1.msra.mxu0 %v2336
    %2580 = vmatprep.subr.mxu0 0.0
    %2581 = vmatpush2.msra.mxu0 0.0
    %2582 = vmatprep.subr.mxu0 0.0
    %2583 = vmatpush2.msra.mxu0 0.0
    %2584 = vmatprep.subr.mxu0 0.0
    %2585 = vmatpush2.msra.mxu0 0.0
    %2586 = vmatprep.subr.mxu0 0.0
    %2587 = vmatpush2.msra.mxu0 0.0
    %2588 = vmatprep.subr.mxu0 0.0
    %2589 = vmatpush2.msra.mxu0 0.0
    %2590 = vmatprep.subr.mxu0 0.0
    %2591 = vmatpush2.msra.mxu0 0.0
    %2592 = vmatprep.subr.mxu0 0.0
    %2593 = vmatpush2.msra.mxu0 0.0
    %2594 = vmatprep.subr.mxu0 0.0
    %2595 = vmatpush2.msra.mxu0 0.0
    %2596 = vmatprep.subr.mxu0 0.0
    %2597 = vmatpush2.msra.mxu0 0.0
    %2598 = vmatprep.subr.mxu0 0.0
    %2599 = vmatpush2.msra.mxu0 0.0
    %2600 = vmatprep.subr.mxu0 0.0
    %2601 = vmatpush2.msra.mxu0 0.0
    %2602 = vmatprep.subr.mxu0 0.0
    %2603 = vmatpush2.msra.mxu0 0.0
    %2604 = vmatprep.subr.mxu0 0.0
    %2605 = vmatpush2.msra.mxu0 0.0
    %2606 = vmatprep.subr.mxu0 0.0
    %2607 = vmatpush2.msra.mxu0 0.0
    %2608 = vmatprep.subr.mxu0 0.0
    %2609 = vmatpush2.msra.mxu0 0.0
    %2610 = vmatprep.subr.mxu0 0.0
    %2611 = vmatpush2.msra.mxu0 0.0
    %2612 = vmatprep.mubr.f32.mxu0 0.0
    %2613 = vmatmul.mubr.f32.gmra.mxu0 %v2543
    %v2614 = vpop.f32.mrf.mxu0
    %v2615 = vadd.f32 %v2455, %v2614
    %v2616 = vpop.f32.mrf.mxu0
    %v2617 = vadd.f32 %v2457, %v2616
    %2618 = vmatprep.mubr.f32.mxu0 0.0
    %2619 = vmatmul.mubr.f32.gmra.mxu0 %v2546
    %v2620 = vpop.f32.mrf.mxu0
    %v2621 = vadd.f32 %v2461, %v2620
    %v2622 = vpop.f32.mrf.mxu0
    %v2623 = vadd.f32 %v2463, %v2622
    %2624 = vdwg.mxu0
    %2625 = vmatprep.subr.mxu0 0.0
    %2626 = vmatpush1.msra.mxu0 0.0
    %2627 = vmatprep.subr.mxu0 0.0
    %2628 = vmatpush1.msra.mxu0 0.0
    %2629 = vmatprep.subr.mxu0 0.0
    %2630 = vmatpush1.msra.mxu0 0.0
    %2631 = vmatprep.subr.mxu0 0.0
    %2632 = vmatpush1.msra.mxu0 0.0
    %2633 = vmatprep.subr.mxu0 0.0
    %2634 = vmatpush1.msra.mxu0 0.0
    %2635 = vmatprep.subr.mxu0 0.0
    %2636 = vmatpush1.msra.mxu0 0.0
    %2637 = vmatprep.subr.mxu0 0.0
    %2638 = vmatpush1.msra.mxu0 0.0
    %2639 = vmatprep.subr.mxu0 0.0
    %2640 = vmatpush1.msra.mxu0 0.0
    %2641 = vmatprep.subr.mxu0 0.0
    %2642 = vmatpush1.msra.mxu0 0.0
    %2643 = vmatprep.subr.mxu0 0.0
    %2644 = vmatpush1.msra.mxu0 0.0
    %2645 = vmatprep.subr.mxu0 0.0
    %2646 = vmatpush1.msra.mxu0 0.0
    %2647 = vmatprep.subr.mxu0 0.0
    %2648 = vmatpush1.msra.mxu0 0.0
    %2649 = vmatprep.subr.mxu0 0.0
    %2650 = vmatpush1.msra.mxu0 0.0
    %2651 = vmatprep.subr.mxu0 0.0
    %2652 = vmatpush1.msra.mxu0 0.0
    %2653 = vmatprep.subr.mxu0 %v2343
    %2654 = vmatpush1.msra.mxu0 %v2342
    %2655 = vmatprep.subr.mxu0 %v2339
    %2656 = vmatpush1.msra.mxu0 %v2338
    %2657 = vmatprep.subr.mxu0 0.0
    %2658 = vmatpush2.msra.mxu0 0.0
    %2659 = vmatprep.subr.mxu0 0.0
    %2660 = vmatpush2.msra.mxu0 0.0
    %2661 = vmatprep.subr.mxu0 0.0
    %2662 = vmatpush2.msra.mxu0 0.0
    %2663 = vmatprep.subr.mxu0 0.0
    %2664 = vmatpush2.msra.mxu0 0.0
    %2665 = vmatprep.subr.mxu0 0.0
    %2666 = vmatpush2.msra.mxu0 0.0
    %2667 = vmatprep.subr.mxu0 0.0
    %2668 = vmatpush2.msra.mxu0 0.0
    %2669 = vmatprep.subr.mxu0 0.0
    %2670 = vmatpush2.msra.mxu0 0.0
    %2671 = vmatprep.subr.mxu0 0.0
    %2672 = vmatpush2.msra.mxu0 0.0
    %2673 = vmatprep.subr.mxu0 0.0
    %2674 = vmatpush2.msra.mxu0 0.0
    %2675 = vmatprep.subr.mxu0 0.0
    %2676 = vmatpush2.msra.mxu0 0.0
    %2677 = vmatprep.subr.mxu0 0.0
    %2678 = vmatpush2.msra.mxu0 0.0
    %2679 = vmatprep.subr.mxu0 0.0
    %2680 = vmatpush2.msra.mxu0 0.0
    %2681 = vmatprep.subr.mxu0 0.0
    %2682 = vmatpush2.msra.mxu0 0.0
    %2683 = vmatprep.subr.mxu0 0.0
    %2684 = vmatpush2.msra.mxu0 0.0
    %2685 = vmatprep.subr.mxu0 0.0
    %2686 = vmatpush2.msra.mxu0 0.0
    %2687 = vmatprep.subr.mxu0 0.0
    %2688 = vmatpush2.msra.mxu0 0.0
    %2689 = vmatprep.mubr.f32.mxu0 0.0
    %2690 = vmatmul.mubr.f32.gmra.mxu0 %v2543
    %v2691 = vpop.f32.mrf.mxu0
    %v2692 = vadd.f32 %v2532, %v2691
    %v2693 = vpop.f32.mrf.mxu0
    %v2694 = vadd.f32 %v2534, %v2693
    %2695 = vmatprep.mubr.f32.mxu0 0.0
    %2696 = vmatmul.mubr.f32.gmra.mxu0 %v2546
    %v2697 = vpop.f32.mrf.mxu0
    %v2698 = vadd.f32 %v2538, %v2697
    %v2699 = vpop.f32.mrf.mxu0
    %v2700 = vadd.f32 %v2540, %v2699
    %2701 = vdwg.mxu0
    %2702 = vrot.lane.b32.xlu0 %v2304, 15
    %v2703 = vpop.permute.xlu0 %2702
    %2704 = vrot.lane.b32.xlu0 %v2308, 15
    %v2705 = vpop.permute.xlu0 %2704
    %2706 = vrot.lane.b32.xlu0 %v2305, 15
    %v2707 = vpop.permute.xlu0 %2706
    %2708 = vrot.lane.b32.xlu0 %v2309, 15
    %v2709 = vpop.permute.xlu0 %2708
    %2710 = vrot.lane.b32.xlu0 %v2306, 15
    %v2711 = vpop.permute.xlu0 %2710
    %2712 = vrot.lane.b32.xlu0 %v2310, 15
    %v2713 = vpop.permute.xlu0 %2712
    %2714 = vrot.lane.b32.xlu0 %v2307, 15
    %v2715 = vpop.permute.xlu0 %2714
    %2716 = vrot.lane.b32.xlu0 %v2311, 15
    %v2717 = vpop.permute.xlu0 %2716
    %v2718 = vsel %vm842, %v2711, %v2715
    %v2719 = vsel %vm842, %v2713, %v2717
    %v2720 = vsel %vm842, %v2707, %v2711
    %v2721 = vsel %vm842, %v2709, %v2713
    %v2722 = vsel %vm842, %v2703, %v2707
    %v2723 = vsel %vm842, %v2705, %v2709
    %v2724 = vsel %vm842, %v2715, %v2703
    %v2725 = vsel %vm842, %v2717, %v2705
    %v2726 = vmul.f32 %v2724, %v853
    %v2727 = vmul.f32 %v2722, %v857
    %v2728 = vmul.f32 %v2720, %v861
    %v2729 = vmul.f32 %v2718, %v865
    %v2730 = vmul.f32 %v2725, %v853
    %v2731 = vmul.f32 %v2723, %v857
    %v2732 = vmul.f32 %v2721, %v861
    %v2733 = vmul.f32 %v2719, %v865
    %s2734 = scalar_lea.vmem %s6, 32
    %v2735 = vld [vmem:[%s2734] sm:$0xff]
    %v2736 = vld [vmem:[%s2734 + $0x8] sm:$0xff]
    %v2738 = vsel %vm2381, %v2735, 0
    %v2741 = vsel %vm2381, %v2736, 0
    %2743 = vmatprep.subr.mxu0 0.0
    %2744 = vmatpush1.msra.mxu0 0.0
    %2745 = vmatprep.subr.mxu0 0.0
    %2746 = vmatpush1.msra.mxu0 0.0
    %2747 = vmatprep.subr.mxu0 0.0
    %2748 = vmatpush1.msra.mxu0 0.0
    %2749 = vmatprep.subr.mxu0 0.0
    %2750 = vmatpush1.msra.mxu0 0.0
    %2751 = vmatprep.subr.mxu0 0.0
    %2752 = vmatpush1.msra.mxu0 0.0
    %2753 = vmatprep.subr.mxu0 0.0
    %2754 = vmatpush1.msra.mxu0 0.0
    %2755 = vmatprep.subr.mxu0 0.0
    %2756 = vmatpush1.msra.mxu0 0.0
    %2757 = vmatprep.subr.mxu0 0.0
    %2758 = vmatpush1.msra.mxu0 0.0
    %2759 = vmatprep.subr.mxu0 0.0
    %2760 = vmatpush1.msra.mxu0 0.0
    %2761 = vmatprep.subr.mxu0 0.0
    %2762 = vmatpush1.msra.mxu0 0.0
    %2763 = vmatprep.subr.mxu0 0.0
    %2764 = vmatpush1.msra.mxu0 0.0
    %2765 = vmatprep.subr.mxu0 0.0
    %2766 = vmatpush1.msra.mxu0 0.0
    %2767 = vmatprep.subr.mxu0 0.0
    %2768 = vmatpush1.msra.mxu0 0.0
    %2769 = vmatprep.subr.mxu0 0.0
    %2770 = vmatpush1.msra.mxu0 0.0
    %2771 = vmatprep.subr.mxu0 %v2731
    %2772 = vmatpush1.msra.mxu0 %v2730
    %2773 = vmatprep.subr.mxu0 %v2727
    %2774 = vmatpush1.msra.mxu0 %v2726
    %2775 = vmatprep.subr.mxu0 0.0
    %2776 = vmatpush2.msra.mxu0 0.0
    %2777 = vmatprep.subr.mxu0 0.0
    %2778 = vmatpush2.msra.mxu0 0.0
    %2779 = vmatprep.subr.mxu0 0.0
    %2780 = vmatpush2.msra.mxu0 0.0
    %2781 = vmatprep.subr.mxu0 0.0
    %2782 = vmatpush2.msra.mxu0 0.0
    %2783 = vmatprep.subr.mxu0 0.0
    %2784 = vmatpush2.msra.mxu0 0.0
    %2785 = vmatprep.subr.mxu0 0.0
    %2786 = vmatpush2.msra.mxu0 0.0
    %2787 = vmatprep.subr.mxu0 0.0
    %2788 = vmatpush2.msra.mxu0 0.0
    %2789 = vmatprep.subr.mxu0 0.0
    %2790 = vmatpush2.msra.mxu0 0.0
    %2791 = vmatprep.subr.mxu0 0.0
    %2792 = vmatpush2.msra.mxu0 0.0
    %2793 = vmatprep.subr.mxu0 0.0
    %2794 = vmatpush2.msra.mxu0 0.0
    %2795 = vmatprep.subr.mxu0 0.0
    %2796 = vmatpush2.msra.mxu0 0.0
    %2797 = vmatprep.subr.mxu0 0.0
    %2798 = vmatpush2.msra.mxu0 0.0
    %2799 = vmatprep.subr.mxu0 0.0
    %2800 = vmatpush2.msra.mxu0 0.0
    %2801 = vmatprep.subr.mxu0 0.0
    %2802 = vmatpush2.msra.mxu0 0.0
    %2803 = vmatprep.subr.mxu0 0.0
    %2804 = vmatpush2.msra.mxu0 0.0
    %2805 = vmatprep.subr.mxu0 0.0
    %2806 = vmatpush2.msra.mxu0 0.0
    %2807 = vmatprep.mubr.f32.mxu0 0.0
    %2808 = vmatmul.mubr.f32.gmra.mxu0 %v2738
    %v2809 = vpop.f32.mrf.mxu0
    %v2810 = vadd.f32 0.0, %v2809
    %v2811 = vpop.f32.mrf.mxu0
    %v2812 = vadd.f32 0.0, %v2811
    %2813 = vmatprep.mubr.f32.mxu0 0.0
    %2814 = vmatmul.mubr.f32.gmra.mxu0 %v2741
    %v2815 = vpop.f32.mrf.mxu0
    %v2816 = vadd.f32 0.0, %v2815
    %v2817 = vpop.f32.mrf.mxu0
    %v2818 = vadd.f32 0.0, %v2817
    %2819 = vdwg.mxu0
    %2820 = vmatprep.subr.mxu0 0.0
    %2821 = vmatpush1.msra.mxu0 0.0
    %2822 = vmatprep.subr.mxu0 0.0
    %2823 = vmatpush1.msra.mxu0 0.0
    %2824 = vmatprep.subr.mxu0 0.0
    %2825 = vmatpush1.msra.mxu0 0.0
    %2826 = vmatprep.subr.mxu0 0.0
    %2827 = vmatpush1.msra.mxu0 0.0
    %2828 = vmatprep.subr.mxu0 0.0
    %2829 = vmatpush1.msra.mxu0 0.0
    %2830 = vmatprep.subr.mxu0 0.0
    %2831 = vmatpush1.msra.mxu0 0.0
    %2832 = vmatprep.subr.mxu0 0.0
    %2833 = vmatpush1.msra.mxu0 0.0
    %2834 = vmatprep.subr.mxu0 0.0
    %2835 = vmatpush1.msra.mxu0 0.0
    %2836 = vmatprep.subr.mxu0 0.0
    %2837 = vmatpush1.msra.mxu0 0.0
    %2838 = vmatprep.subr.mxu0 0.0
    %2839 = vmatpush1.msra.mxu0 0.0
    %2840 = vmatprep.subr.mxu0 0.0
    %2841 = vmatpush1.msra.mxu0 0.0
    %2842 = vmatprep.subr.mxu0 0.0
    %2843 = vmatpush1.msra.mxu0 0.0
    %2844 = vmatprep.subr.mxu0 0.0
    %2845 = vmatpush1.msra.mxu0 0.0
    %2846 = vmatprep.subr.mxu0 0.0
    %2847 = vmatpush1.msra.mxu0 0.0
    %2848 = vmatprep.subr.mxu0 %v2733
    %2849 = vmatpush1.msra.mxu0 %v2732
    %2850 = vmatprep.subr.mxu0 %v2729
    %2851 = vmatpush1.msra.mxu0 %v2728
    %2852 = vmatprep.subr.mxu0 0.0
    %2853 = vmatpush2.msra.mxu0 0.0
    %2854 = vmatprep.subr.mxu0 0.0
    %2855 = vmatpush2.msra.mxu0 0.0
    %2856 = vmatprep.subr.mxu0 0.0
    %2857 = vmatpush2.msra.mxu0 0.0
    %2858 = vmatprep.subr.mxu0 0.0
    %2859 = vmatpush2.msra.mxu0 0.0
    %2860 = vmatprep.subr.mxu0 0.0
    %2861 = vmatpush2.msra.mxu0 0.0
    %2862 = vmatprep.subr.mxu0 0.0
    %2863 = vmatpush2.msra.mxu0 0.0
    %2864 = vmatprep.subr.mxu0 0.0
    %2865 = vmatpush2.msra.mxu0 0.0
    %2866 = vmatprep.subr.mxu0 0.0
    %2867 = vmatpush2.msra.mxu0 0.0
    %2868 = vmatprep.subr.mxu0 0.0
    %2869 = vmatpush2.msra.mxu0 0.0
    %2870 = vmatprep.subr.mxu0 0.0
    %2871 = vmatpush2.msra.mxu0 0.0
    %2872 = vmatprep.subr.mxu0 0.0
    %2873 = vmatpush2.msra.mxu0 0.0
    %2874 = vmatprep.subr.mxu0 0.0
    %2875 = vmatpush2.msra.mxu0 0.0
    %2876 = vmatprep.subr.mxu0 0.0
    %2877 = vmatpush2.msra.mxu0 0.0
    %2878 = vmatprep.subr.mxu0 0.0
    %2879 = vmatpush2.msra.mxu0 0.0
    %2880 = vmatprep.subr.mxu0 0.0
    %2881 = vmatpush2.msra.mxu0 0.0
    %2882 = vmatprep.subr.mxu0 0.0
    %2883 = vmatpush2.msra.mxu0 0.0
    %2884 = vmatprep.mubr.f32.mxu0 0.0
    %2885 = vmatmul.mubr.f32.gmra.mxu0 %v2738
    %v2886 = vpop.f32.mrf.mxu0
    %v2887 = vadd.f32 0.0, %v2886
    %v2888 = vpop.f32.mrf.mxu0
    %v2889 = vadd.f32 0.0, %v2888
    %2890 = vmatprep.mubr.f32.mxu0 0.0
    %2891 = vmatmul.mubr.f32.gmra.mxu0 %v2741
    %v2892 = vpop.f32.mrf.mxu0
    %v2893 = vadd.f32 0.0, %v2892
    %v2894 = vpop.f32.mrf.mxu0
    %v2895 = vadd.f32 0.0, %v2894
    %2896 = vdwg.mxu0
    %v2897 = vadd.f32 %v2615, %v2810
    %v2898 = vadd.f32 %v2617, %v2812
    %v2899 = vadd.f32 %v2692, %v2887
    %v2900 = vadd.f32 %v2694, %v2889
    %v2901 = vadd.f32 %v2621, %v2816
    %v2902 = vadd.f32 %v2623, %v2818
    %v2903 = vadd.f32 %v2698, %v2893
    %v2904 = vadd.f32 %v2700, %v2895
    %2905 = vrot.lane.b32.xlu0 %v2304, 1
    %v2906 = vpop.permute.xlu0 %2905
    %2907 = vrot.lane.b32.xlu0 %v2308, 1
    %v2908 = vpop.permute.xlu0 %2907
    %2909 = vrot.lane.b32.xlu0 %v2305, 1
    %v2910 = vpop.permute.xlu0 %2909
    %2911 = vrot.lane.b32.xlu0 %v2309, 1
    %v2912 = vpop.permute.xlu0 %2911
    %2913 = vrot.lane.b32.xlu0 %v2306, 1
    %v2914 = vpop.permute.xlu0 %2913
    %2915 = vrot.lane.b32.xlu0 %v2310, 1
    %v2916 = vpop.permute.xlu0 %2915
    %2917 = vrot.lane.b32.xlu0 %v2307, 1
    %v2918 = vpop.permute.xlu0 %2917
    %2919 = vrot.lane.b32.xlu0 %v2311, 1
    %v2920 = vpop.permute.xlu0 %2919
    %v2921 = vsel %vm1053, %v2914, %v2918
    %v2922 = vsel %vm1053, %v2916, %v2920
    %v2923 = vsel %vm1053, %v2910, %v2914
    %v2924 = vsel %vm1053, %v2912, %v2916
    %v2925 = vsel %vm1053, %v2906, %v2910
    %v2926 = vsel %vm1053, %v2908, %v2912
    %v2927 = vsel %vm1053, %v2918, %v2906
    %v2928 = vsel %vm1053, %v2920, %v2908
    %v2929 = vmul.f32 %v2927, %v1064
    %v2930 = vmul.f32 %v2925, %v1068
    %v2931 = vmul.f32 %v2923, %v1072
    %v2932 = vmul.f32 %v2921, %v1076
    %v2933 = vmul.f32 %v2928, %v1064
    %v2934 = vmul.f32 %v2926, %v1068
    %v2935 = vmul.f32 %v2924, %v1072
    %v2936 = vmul.f32 %v2922, %v1076
    %s2937 = scalar_lea.vmem %s6, 48
    %v2938 = vld [vmem:[%s2937] sm:$0xff]
    %v2939 = vld [vmem:[%s2937 + $0x8] sm:$0xff]
    %v2941 = vsel %vm2381, %v2938, 0
    %v2944 = vsel %vm2381, %v2939, 0
    %2946 = vmatprep.subr.mxu0 0.0
    %2947 = vmatpush1.msra.mxu0 0.0
    %2948 = vmatprep.subr.mxu0 0.0
    %2949 = vmatpush1.msra.mxu0 0.0
    %2950 = vmatprep.subr.mxu0 0.0
    %2951 = vmatpush1.msra.mxu0 0.0
    %2952 = vmatprep.subr.mxu0 0.0
    %2953 = vmatpush1.msra.mxu0 0.0
    %2954 = vmatprep.subr.mxu0 0.0
    %2955 = vmatpush1.msra.mxu0 0.0
    %2956 = vmatprep.subr.mxu0 0.0
    %2957 = vmatpush1.msra.mxu0 0.0
    %2958 = vmatprep.subr.mxu0 0.0
    %2959 = vmatpush1.msra.mxu0 0.0
    %2960 = vmatprep.subr.mxu0 0.0
    %2961 = vmatpush1.msra.mxu0 0.0
    %2962 = vmatprep.subr.mxu0 0.0
    %2963 = vmatpush1.msra.mxu0 0.0
    %2964 = vmatprep.subr.mxu0 0.0
    %2965 = vmatpush1.msra.mxu0 0.0
    %2966 = vmatprep.subr.mxu0 0.0
    %2967 = vmatpush1.msra.mxu0 0.0
    %2968 = vmatprep.subr.mxu0 0.0
    %2969 = vmatpush1.msra.mxu0 0.0
    %2970 = vmatprep.subr.mxu0 0.0
    %2971 = vmatpush1.msra.mxu0 0.0
    %2972 = vmatprep.subr.mxu0 0.0
    %2973 = vmatpush1.msra.mxu0 0.0
    %2974 = vmatprep.subr.mxu0 %v2934
    %2975 = vmatpush1.msra.mxu0 %v2933
    %2976 = vmatprep.subr.mxu0 %v2930
    %2977 = vmatpush1.msra.mxu0 %v2929
    %2978 = vmatprep.subr.mxu0 0.0
    %2979 = vmatpush2.msra.mxu0 0.0
    %2980 = vmatprep.subr.mxu0 0.0
    %2981 = vmatpush2.msra.mxu0 0.0
    %2982 = vmatprep.subr.mxu0 0.0
    %2983 = vmatpush2.msra.mxu0 0.0
    %2984 = vmatprep.subr.mxu0 0.0
    %2985 = vmatpush2.msra.mxu0 0.0
    %2986 = vmatprep.subr.mxu0 0.0
    %2987 = vmatpush2.msra.mxu0 0.0
    %2988 = vmatprep.subr.mxu0 0.0
    %2989 = vmatpush2.msra.mxu0 0.0
    %2990 = vmatprep.subr.mxu0 0.0
    %2991 = vmatpush2.msra.mxu0 0.0
    %2992 = vmatprep.subr.mxu0 0.0
    %2993 = vmatpush2.msra.mxu0 0.0
    %2994 = vmatprep.subr.mxu0 0.0
    %2995 = vmatpush2.msra.mxu0 0.0
    %2996 = vmatprep.subr.mxu0 0.0
    %2997 = vmatpush2.msra.mxu0 0.0
    %2998 = vmatprep.subr.mxu0 0.0
    %2999 = vmatpush2.msra.mxu0 0.0
    %3000 = vmatprep.subr.mxu0 0.0
    %3001 = vmatpush2.msra.mxu0 0.0
    %3002 = vmatprep.subr.mxu0 0.0
    %3003 = vmatpush2.msra.mxu0 0.0
    %3004 = vmatprep.subr.mxu0 0.0
    %3005 = vmatpush2.msra.mxu0 0.0
    %3006 = vmatprep.subr.mxu0 0.0
    %3007 = vmatpush2.msra.mxu0 0.0
    %3008 = vmatprep.subr.mxu0 0.0
    %3009 = vmatpush2.msra.mxu0 0.0
    %3010 = vmatprep.mubr.f32.mxu0 0.0
    %3011 = vmatmul.mubr.f32.gmra.mxu0 %v2941
    %v3012 = vpop.f32.mrf.mxu0
    %v3013 = vadd.f32 0.0, %v3012
    %v3014 = vpop.f32.mrf.mxu0
    %v3015 = vadd.f32 0.0, %v3014
    %3016 = vmatprep.mubr.f32.mxu0 0.0
    %3017 = vmatmul.mubr.f32.gmra.mxu0 %v2944
    %v3018 = vpop.f32.mrf.mxu0
    %v3019 = vadd.f32 0.0, %v3018
    %v3020 = vpop.f32.mrf.mxu0
    %v3021 = vadd.f32 0.0, %v3020
    %3022 = vdwg.mxu0
    %3023 = vmatprep.subr.mxu0 0.0
    %3024 = vmatpush1.msra.mxu0 0.0
    %3025 = vmatprep.subr.mxu0 0.0
    %3026 = vmatpush1.msra.mxu0 0.0
    %3027 = vmatprep.subr.mxu0 0.0
    %3028 = vmatpush1.msra.mxu0 0.0
    %3029 = vmatprep.subr.mxu0 0.0
    %3030 = vmatpush1.msra.mxu0 0.0
    %3031 = vmatprep.subr.mxu0 0.0
    %3032 = vmatpush1.msra.mxu0 0.0
    %3033 = vmatprep.subr.mxu0 0.0
    %3034 = vmatpush1.msra.mxu0 0.0
    %3035 = vmatprep.subr.mxu0 0.0
    %3036 = vmatpush1.msra.mxu0 0.0
    %3037 = vmatprep.subr.mxu0 0.0
    %3038 = vmatpush1.msra.mxu0 0.0
    %3039 = vmatprep.subr.mxu0 0.0
    %3040 = vmatpush1.msra.mxu0 0.0
    %3041 = vmatprep.subr.mxu0 0.0
    %3042 = vmatpush1.msra.mxu0 0.0
    %3043 = vmatprep.subr.mxu0 0.0
    %3044 = vmatpush1.msra.mxu0 0.0
    %3045 = vmatprep.subr.mxu0 0.0
    %3046 = vmatpush1.msra.mxu0 0.0
    %3047 = vmatprep.subr.mxu0 0.0
    %3048 = vmatpush1.msra.mxu0 0.0
    %3049 = vmatprep.subr.mxu0 0.0
    %3050 = vmatpush1.msra.mxu0 0.0
    %3051 = vmatprep.subr.mxu0 %v2936
    %3052 = vmatpush1.msra.mxu0 %v2935
    %3053 = vmatprep.subr.mxu0 %v2932
    %3054 = vmatpush1.msra.mxu0 %v2931
    %3055 = vmatprep.subr.mxu0 0.0
    %3056 = vmatpush2.msra.mxu0 0.0
    %3057 = vmatprep.subr.mxu0 0.0
    %3058 = vmatpush2.msra.mxu0 0.0
    %3059 = vmatprep.subr.mxu0 0.0
    %3060 = vmatpush2.msra.mxu0 0.0
    %3061 = vmatprep.subr.mxu0 0.0
    %3062 = vmatpush2.msra.mxu0 0.0
    %3063 = vmatprep.subr.mxu0 0.0
    %3064 = vmatpush2.msra.mxu0 0.0
    %3065 = vmatprep.subr.mxu0 0.0
    %3066 = vmatpush2.msra.mxu0 0.0
    %3067 = vmatprep.subr.mxu0 0.0
    %3068 = vmatpush2.msra.mxu0 0.0
    %3069 = vmatprep.subr.mxu0 0.0
    %3070 = vmatpush2.msra.mxu0 0.0
    %3071 = vmatprep.subr.mxu0 0.0
    %3072 = vmatpush2.msra.mxu0 0.0
    %3073 = vmatprep.subr.mxu0 0.0
    %3074 = vmatpush2.msra.mxu0 0.0
    %3075 = vmatprep.subr.mxu0 0.0
    %3076 = vmatpush2.msra.mxu0 0.0
    %3077 = vmatprep.subr.mxu0 0.0
    %3078 = vmatpush2.msra.mxu0 0.0
    %3079 = vmatprep.subr.mxu0 0.0
    %3080 = vmatpush2.msra.mxu0 0.0
    %3081 = vmatprep.subr.mxu0 0.0
    %3082 = vmatpush2.msra.mxu0 0.0
    %3083 = vmatprep.subr.mxu0 0.0
    %3084 = vmatpush2.msra.mxu0 0.0
    %3085 = vmatprep.subr.mxu0 0.0
    %3086 = vmatpush2.msra.mxu0 0.0
    %3087 = vmatprep.mubr.f32.mxu0 0.0
    %3088 = vmatmul.mubr.f32.gmra.mxu0 %v2941
    %v3089 = vpop.f32.mrf.mxu0
    %v3090 = vadd.f32 0.0, %v3089
    %v3091 = vpop.f32.mrf.mxu0
    %v3092 = vadd.f32 0.0, %v3091
    %3093 = vmatprep.mubr.f32.mxu0 0.0
    %3094 = vmatmul.mubr.f32.gmra.mxu0 %v2944
    %v3095 = vpop.f32.mrf.mxu0
    %v3096 = vadd.f32 0.0, %v3095
    %v3097 = vpop.f32.mrf.mxu0
    %v3098 = vadd.f32 0.0, %v3097
    %3099 = vdwg.mxu0
    %v3100 = vadd.f32 %v2897, %v3013
    %v3101 = vadd.f32 %v2898, %v3015
    %v3102 = vadd.f32 %v2899, %v3090
    %v3103 = vadd.f32 %v2900, %v3092
    %v3104 = vadd.f32 %v2901, %v3019
    %v3105 = vadd.f32 %v2902, %v3021
    %v3106 = vadd.f32 %v2903, %v3096
    %v3107 = vadd.f32 %v2904, %v3098
    %s3108 = scalar_lea.vmem %s6, 64
    %v3109 = vld [vmem:[%s3108] sm:$0xff]
    %v3110 = vld [vmem:[%s3108 + $0x8] sm:$0xff]
    %v3112 = vsel %vm2381, %v3109, 0
    %v3115 = vsel %vm2381, %v3110, 0
    %3117 = vmatprep.subr.mxu0 0.0
    %3118 = vmatpush1.msra.mxu0 0.0
    %3119 = vmatprep.subr.mxu0 0.0
    %3120 = vmatpush1.msra.mxu0 0.0
    %3121 = vmatprep.subr.mxu0 0.0
    %3122 = vmatpush1.msra.mxu0 0.0
    %3123 = vmatprep.subr.mxu0 0.0
    %3124 = vmatpush1.msra.mxu0 0.0
    %3125 = vmatprep.subr.mxu0 0.0
    %3126 = vmatpush1.msra.mxu0 0.0
    %3127 = vmatprep.subr.mxu0 0.0
    %3128 = vmatpush1.msra.mxu0 0.0
    %3129 = vmatprep.subr.mxu0 0.0
    %3130 = vmatpush1.msra.mxu0 0.0
    %3131 = vmatprep.subr.mxu0 0.0
    %3132 = vmatpush1.msra.mxu0 0.0
    %3133 = vmatprep.subr.mxu0 0.0
    %3134 = vmatpush1.msra.mxu0 0.0
    %3135 = vmatprep.subr.mxu0 0.0
    %3136 = vmatpush1.msra.mxu0 0.0
    %3137 = vmatprep.subr.mxu0 0.0
    %3138 = vmatpush1.msra.mxu0 0.0
    %3139 = vmatprep.subr.mxu0 0.0
    %3140 = vmatpush1.msra.mxu0 0.0
    %3141 = vmatprep.subr.mxu0 0.0
    %3142 = vmatpush1.msra.mxu0 0.0
    %3143 = vmatprep.subr.mxu0 0.0
    %3144 = vmatpush1.msra.mxu0 0.0
    %3145 = vmatprep.subr.mxu0 %v2309
    %3146 = vmatpush1.msra.mxu0 %v2308
    %3147 = vmatprep.subr.mxu0 %v2305
    %3148 = vmatpush1.msra.mxu0 %v2304
    %3149 = vmatprep.subr.mxu0 0.0
    %3150 = vmatpush2.msra.mxu0 0.0
    %3151 = vmatprep.subr.mxu0 0.0
    %3152 = vmatpush2.msra.mxu0 0.0
    %3153 = vmatprep.subr.mxu0 0.0
    %3154 = vmatpush2.msra.mxu0 0.0
    %3155 = vmatprep.subr.mxu0 0.0
    %3156 = vmatpush2.msra.mxu0 0.0
    %3157 = vmatprep.subr.mxu0 0.0
    %3158 = vmatpush2.msra.mxu0 0.0
    %3159 = vmatprep.subr.mxu0 0.0
    %3160 = vmatpush2.msra.mxu0 0.0
    %3161 = vmatprep.subr.mxu0 0.0
    %3162 = vmatpush2.msra.mxu0 0.0
    %3163 = vmatprep.subr.mxu0 0.0
    %3164 = vmatpush2.msra.mxu0 0.0
    %3165 = vmatprep.subr.mxu0 0.0
    %3166 = vmatpush2.msra.mxu0 0.0
    %3167 = vmatprep.subr.mxu0 0.0
    %3168 = vmatpush2.msra.mxu0 0.0
    %3169 = vmatprep.subr.mxu0 0.0
    %3170 = vmatpush2.msra.mxu0 0.0
    %3171 = vmatprep.subr.mxu0 0.0
    %3172 = vmatpush2.msra.mxu0 0.0
    %3173 = vmatprep.subr.mxu0 0.0
    %3174 = vmatpush2.msra.mxu0 0.0
    %3175 = vmatprep.subr.mxu0 0.0
    %3176 = vmatpush2.msra.mxu0 0.0
    %3177 = vmatprep.subr.mxu0 0.0
    %3178 = vmatpush2.msra.mxu0 0.0
    %3179 = vmatprep.subr.mxu0 0.0
    %3180 = vmatpush2.msra.mxu0 0.0
    %3181 = vmatprep.mubr.f32.mxu0 0.0
    %3182 = vmatmul.mubr.f32.gmra.mxu0 %v3112
    %v3183 = vpop.f32.mrf.mxu0
    %v3184 = vadd.f32 0.0, %v3183
    %v3185 = vpop.f32.mrf.mxu0
    %v3186 = vadd.f32 0.0, %v3185
    %3187 = vmatprep.mubr.f32.mxu0 0.0
    %3188 = vmatmul.mubr.f32.gmra.mxu0 %v3115
    %v3189 = vpop.f32.mrf.mxu0
    %v3190 = vadd.f32 0.0, %v3189
    %v3191 = vpop.f32.mrf.mxu0
    %v3192 = vadd.f32 0.0, %v3191
    %3193 = vdwg.mxu0
    %3194 = vmatprep.subr.mxu0 0.0
    %3195 = vmatpush1.msra.mxu0 0.0
    %3196 = vmatprep.subr.mxu0 0.0
    %3197 = vmatpush1.msra.mxu0 0.0
    %3198 = vmatprep.subr.mxu0 0.0
    %3199 = vmatpush1.msra.mxu0 0.0
    %3200 = vmatprep.subr.mxu0 0.0
    %3201 = vmatpush1.msra.mxu0 0.0
    %3202 = vmatprep.subr.mxu0 0.0
    %3203 = vmatpush1.msra.mxu0 0.0
    %3204 = vmatprep.subr.mxu0 0.0
    %3205 = vmatpush1.msra.mxu0 0.0
    %3206 = vmatprep.subr.mxu0 0.0
    %3207 = vmatpush1.msra.mxu0 0.0
    %3208 = vmatprep.subr.mxu0 0.0
    %3209 = vmatpush1.msra.mxu0 0.0
    %3210 = vmatprep.subr.mxu0 0.0
    %3211 = vmatpush1.msra.mxu0 0.0
    %3212 = vmatprep.subr.mxu0 0.0
    %3213 = vmatpush1.msra.mxu0 0.0
    %3214 = vmatprep.subr.mxu0 0.0
    %3215 = vmatpush1.msra.mxu0 0.0
    %3216 = vmatprep.subr.mxu0 0.0
    %3217 = vmatpush1.msra.mxu0 0.0
    %3218 = vmatprep.subr.mxu0 0.0
    %3219 = vmatpush1.msra.mxu0 0.0
    %3220 = vmatprep.subr.mxu0 0.0
    %3221 = vmatpush1.msra.mxu0 0.0
    %3222 = vmatprep.subr.mxu0 %v2311
    %3223 = vmatpush1.msra.mxu0 %v2310
    %3224 = vmatprep.subr.mxu0 %v2307
    %3225 = vmatpush1.msra.mxu0 %v2306
    %3226 = vmatprep.subr.mxu0 0.0
    %3227 = vmatpush2.msra.mxu0 0.0
    %3228 = vmatprep.subr.mxu0 0.0
    %3229 = vmatpush2.msra.mxu0 0.0
    %3230 = vmatprep.subr.mxu0 0.0
    %3231 = vmatpush2.msra.mxu0 0.0
    %3232 = vmatprep.subr.mxu0 0.0
    %3233 = vmatpush2.msra.mxu0 0.0
    %3234 = vmatprep.subr.mxu0 0.0
    %3235 = vmatpush2.msra.mxu0 0.0
    %3236 = vmatprep.subr.mxu0 0.0
    %3237 = vmatpush2.msra.mxu0 0.0
    %3238 = vmatprep.subr.mxu0 0.0
    %3239 = vmatpush2.msra.mxu0 0.0
    %3240 = vmatprep.subr.mxu0 0.0
    %3241 = vmatpush2.msra.mxu0 0.0
    %3242 = vmatprep.subr.mxu0 0.0
    %3243 = vmatpush2.msra.mxu0 0.0
    %3244 = vmatprep.subr.mxu0 0.0
    %3245 = vmatpush2.msra.mxu0 0.0
    %3246 = vmatprep.subr.mxu0 0.0
    %3247 = vmatpush2.msra.mxu0 0.0
    %3248 = vmatprep.subr.mxu0 0.0
    %3249 = vmatpush2.msra.mxu0 0.0
    %3250 = vmatprep.subr.mxu0 0.0
    %3251 = vmatpush2.msra.mxu0 0.0
    %3252 = vmatprep.subr.mxu0 0.0
    %3253 = vmatpush2.msra.mxu0 0.0
    %3254 = vmatprep.subr.mxu0 0.0
    %3255 = vmatpush2.msra.mxu0 0.0
    %3256 = vmatprep.subr.mxu0 0.0
    %3257 = vmatpush2.msra.mxu0 0.0
    %3258 = vmatprep.mubr.f32.mxu0 0.0
    %3259 = vmatmul.mubr.f32.gmra.mxu0 %v3112
    %v3260 = vpop.f32.mrf.mxu0
    %v3261 = vadd.f32 0.0, %v3260
    %v3262 = vpop.f32.mrf.mxu0
    %v3263 = vadd.f32 0.0, %v3262
    %3264 = vmatprep.mubr.f32.mxu0 0.0
    %3265 = vmatmul.mubr.f32.gmra.mxu0 %v3115
    %v3266 = vpop.f32.mrf.mxu0
    %v3267 = vadd.f32 0.0, %v3266
    %v3268 = vpop.f32.mrf.mxu0
    %v3269 = vadd.f32 0.0, %v3268
    %3270 = vdwg.mxu0
    %v3271 = vadd.f32 %v3100, %v3184
    %v3272 = vadd.f32 %v3101, %v3186
    %v3273 = vadd.f32 %v3102, %v3261
    %v3274 = vadd.f32 %v3103, %v3263
    %v3275 = vadd.f32 %v3104, %v3190
    %v3276 = vadd.f32 %v3105, %v3192
    %v3277 = vadd.f32 %v3106, %v3267
    %v3278 = vadd.f32 %v3107, %v3269
    %3279 = vrot.lane.b32.xlu0 %v2304, 127
    %v3280 = vpop.permute.xlu0 %3279
    %3281 = vrot.lane.b32.xlu0 %v2308, 127
    %v3282 = vpop.permute.xlu0 %3281
    %3283 = vrot.lane.b32.xlu0 %v2305, 127
    %v3284 = vpop.permute.xlu0 %3283
    %3285 = vrot.lane.b32.xlu0 %v2309, 127
    %v3286 = vpop.permute.xlu0 %3285
    %3287 = vrot.lane.b32.xlu0 %v2306, 127
    %v3288 = vpop.permute.xlu0 %3287
    %3289 = vrot.lane.b32.xlu0 %v2310, 127
    %v3290 = vpop.permute.xlu0 %3289
    %3291 = vrot.lane.b32.xlu0 %v2307, 127
    %v3292 = vpop.permute.xlu0 %3291
    %3293 = vrot.lane.b32.xlu0 %v2311, 127
    %v3294 = vpop.permute.xlu0 %3293
    %v3295 = vsel %vm1435, %v3288, %v3292
    %v3296 = vsel %vm1435, %v3290, %v3294
    %v3297 = vsel %vm1435, %v3284, %v3288
    %v3298 = vsel %vm1435, %v3286, %v3290
    %v3299 = vsel %vm1435, %v3280, %v3284
    %v3300 = vsel %vm1435, %v3282, %v3286
    %v3301 = vsel %vm1435, %v3292, %v3280
    %v3302 = vsel %vm1435, %v3294, %v3282
    %v3303 = vmul.f32 %v3299, %v1446
    %v3304 = vmul.f32 %v3297, %v1450
    %v3305 = vmul.f32 %v3295, %v1454
    %v3306 = vmul.f32 %v3301, %v1458
    %v3307 = vmul.f32 %v3300, %v1446
    %v3308 = vmul.f32 %v3298, %v1450
    %v3309 = vmul.f32 %v3296, %v1454
    %v3310 = vmul.f32 %v3302, %v1458
    %s3311 = scalar_lea.vmem %s6, 80
    %v3312 = vld [vmem:[%s3311] sm:$0xff]
    %v3313 = vld [vmem:[%s3311 + $0x8] sm:$0xff]
    %v3315 = vsel %vm2381, %v3312, 0
    %v3318 = vsel %vm2381, %v3313, 0
    %3320 = vmatprep.subr.mxu0 0.0
    %3321 = vmatpush1.msra.mxu0 0.0
    %3322 = vmatprep.subr.mxu0 0.0
    %3323 = vmatpush1.msra.mxu0 0.0
    %3324 = vmatprep.subr.mxu0 0.0
    %3325 = vmatpush1.msra.mxu0 0.0
    %3326 = vmatprep.subr.mxu0 0.0
    %3327 = vmatpush1.msra.mxu0 0.0
    %3328 = vmatprep.subr.mxu0 0.0
    %3329 = vmatpush1.msra.mxu0 0.0
    %3330 = vmatprep.subr.mxu0 0.0
    %3331 = vmatpush1.msra.mxu0 0.0
    %3332 = vmatprep.subr.mxu0 0.0
    %3333 = vmatpush1.msra.mxu0 0.0
    %3334 = vmatprep.subr.mxu0 0.0
    %3335 = vmatpush1.msra.mxu0 0.0
    %3336 = vmatprep.subr.mxu0 0.0
    %3337 = vmatpush1.msra.mxu0 0.0
    %3338 = vmatprep.subr.mxu0 0.0
    %3339 = vmatpush1.msra.mxu0 0.0
    %3340 = vmatprep.subr.mxu0 0.0
    %3341 = vmatpush1.msra.mxu0 0.0
    %3342 = vmatprep.subr.mxu0 0.0
    %3343 = vmatpush1.msra.mxu0 0.0
    %3344 = vmatprep.subr.mxu0 0.0
    %3345 = vmatpush1.msra.mxu0 0.0
    %3346 = vmatprep.subr.mxu0 0.0
    %3347 = vmatpush1.msra.mxu0 0.0
    %3348 = vmatprep.subr.mxu0 %v3308
    %3349 = vmatpush1.msra.mxu0 %v3307
    %3350 = vmatprep.subr.mxu0 %v3304
    %3351 = vmatpush1.msra.mxu0 %v3303
    %3352 = vmatprep.subr.mxu0 0.0
    %3353 = vmatpush2.msra.mxu0 0.0
    %3354 = vmatprep.subr.mxu0 0.0
    %3355 = vmatpush2.msra.mxu0 0.0
    %3356 = vmatprep.subr.mxu0 0.0
    %3357 = vmatpush2.msra.mxu0 0.0
    %3358 = vmatprep.subr.mxu0 0.0
    %3359 = vmatpush2.msra.mxu0 0.0
    %3360 = vmatprep.subr.mxu0 0.0
    %3361 = vmatpush2.msra.mxu0 0.0
    %3362 = vmatprep.subr.mxu0 0.0
    %3363 = vmatpush2.msra.mxu0 0.0
    %3364 = vmatprep.subr.mxu0 0.0
    %3365 = vmatpush2.msra.mxu0 0.0
    %3366 = vmatprep.subr.mxu0 0.0
    %3367 = vmatpush2.msra.mxu0 0.0
    %3368 = vmatprep.subr.mxu0 0.0
    %3369 = vmatpush2.msra.mxu0 0.0
    %3370 = vmatprep.subr.mxu0 0.0
    %3371 = vmatpush2.msra.mxu0 0.0
    %3372 = vmatprep.subr.mxu0 0.0
    %3373 = vmatpush2.msra.mxu0 0.0
    %3374 = vmatprep.subr.mxu0 0.0
    %3375 = vmatpush2.msra.mxu0 0.0
    %3376 = vmatprep.subr.mxu0 0.0
    %3377 = vmatpush2.msra.mxu0 0.0
    %3378 = vmatprep.subr.mxu0 0.0
    %3379 = vmatpush2.msra.mxu0 0.0
    %3380 = vmatprep.subr.mxu0 0.0
    %3381 = vmatpush2.msra.mxu0 0.0
    %3382 = vmatprep.subr.mxu0 0.0
    %3383 = vmatpush2.msra.mxu0 0.0
    %3384 = vmatprep.mubr.f32.mxu0 0.0
    %3385 = vmatmul.mubr.f32.gmra.mxu0 %v3315
    %v3386 = vpop.f32.mrf.mxu0
    %v3387 = vadd.f32 0.0, %v3386
    %v3388 = vpop.f32.mrf.mxu0
    %v3389 = vadd.f32 0.0, %v3388
    %3390 = vmatprep.mubr.f32.mxu0 0.0
    %3391 = vmatmul.mubr.f32.gmra.mxu0 %v3318
    %v3392 = vpop.f32.mrf.mxu0
    %v3393 = vadd.f32 0.0, %v3392
    %v3394 = vpop.f32.mrf.mxu0
    %v3395 = vadd.f32 0.0, %v3394
    %3396 = vdwg.mxu0
    %3397 = vmatprep.subr.mxu0 0.0
    %3398 = vmatpush1.msra.mxu0 0.0
    %3399 = vmatprep.subr.mxu0 0.0
    %3400 = vmatpush1.msra.mxu0 0.0
    %3401 = vmatprep.subr.mxu0 0.0
    %3402 = vmatpush1.msra.mxu0 0.0
    %3403 = vmatprep.subr.mxu0 0.0
    %3404 = vmatpush1.msra.mxu0 0.0
    %3405 = vmatprep.subr.mxu0 0.0
    %3406 = vmatpush1.msra.mxu0 0.0
    %3407 = vmatprep.subr.mxu0 0.0
    %3408 = vmatpush1.msra.mxu0 0.0
    %3409 = vmatprep.subr.mxu0 0.0
    %3410 = vmatpush1.msra.mxu0 0.0
    %3411 = vmatprep.subr.mxu0 0.0
    %3412 = vmatpush1.msra.mxu0 0.0
    %3413 = vmatprep.subr.mxu0 0.0
    %3414 = vmatpush1.msra.mxu0 0.0
    %3415 = vmatprep.subr.mxu0 0.0
    %3416 = vmatpush1.msra.mxu0 0.0
    %3417 = vmatprep.subr.mxu0 0.0
    %3418 = vmatpush1.msra.mxu0 0.0
    %3419 = vmatprep.subr.mxu0 0.0
    %3420 = vmatpush1.msra.mxu0 0.0
    %3421 = vmatprep.subr.mxu0 0.0
    %3422 = vmatpush1.msra.mxu0 0.0
    %3423 = vmatprep.subr.mxu0 0.0
    %3424 = vmatpush1.msra.mxu0 0.0
    %3425 = vmatprep.subr.mxu0 %v3310
    %3426 = vmatpush1.msra.mxu0 %v3309
    %3427 = vmatprep.subr.mxu0 %v3306
    %3428 = vmatpush1.msra.mxu0 %v3305
    %3429 = vmatprep.subr.mxu0 0.0
    %3430 = vmatpush2.msra.mxu0 0.0
    %3431 = vmatprep.subr.mxu0 0.0
    %3432 = vmatpush2.msra.mxu0 0.0
    %3433 = vmatprep.subr.mxu0 0.0
    %3434 = vmatpush2.msra.mxu0 0.0
    %3435 = vmatprep.subr.mxu0 0.0
    %3436 = vmatpush2.msra.mxu0 0.0
    %3437 = vmatprep.subr.mxu0 0.0
    %3438 = vmatpush2.msra.mxu0 0.0
    %3439 = vmatprep.subr.mxu0 0.0
    %3440 = vmatpush2.msra.mxu0 0.0
    %3441 = vmatprep.subr.mxu0 0.0
    %3442 = vmatpush2.msra.mxu0 0.0
    %3443 = vmatprep.subr.mxu0 0.0
    %3444 = vmatpush2.msra.mxu0 0.0
    %3445 = vmatprep.subr.mxu0 0.0
    %3446 = vmatpush2.msra.mxu0 0.0
    %3447 = vmatprep.subr.mxu0 0.0
    %3448 = vmatpush2.msra.mxu0 0.0
    %3449 = vmatprep.subr.mxu0 0.0
    %3450 = vmatpush2.msra.mxu0 0.0
    %3451 = vmatprep.subr.mxu0 0.0
    %3452 = vmatpush2.msra.mxu0 0.0
    %3453 = vmatprep.subr.mxu0 0.0
    %3454 = vmatpush2.msra.mxu0 0.0
    %3455 = vmatprep.subr.mxu0 0.0
    %3456 = vmatpush2.msra.mxu0 0.0
    %3457 = vmatprep.subr.mxu0 0.0
    %3458 = vmatpush2.msra.mxu0 0.0
    %3459 = vmatprep.subr.mxu0 0.0
    %3460 = vmatpush2.msra.mxu0 0.0
    %3461 = vmatprep.mubr.f32.mxu0 0.0
    %3462 = vmatmul.mubr.f32.gmra.mxu0 %v3315
    %v3463 = vpop.f32.mrf.mxu0
    %v3464 = vadd.f32 0.0, %v3463
    %v3465 = vpop.f32.mrf.mxu0
    %v3466 = vadd.f32 0.0, %v3465
    %3467 = vmatprep.mubr.f32.mxu0 0.0
    %3468 = vmatmul.mubr.f32.gmra.mxu0 %v3318
    %v3469 = vpop.f32.mrf.mxu0
    %v3470 = vadd.f32 0.0, %v3469
    %v3471 = vpop.f32.mrf.mxu0
    %v3472 = vadd.f32 0.0, %v3471
    %3473 = vdwg.mxu0
    %v3474 = vadd.f32 %v3271, %v3387
    %v3475 = vadd.f32 %v3272, %v3389
    %v3476 = vadd.f32 %v3273, %v3464
    %v3477 = vadd.f32 %v3274, %v3466
    %v3478 = vadd.f32 %v3275, %v3393
    %v3479 = vadd.f32 %v3276, %v3395
    %v3480 = vadd.f32 %v3277, %v3470
    %v3481 = vadd.f32 %v3278, %v3472
    %3482 = vrot.lane.b32.xlu0 %v2304, 113
    %v3483 = vpop.permute.xlu0 %3482
    %3484 = vrot.lane.b32.xlu0 %v2308, 113
    %v3485 = vpop.permute.xlu0 %3484
    %3486 = vrot.lane.b32.xlu0 %v2305, 113
    %v3487 = vpop.permute.xlu0 %3486
    %3488 = vrot.lane.b32.xlu0 %v2309, 113
    %v3489 = vpop.permute.xlu0 %3488
    %3490 = vrot.lane.b32.xlu0 %v2306, 113
    %v3491 = vpop.permute.xlu0 %3490
    %3492 = vrot.lane.b32.xlu0 %v2310, 113
    %v3493 = vpop.permute.xlu0 %3492
    %3494 = vrot.lane.b32.xlu0 %v2307, 113
    %v3495 = vpop.permute.xlu0 %3494
    %3496 = vrot.lane.b32.xlu0 %v2311, 113
    %v3497 = vpop.permute.xlu0 %3496
    %v3498 = vsel %vm1646, %v3491, %v3495
    %v3499 = vsel %vm1646, %v3493, %v3497
    %v3500 = vsel %vm1646, %v3487, %v3491
    %v3501 = vsel %vm1646, %v3489, %v3493
    %v3502 = vsel %vm1646, %v3483, %v3487
    %v3503 = vsel %vm1646, %v3485, %v3489
    %v3504 = vsel %vm1646, %v3495, %v3483
    %v3505 = vsel %vm1646, %v3497, %v3485
    %v3506 = vmul.f32 %v3502, %v1657
    %v3507 = vmul.f32 %v3500, %v1661
    %v3508 = vmul.f32 %v3498, %v1665
    %v3509 = vmul.f32 %v3504, %v1669
    %v3510 = vmul.f32 %v3503, %v1657
    %v3511 = vmul.f32 %v3501, %v1661
    %v3512 = vmul.f32 %v3499, %v1665
    %v3513 = vmul.f32 %v3505, %v1669
    %s3514 = scalar_lea.vmem %s6, 96
    %v3515 = vld [vmem:[%s3514] sm:$0xff]
    %v3516 = vld [vmem:[%s3514 + $0x8] sm:$0xff]
    %v3518 = vsel %vm2381, %v3515, 0
    %v3521 = vsel %vm2381, %v3516, 0
    %3523 = vmatprep.subr.mxu0 0.0
    %3524 = vmatpush1.msra.mxu0 0.0
    %3525 = vmatprep.subr.mxu0 0.0
    %3526 = vmatpush1.msra.mxu0 0.0
    %3527 = vmatprep.subr.mxu0 0.0
    %3528 = vmatpush1.msra.mxu0 0.0
    %3529 = vmatprep.subr.mxu0 0.0
    %3530 = vmatpush1.msra.mxu0 0.0
    %3531 = vmatprep.subr.mxu0 0.0
    %3532 = vmatpush1.msra.mxu0 0.0
    %3533 = vmatprep.subr.mxu0 0.0
    %3534 = vmatpush1.msra.mxu0 0.0
    %3535 = vmatprep.subr.mxu0 0.0
    %3536 = vmatpush1.msra.mxu0 0.0
    %3537 = vmatprep.subr.mxu0 0.0
    %3538 = vmatpush1.msra.mxu0 0.0
    %3539 = vmatprep.subr.mxu0 0.0
    %3540 = vmatpush1.msra.mxu0 0.0
    %3541 = vmatprep.subr.mxu0 0.0
    %3542 = vmatpush1.msra.mxu0 0.0
    %3543 = vmatprep.subr.mxu0 0.0
    %3544 = vmatpush1.msra.mxu0 0.0
    %3545 = vmatprep.subr.mxu0 0.0
    %3546 = vmatpush1.msra.mxu0 0.0
    %3547 = vmatprep.subr.mxu0 0.0
    %3548 = vmatpush1.msra.mxu0 0.0
    %3549 = vmatprep.subr.mxu0 0.0
    %3550 = vmatpush1.msra.mxu0 0.0
    %3551 = vmatprep.subr.mxu0 %v3511
    %3552 = vmatpush1.msra.mxu0 %v3510
    %3553 = vmatprep.subr.mxu0 %v3507
    %3554 = vmatpush1.msra.mxu0 %v3506
    %3555 = vmatprep.subr.mxu0 0.0
    %3556 = vmatpush2.msra.mxu0 0.0
    %3557 = vmatprep.subr.mxu0 0.0
    %3558 = vmatpush2.msra.mxu0 0.0
    %3559 = vmatprep.subr.mxu0 0.0
    %3560 = vmatpush2.msra.mxu0 0.0
    %3561 = vmatprep.subr.mxu0 0.0
    %3562 = vmatpush2.msra.mxu0 0.0
    %3563 = vmatprep.subr.mxu0 0.0
    %3564 = vmatpush2.msra.mxu0 0.0
    %3565 = vmatprep.subr.mxu0 0.0
    %3566 = vmatpush2.msra.mxu0 0.0
    %3567 = vmatprep.subr.mxu0 0.0
    %3568 = vmatpush2.msra.mxu0 0.0
    %3569 = vmatprep.subr.mxu0 0.0
    %3570 = vmatpush2.msra.mxu0 0.0
    %3571 = vmatprep.subr.mxu0 0.0
    %3572 = vmatpush2.msra.mxu0 0.0
    %3573 = vmatprep.subr.mxu0 0.0
    %3574 = vmatpush2.msra.mxu0 0.0
    %3575 = vmatprep.subr.mxu0 0.0
    %3576 = vmatpush2.msra.mxu0 0.0
    %3577 = vmatprep.subr.mxu0 0.0
    %3578 = vmatpush2.msra.mxu0 0.0
    %3579 = vmatprep.subr.mxu0 0.0
    %3580 = vmatpush2.msra.mxu0 0.0
    %3581 = vmatprep.subr.mxu0 0.0
    %3582 = vmatpush2.msra.mxu0 0.0
    %3583 = vmatprep.subr.mxu0 0.0
    %3584 = vmatpush2.msra.mxu0 0.0
    %3585 = vmatprep.subr.mxu0 0.0
    %3586 = vmatpush2.msra.mxu0 0.0
    %3587 = vmatprep.mubr.f32.mxu0 0.0
    %3588 = vmatmul.mubr.f32.gmra.mxu0 %v3518
    %v3589 = vpop.f32.mrf.mxu0
    %v3590 = vadd.f32 0.0, %v3589
    %v3591 = vpop.f32.mrf.mxu0
    %v3592 = vadd.f32 0.0, %v3591
    %3593 = vmatprep.mubr.f32.mxu0 0.0
    %3594 = vmatmul.mubr.f32.gmra.mxu0 %v3521
    %v3595 = vpop.f32.mrf.mxu0
    %v3596 = vadd.f32 0.0, %v3595
    %v3597 = vpop.f32.mrf.mxu0
    %v3598 = vadd.f32 0.0, %v3597
    %3599 = vdwg.mxu0
    %3600 = vmatprep.subr.mxu0 0.0
    %3601 = vmatpush1.msra.mxu0 0.0
    %3602 = vmatprep.subr.mxu0 0.0
    %3603 = vmatpush1.msra.mxu0 0.0
    %3604 = vmatprep.subr.mxu0 0.0
    %3605 = vmatpush1.msra.mxu0 0.0
    %3606 = vmatprep.subr.mxu0 0.0
    %3607 = vmatpush1.msra.mxu0 0.0
    %3608 = vmatprep.subr.mxu0 0.0
    %3609 = vmatpush1.msra.mxu0 0.0
    %3610 = vmatprep.subr.mxu0 0.0
    %3611 = vmatpush1.msra.mxu0 0.0
    %3612 = vmatprep.subr.mxu0 0.0
    %3613 = vmatpush1.msra.mxu0 0.0
    %3614 = vmatprep.subr.mxu0 0.0
    %3615 = vmatpush1.msra.mxu0 0.0
    %3616 = vmatprep.subr.mxu0 0.0
    %3617 = vmatpush1.msra.mxu0 0.0
    %3618 = vmatprep.subr.mxu0 0.0
    %3619 = vmatpush1.msra.mxu0 0.0
    %3620 = vmatprep.subr.mxu0 0.0
    %3621 = vmatpush1.msra.mxu0 0.0
    %3622 = vmatprep.subr.mxu0 0.0
    %3623 = vmatpush1.msra.mxu0 0.0
    %3624 = vmatprep.subr.mxu0 0.0
    %3625 = vmatpush1.msra.mxu0 0.0
    %3626 = vmatprep.subr.mxu0 0.0
    %3627 = vmatpush1.msra.mxu0 0.0
    %3628 = vmatprep.subr.mxu0 %v3513
    %3629 = vmatpush1.msra.mxu0 %v3512
    %3630 = vmatprep.subr.mxu0 %v3509
    %3631 = vmatpush1.msra.mxu0 %v3508
    %3632 = vmatprep.subr.mxu0 0.0
    %3633 = vmatpush2.msra.mxu0 0.0
    %3634 = vmatprep.subr.mxu0 0.0
    %3635 = vmatpush2.msra.mxu0 0.0
    %3636 = vmatprep.subr.mxu0 0.0
    %3637 = vmatpush2.msra.mxu0 0.0
    %3638 = vmatprep.subr.mxu0 0.0
    %3639 = vmatpush2.msra.mxu0 0.0
    %3640 = vmatprep.subr.mxu0 0.0
    %3641 = vmatpush2.msra.mxu0 0.0
    %3642 = vmatprep.subr.mxu0 0.0
    %3643 = vmatpush2.msra.mxu0 0.0
    %3644 = vmatprep.subr.mxu0 0.0
    %3645 = vmatpush2.msra.mxu0 0.0
    %3646 = vmatprep.subr.mxu0 0.0
    %3647 = vmatpush2.msra.mxu0 0.0
    %3648 = vmatprep.subr.mxu0 0.0
    %3649 = vmatpush2.msra.mxu0 0.0
    %3650 = vmatprep.subr.mxu0 0.0
    %3651 = vmatpush2.msra.mxu0 0.0
    %3652 = vmatprep.subr.mxu0 0.0
    %3653 = vmatpush2.msra.mxu0 0.0
    %3654 = vmatprep.subr.mxu0 0.0
    %3655 = vmatpush2.msra.mxu0 0.0
    %3656 = vmatprep.subr.mxu0 0.0
    %3657 = vmatpush2.msra.mxu0 0.0
    %3658 = vmatprep.subr.mxu0 0.0
    %3659 = vmatpush2.msra.mxu0 0.0
    %3660 = vmatprep.subr.mxu0 0.0
    %3661 = vmatpush2.msra.mxu0 0.0
    %3662 = vmatprep.subr.mxu0 0.0
    %3663 = vmatpush2.msra.mxu0 0.0
    %3664 = vmatprep.mubr.f32.mxu0 0.0
    %3665 = vmatmul.mubr.f32.gmra.mxu0 %v3518
    %v3666 = vpop.f32.mrf.mxu0
    %v3667 = vadd.f32 0.0, %v3666
    %v3668 = vpop.f32.mrf.mxu0
    %v3669 = vadd.f32 0.0, %v3668
    %3670 = vmatprep.mubr.f32.mxu0 0.0
    %3671 = vmatmul.mubr.f32.gmra.mxu0 %v3521
    %v3672 = vpop.f32.mrf.mxu0
    %v3673 = vadd.f32 0.0, %v3672
    %v3674 = vpop.f32.mrf.mxu0
    %v3675 = vadd.f32 0.0, %v3674
    %3676 = vdwg.mxu0
    %v3677 = vadd.f32 %v3474, %v3590
    %v3678 = vadd.f32 %v3475, %v3592
    %v3679 = vadd.f32 %v3476, %v3667
    %v3680 = vadd.f32 %v3477, %v3669
    %v3681 = vadd.f32 %v3478, %v3596
    %v3682 = vadd.f32 %v3479, %v3598
    %v3683 = vadd.f32 %v3480, %v3673
    %v3684 = vadd.f32 %v3481, %v3675
    %3685 = vrot.lane.b32.xlu0 %v2304, 112
    %v3686 = vpop.permute.xlu0 %3685
    %3687 = vrot.lane.b32.xlu0 %v2308, 112
    %v3688 = vpop.permute.xlu0 %3687
    %3689 = vrot.lane.b32.xlu0 %v2305, 112
    %v3690 = vpop.permute.xlu0 %3689
    %3691 = vrot.lane.b32.xlu0 %v2309, 112
    %v3692 = vpop.permute.xlu0 %3691
    %3693 = vrot.lane.b32.xlu0 %v2306, 112
    %v3694 = vpop.permute.xlu0 %3693
    %3695 = vrot.lane.b32.xlu0 %v2310, 112
    %v3696 = vpop.permute.xlu0 %3695
    %3697 = vrot.lane.b32.xlu0 %v2307, 112
    %v3698 = vpop.permute.xlu0 %3697
    %3699 = vrot.lane.b32.xlu0 %v2311, 112
    %v3700 = vpop.permute.xlu0 %3699
    %v3701 = vsel %vm1857, %v3694, %v3698
    %v3702 = vsel %vm1857, %v3696, %v3700
    %v3703 = vsel %vm1857, %v3690, %v3694
    %v3704 = vsel %vm1857, %v3692, %v3696
    %v3705 = vsel %vm1857, %v3686, %v3690
    %v3706 = vsel %vm1857, %v3688, %v3692
    %v3707 = vsel %vm1857, %v3698, %v3686
    %v3708 = vsel %vm1857, %v3700, %v3688
    %v3709 = vmul.f32 %v3705, %v1868
    %v3710 = vmul.f32 %v3703, %v1872
    %v3711 = vmul.f32 %v3701, %v1876
    %v3712 = vmul.f32 %v3707, %v1880
    %v3713 = vmul.f32 %v3706, %v1868
    %v3714 = vmul.f32 %v3704, %v1872
    %v3715 = vmul.f32 %v3702, %v1876
    %v3716 = vmul.f32 %v3708, %v1880
    %s3717 = scalar_lea.vmem %s6, 112
    %v3718 = vld [vmem:[%s3717] sm:$0xff]
    %v3719 = vld [vmem:[%s3717 + $0x8] sm:$0xff]
    %v3721 = vsel %vm2381, %v3718, 0
    %v3724 = vsel %vm2381, %v3719, 0
    %3726 = vmatprep.subr.mxu0 0.0
    %3727 = vmatpush1.msra.mxu0 0.0
    %3728 = vmatprep.subr.mxu0 0.0
    %3729 = vmatpush1.msra.mxu0 0.0
    %3730 = vmatprep.subr.mxu0 0.0
    %3731 = vmatpush1.msra.mxu0 0.0
    %3732 = vmatprep.subr.mxu0 0.0
    %3733 = vmatpush1.msra.mxu0 0.0
    %3734 = vmatprep.subr.mxu0 0.0
    %3735 = vmatpush1.msra.mxu0 0.0
    %3736 = vmatprep.subr.mxu0 0.0
    %3737 = vmatpush1.msra.mxu0 0.0
    %3738 = vmatprep.subr.mxu0 0.0
    %3739 = vmatpush1.msra.mxu0 0.0
    %3740 = vmatprep.subr.mxu0 0.0
    %3741 = vmatpush1.msra.mxu0 0.0
    %3742 = vmatprep.subr.mxu0 0.0
    %3743 = vmatpush1.msra.mxu0 0.0
    %3744 = vmatprep.subr.mxu0 0.0
    %3745 = vmatpush1.msra.mxu0 0.0
    %3746 = vmatprep.subr.mxu0 0.0
    %3747 = vmatpush1.msra.mxu0 0.0
    %3748 = vmatprep.subr.mxu0 0.0
    %3749 = vmatpush1.msra.mxu0 0.0
    %3750 = vmatprep.subr.mxu0 0.0
    %3751 = vmatpush1.msra.mxu0 0.0
    %3752 = vmatprep.subr.mxu0 0.0
    %3753 = vmatpush1.msra.mxu0 0.0
    %3754 = vmatprep.subr.mxu0 %v3714
    %3755 = vmatpush1.msra.mxu0 %v3713
    %3756 = vmatprep.subr.mxu0 %v3710
    %3757 = vmatpush1.msra.mxu0 %v3709
    %3758 = vmatprep.subr.mxu0 0.0
    %3759 = vmatpush2.msra.mxu0 0.0
    %3760 = vmatprep.subr.mxu0 0.0
    %3761 = vmatpush2.msra.mxu0 0.0
    %3762 = vmatprep.subr.mxu0 0.0
    %3763 = vmatpush2.msra.mxu0 0.0
    %3764 = vmatprep.subr.mxu0 0.0
    %3765 = vmatpush2.msra.mxu0 0.0
    %3766 = vmatprep.subr.mxu0 0.0
    %3767 = vmatpush2.msra.mxu0 0.0
    %3768 = vmatprep.subr.mxu0 0.0
    %3769 = vmatpush2.msra.mxu0 0.0
    %3770 = vmatprep.subr.mxu0 0.0
    %3771 = vmatpush2.msra.mxu0 0.0
    %3772 = vmatprep.subr.mxu0 0.0
    %3773 = vmatpush2.msra.mxu0 0.0
    %3774 = vmatprep.subr.mxu0 0.0
    %3775 = vmatpush2.msra.mxu0 0.0
    %3776 = vmatprep.subr.mxu0 0.0
    %3777 = vmatpush2.msra.mxu0 0.0
    %3778 = vmatprep.subr.mxu0 0.0
    %3779 = vmatpush2.msra.mxu0 0.0
    %3780 = vmatprep.subr.mxu0 0.0
    %3781 = vmatpush2.msra.mxu0 0.0
    %3782 = vmatprep.subr.mxu0 0.0
    %3783 = vmatpush2.msra.mxu0 0.0
    %3784 = vmatprep.subr.mxu0 0.0
    %3785 = vmatpush2.msra.mxu0 0.0
    %3786 = vmatprep.subr.mxu0 0.0
    %3787 = vmatpush2.msra.mxu0 0.0
    %3788 = vmatprep.subr.mxu0 0.0
    %3789 = vmatpush2.msra.mxu0 0.0
    %3790 = vmatprep.mubr.f32.mxu0 0.0
    %3791 = vmatmul.mubr.f32.gmra.mxu0 %v3721
    %v3792 = vpop.f32.mrf.mxu0
    %v3793 = vadd.f32 0.0, %v3792
    %v3794 = vpop.f32.mrf.mxu0
    %v3795 = vadd.f32 0.0, %v3794
    %3796 = vmatprep.mubr.f32.mxu0 0.0
    %3797 = vmatmul.mubr.f32.gmra.mxu0 %v3724
    %v3798 = vpop.f32.mrf.mxu0
    %v3799 = vadd.f32 0.0, %v3798
    %v3800 = vpop.f32.mrf.mxu0
    %v3801 = vadd.f32 0.0, %v3800
    %3802 = vdwg.mxu0
    %3803 = vmatprep.subr.mxu0 0.0
    %3804 = vmatpush1.msra.mxu0 0.0
    %3805 = vmatprep.subr.mxu0 0.0
    %3806 = vmatpush1.msra.mxu0 0.0
    %3807 = vmatprep.subr.mxu0 0.0
    %3808 = vmatpush1.msra.mxu0 0.0
    %3809 = vmatprep.subr.mxu0 0.0
    %3810 = vmatpush1.msra.mxu0 0.0
    %3811 = vmatprep.subr.mxu0 0.0
    %3812 = vmatpush1.msra.mxu0 0.0
    %3813 = vmatprep.subr.mxu0 0.0
    %3814 = vmatpush1.msra.mxu0 0.0
    %3815 = vmatprep.subr.mxu0 0.0
    %3816 = vmatpush1.msra.mxu0 0.0
    %3817 = vmatprep.subr.mxu0 0.0
    %3818 = vmatpush1.msra.mxu0 0.0
    %3819 = vmatprep.subr.mxu0 0.0
    %3820 = vmatpush1.msra.mxu0 0.0
    %3821 = vmatprep.subr.mxu0 0.0
    %3822 = vmatpush1.msra.mxu0 0.0
    %3823 = vmatprep.subr.mxu0 0.0
    %3824 = vmatpush1.msra.mxu0 0.0
    %3825 = vmatprep.subr.mxu0 0.0
    %3826 = vmatpush1.msra.mxu0 0.0
    %3827 = vmatprep.subr.mxu0 0.0
    %3828 = vmatpush1.msra.mxu0 0.0
    %3829 = vmatprep.subr.mxu0 0.0
    %3830 = vmatpush1.msra.mxu0 0.0
    %3831 = vmatprep.subr.mxu0 %v3716
    %3832 = vmatpush1.msra.mxu0 %v3715
    %3833 = vmatprep.subr.mxu0 %v3712
    %3834 = vmatpush1.msra.mxu0 %v3711
    %3835 = vmatprep.subr.mxu0 0.0
    %3836 = vmatpush2.msra.mxu0 0.0
    %3837 = vmatprep.subr.mxu0 0.0
    %3838 = vmatpush2.msra.mxu0 0.0
    %3839 = vmatprep.subr.mxu0 0.0
    %3840 = vmatpush2.msra.mxu0 0.0
    %3841 = vmatprep.subr.mxu0 0.0
    %3842 = vmatpush2.msra.mxu0 0.0
    %3843 = vmatprep.subr.mxu0 0.0
    %3844 = vmatpush2.msra.mxu0 0.0
    %3845 = vmatprep.subr.mxu0 0.0
    %3846 = vmatpush2.msra.mxu0 0.0
    %3847 = vmatprep.subr.mxu0 0.0
    %3848 = vmatpush2.msra.mxu0 0.0
    %3849 = vmatprep.subr.mxu0 0.0
    %3850 = vmatpush2.msra.mxu0 0.0
    %3851 = vmatprep.subr.mxu0 0.0
    %3852 = vmatpush2.msra.mxu0 0.0
    %3853 = vmatprep.subr.mxu0 0.0
    %3854 = vmatpush2.msra.mxu0 0.0
    %3855 = vmatprep.subr.mxu0 0.0
    %3856 = vmatpush2.msra.mxu0 0.0
    %3857 = vmatprep.subr.mxu0 0.0
    %3858 = vmatpush2.msra.mxu0 0.0
    %3859 = vmatprep.subr.mxu0 0.0
    %3860 = vmatpush2.msra.mxu0 0.0
    %3861 = vmatprep.subr.mxu0 0.0
    %3862 = vmatpush2.msra.mxu0 0.0
    %3863 = vmatprep.subr.mxu0 0.0
    %3864 = vmatpush2.msra.mxu0 0.0
    %3865 = vmatprep.subr.mxu0 0.0
    %3866 = vmatpush2.msra.mxu0 0.0
    %3867 = vmatprep.mubr.f32.mxu0 0.0
    %3868 = vmatmul.mubr.f32.gmra.mxu0 %v3721
    %v3869 = vpop.f32.mrf.mxu0
    %v3870 = vadd.f32 0.0, %v3869
    %v3871 = vpop.f32.mrf.mxu0
    %v3872 = vadd.f32 0.0, %v3871
    %3873 = vmatprep.mubr.f32.mxu0 0.0
    %3874 = vmatmul.mubr.f32.gmra.mxu0 %v3724
    %v3875 = vpop.f32.mrf.mxu0
    %v3876 = vadd.f32 0.0, %v3875
    %v3877 = vpop.f32.mrf.mxu0
    %v3878 = vadd.f32 0.0, %v3877
    %3879 = vdwg.mxu0
    %v3880 = vadd.f32 %v3677, %v3793
    %v3881 = vadd.f32 %v3678, %v3795
    %v3882 = vadd.f32 %v3679, %v3870
    %v3883 = vadd.f32 %v3680, %v3872
    %v3884 = vadd.f32 %v3681, %v3799
    %v3885 = vadd.f32 %v3682, %v3801
    %v3886 = vadd.f32 %v3683, %v3876
    %v3887 = vadd.f32 %v3684, %v3878
    %3888 = vrot.lane.b32.xlu0 %v2304, 111
    %v3889 = vpop.permute.xlu0 %3888
    %3890 = vrot.lane.b32.xlu0 %v2308, 111
    %v3891 = vpop.permute.xlu0 %3890
    %3892 = vrot.lane.b32.xlu0 %v2305, 111
    %v3893 = vpop.permute.xlu0 %3892
    %3894 = vrot.lane.b32.xlu0 %v2309, 111
    %v3895 = vpop.permute.xlu0 %3894
    %3896 = vrot.lane.b32.xlu0 %v2306, 111
    %v3897 = vpop.permute.xlu0 %3896
    %3898 = vrot.lane.b32.xlu0 %v2310, 111
    %v3899 = vpop.permute.xlu0 %3898
    %3900 = vrot.lane.b32.xlu0 %v2307, 111
    %v3901 = vpop.permute.xlu0 %3900
    %3902 = vrot.lane.b32.xlu0 %v2311, 111
    %v3903 = vpop.permute.xlu0 %3902
    %v3904 = vsel %vm2068, %v3897, %v3901
    %v3905 = vsel %vm2068, %v3899, %v3903
    %v3906 = vsel %vm2068, %v3893, %v3897
    %v3907 = vsel %vm2068, %v3895, %v3899
    %v3908 = vsel %vm2068, %v3889, %v3893
    %v3909 = vsel %vm2068, %v3891, %v3895
    %v3910 = vsel %vm2068, %v3901, %v3889
    %v3911 = vsel %vm2068, %v3903, %v3891
    %v3912 = vmul.f32 %v3908, %v2079
    %v3913 = vmul.f32 %v3906, %v2083
    %v3914 = vmul.f32 %v3904, %v2087
    %v3915 = vmul.f32 %v3910, %v2091
    %v3916 = vmul.f32 %v3909, %v2079
    %v3917 = vmul.f32 %v3907, %v2083
    %v3918 = vmul.f32 %v3905, %v2087
    %v3919 = vmul.f32 %v3911, %v2091
    %s3920 = scalar_lea.vmem %s6, 128
    %v3921 = vld [vmem:[%s3920] sm:$0xff]
    %v3922 = vld [vmem:[%s3920 + $0x8] sm:$0xff]
    %v3924 = vsel %vm2381, %v3921, 0
    %v3927 = vsel %vm2381, %v3922, 0
    %3929 = vmatprep.subr.mxu0 0.0
    %3930 = vmatpush1.msra.mxu0 0.0
    %3931 = vmatprep.subr.mxu0 0.0
    %3932 = vmatpush1.msra.mxu0 0.0
    %3933 = vmatprep.subr.mxu0 0.0
    %3934 = vmatpush1.msra.mxu0 0.0
    %3935 = vmatprep.subr.mxu0 0.0
    %3936 = vmatpush1.msra.mxu0 0.0
    %3937 = vmatprep.subr.mxu0 0.0
    %3938 = vmatpush1.msra.mxu0 0.0
    %3939 = vmatprep.subr.mxu0 0.0
    %3940 = vmatpush1.msra.mxu0 0.0
    %3941 = vmatprep.subr.mxu0 0.0
    %3942 = vmatpush1.msra.mxu0 0.0
    %3943 = vmatprep.subr.mxu0 0.0
    %3944 = vmatpush1.msra.mxu0 0.0
    %3945 = vmatprep.subr.mxu0 0.0
    %3946 = vmatpush1.msra.mxu0 0.0
    %3947 = vmatprep.subr.mxu0 0.0
    %3948 = vmatpush1.msra.mxu0 0.0
    %3949 = vmatprep.subr.mxu0 0.0
    %3950 = vmatpush1.msra.mxu0 0.0
    %3951 = vmatprep.subr.mxu0 0.0
    %3952 = vmatpush1.msra.mxu0 0.0
    %3953 = vmatprep.subr.mxu0 0.0
    %3954 = vmatpush1.msra.mxu0 0.0
    %3955 = vmatprep.subr.mxu0 0.0
    %3956 = vmatpush1.msra.mxu0 0.0
    %3957 = vmatprep.subr.mxu0 %v3917
    %3958 = vmatpush1.msra.mxu0 %v3916
    %3959 = vmatprep.subr.mxu0 %v3913
    %3960 = vmatpush1.msra.mxu0 %v3912
    %3961 = vmatprep.subr.mxu0 0.0
    %3962 = vmatpush2.msra.mxu0 0.0
    %3963 = vmatprep.subr.mxu0 0.0
    %3964 = vmatpush2.msra.mxu0 0.0
    %3965 = vmatprep.subr.mxu0 0.0
    %3966 = vmatpush2.msra.mxu0 0.0
    %3967 = vmatprep.subr.mxu0 0.0
    %3968 = vmatpush2.msra.mxu0 0.0
    %3969 = vmatprep.subr.mxu0 0.0
    %3970 = vmatpush2.msra.mxu0 0.0
    %3971 = vmatprep.subr.mxu0 0.0
    %3972 = vmatpush2.msra.mxu0 0.0
    %3973 = vmatprep.subr.mxu0 0.0
    %3974 = vmatpush2.msra.mxu0 0.0
    %3975 = vmatprep.subr.mxu0 0.0
    %3976 = vmatpush2.msra.mxu0 0.0
    %3977 = vmatprep.subr.mxu0 0.0
    %3978 = vmatpush2.msra.mxu0 0.0
    %3979 = vmatprep.subr.mxu0 0.0
    %3980 = vmatpush2.msra.mxu0 0.0
    %3981 = vmatprep.subr.mxu0 0.0
    %3982 = vmatpush2.msra.mxu0 0.0
    %3983 = vmatprep.subr.mxu0 0.0
    %3984 = vmatpush2.msra.mxu0 0.0
    %3985 = vmatprep.subr.mxu0 0.0
    %3986 = vmatpush2.msra.mxu0 0.0
    %3987 = vmatprep.subr.mxu0 0.0
    %3988 = vmatpush2.msra.mxu0 0.0
    %3989 = vmatprep.subr.mxu0 0.0
    %3990 = vmatpush2.msra.mxu0 0.0
    %3991 = vmatprep.subr.mxu0 0.0
    %3992 = vmatpush2.msra.mxu0 0.0
    %3993 = vmatprep.mubr.f32.mxu0 0.0
    %3994 = vmatmul.mubr.f32.gmra.mxu0 %v3924
    %v3995 = vpop.f32.mrf.mxu0
    %v3996 = vadd.f32 0.0, %v3995
    %v3997 = vpop.f32.mrf.mxu0
    %v3998 = vadd.f32 0.0, %v3997
    %3999 = vmatprep.mubr.f32.mxu0 0.0
    %4000 = vmatmul.mubr.f32.gmra.mxu0 %v3927
    %v4001 = vpop.f32.mrf.mxu0
    %v4002 = vadd.f32 0.0, %v4001
    %v4003 = vpop.f32.mrf.mxu0
    %v4004 = vadd.f32 0.0, %v4003
    %4005 = vdwg.mxu0
    %4006 = vmatprep.subr.mxu0 0.0
    %4007 = vmatpush1.msra.mxu0 0.0
    %4008 = vmatprep.subr.mxu0 0.0
    %4009 = vmatpush1.msra.mxu0 0.0
    %4010 = vmatprep.subr.mxu0 0.0
    %4011 = vmatpush1.msra.mxu0 0.0
    %4012 = vmatprep.subr.mxu0 0.0
    %4013 = vmatpush1.msra.mxu0 0.0
    %4014 = vmatprep.subr.mxu0 0.0
    %4015 = vmatpush1.msra.mxu0 0.0
    %4016 = vmatprep.subr.mxu0 0.0
    %4017 = vmatpush1.msra.mxu0 0.0
    %4018 = vmatprep.subr.mxu0 0.0
    %4019 = vmatpush1.msra.mxu0 0.0
    %4020 = vmatprep.subr.mxu0 0.0
    %4021 = vmatpush1.msra.mxu0 0.0
    %4022 = vmatprep.subr.mxu0 0.0
    %4023 = vmatpush1.msra.mxu0 0.0
    %4024 = vmatprep.subr.mxu0 0.0
    %4025 = vmatpush1.msra.mxu0 0.0
    %4026 = vmatprep.subr.mxu0 0.0
    %4027 = vmatpush1.msra.mxu0 0.0
    %4028 = vmatprep.subr.mxu0 0.0
    %4029 = vmatpush1.msra.mxu0 0.0
    %4030 = vmatprep.subr.mxu0 0.0
    %4031 = vmatpush1.msra.mxu0 0.0
    %4032 = vmatprep.subr.mxu0 0.0
    %4033 = vmatpush1.msra.mxu0 0.0
    %4034 = vmatprep.subr.mxu0 %v3919
    %4035 = vmatpush1.msra.mxu0 %v3918
    %4036 = vmatprep.subr.mxu0 %v3915
    %4037 = vmatpush1.msra.mxu0 %v3914
    %4038 = vmatprep.subr.mxu0 0.0
    %4039 = vmatpush2.msra.mxu0 0.0
    %4040 = vmatprep.subr.mxu0 0.0
    %4041 = vmatpush2.msra.mxu0 0.0
    %4042 = vmatprep.subr.mxu0 0.0
    %4043 = vmatpush2.msra.mxu0 0.0
    %4044 = vmatprep.subr.mxu0 0.0
    %4045 = vmatpush2.msra.mxu0 0.0
    %4046 = vmatprep.subr.mxu0 0.0
    %4047 = vmatpush2.msra.mxu0 0.0
    %4048 = vmatprep.subr.mxu0 0.0
    %4049 = vmatpush2.msra.mxu0 0.0
    %4050 = vmatprep.subr.mxu0 0.0
    %4051 = vmatpush2.msra.mxu0 0.0
    %4052 = vmatprep.subr.mxu0 0.0
    %4053 = vmatpush2.msra.mxu0 0.0
    %4054 = vmatprep.subr.mxu0 0.0
    %4055 = vmatpush2.msra.mxu0 0.0
    %4056 = vmatprep.subr.mxu0 0.0
    %4057 = vmatpush2.msra.mxu0 0.0
    %4058 = vmatprep.subr.mxu0 0.0
    %4059 = vmatpush2.msra.mxu0 0.0
    %4060 = vmatprep.subr.mxu0 0.0
    %4061 = vmatpush2.msra.mxu0 0.0
    %4062 = vmatprep.subr.mxu0 0.0
    %4063 = vmatpush2.msra.mxu0 0.0
    %4064 = vmatprep.subr.mxu0 0.0
    %4065 = vmatpush2.msra.mxu0 0.0
    %4066 = vmatprep.subr.mxu0 0.0
    %4067 = vmatpush2.msra.mxu0 0.0
    %4068 = vmatprep.subr.mxu0 0.0
    %4069 = vmatpush2.msra.mxu0 0.0
    %4070 = vmatprep.mubr.f32.mxu0 0.0
    %4071 = vmatmul.mubr.f32.gmra.mxu0 %v3924
    %v4072 = vpop.f32.mrf.mxu0
    %v4073 = vadd.f32 0.0, %v4072
    %v4074 = vpop.f32.mrf.mxu0
    %v4075 = vadd.f32 0.0, %v4074
    %4076 = vmatprep.mubr.f32.mxu0 0.0
    %4077 = vmatmul.mubr.f32.gmra.mxu0 %v3927
    %v4078 = vpop.f32.mrf.mxu0
    %v4079 = vadd.f32 0.0, %v4078
    %v4080 = vpop.f32.mrf.mxu0
    %v4081 = vadd.f32 0.0, %v4080
    %4082 = vdwg.mxu0
    %v4083 = vadd.f32 %v3880, %v3996
    %v4084 = vadd.f32 %v3881, %v3998
    %v4085 = vadd.f32 %v3882, %v4073
    %v4086 = vadd.f32 %v3883, %v4075
    %v4087 = vadd.f32 %v3884, %v4002
    %v4088 = vadd.f32 %v3885, %v4004
    %v4089 = vadd.f32 %v3886, %v4079
    %v4090 = vadd.f32 %v3887, %v4081
    %4091 = vset.pattern.permute.xlu0 2
    %4092 = vperm.xlu0 %4091, %v58
    %v4093 = vpop.permute.xlu0 %4092
    %4095 = vset.pattern.permute.xlu0 2
    %4096 = vperm.xlu0 %4095, %v59
    %v4097 = vpop.permute.xlu0 %4096
    %v4099 = vmul.f32 %v4083, %v4093
    %v4100 = vmul.f32 %v4084, %v4093
    %v4101 = vmul.f32 %v4085, %v4093
    %v4102 = vmul.f32 %v4086, %v4093
    %v4103 = vmul.f32 %v4087, %v4097
    %v4104 = vmul.f32 %v4088, %v4097
    %v4105 = vmul.f32 %v4089, %v4097
    %v4106 = vmul.f32 %v4090, %v4097
    %4107 = vset.pattern.permute.xlu0 3
    %4108 = vperm.xlu0 %4107, %v58
    %v4109 = vpop.permute.xlu0 %4108
    %4111 = vset.pattern.permute.xlu0 3
    %4112 = vperm.xlu0 %4111, %v59
    %v4113 = vpop.permute.xlu0 %4112
    %v4115 = vadd.f32 %v4099, %v4109
    %v4116 = vadd.f32 %v4100, %v4109
    %v4117 = vadd.f32 %v4101, %v4109
    %v4118 = vadd.f32 %v4102, %v4109
    %v4119 = vadd.f32 %v4103, %v4113
    %v4120 = vadd.f32 %v4104, %v4113
    %v4121 = vadd.f32 %v4105, %v4113
    %v4122 = vadd.f32 %v4106, %v4113
    %v4123 = vmax.f32 %v4115, 0.0
    %v4124 = vmax.f32 %v4116, 0.0
    %v4125 = vmax.f32 %v4117, 0.0
    %v4126 = vmax.f32 %v4118, 0.0
    %v4127 = vmax.f32 %v4119, 0.0
    %v4128 = vmax.f32 %v4120, 0.0
    %v4129 = vmax.f32 %v4121, 0.0
    %v4130 = vmax.f32 %v4122, 0.0
    %4131 = vrot.lane.b32.xlu0 %v4123, 17
    %v4132 = vpop.permute.xlu0 %4131
    %4133 = vrot.lane.b32.xlu0 %v4127, 17
    %v4134 = vpop.permute.xlu0 %4133
    %4135 = vrot.lane.b32.xlu0 %v4124, 17
    %v4136 = vpop.permute.xlu0 %4135
    %4137 = vrot.lane.b32.xlu0 %v4128, 17
    %v4138 = vpop.permute.xlu0 %4137
    %4139 = vrot.lane.b32.xlu0 %v4125, 17
    %v4140 = vpop.permute.xlu0 %4139
    %4141 = vrot.lane.b32.xlu0 %v4129, 17
    %v4142 = vpop.permute.xlu0 %4141
    %4143 = vrot.lane.b32.xlu0 %v4126, 17
    %v4144 = vpop.permute.xlu0 %4143
    %4145 = vrot.lane.b32.xlu0 %v4130, 17
    %v4146 = vpop.permute.xlu0 %4145
    %v4147 = vsel %vm437, %v4140, %v4144
    %v4148 = vsel %vm437, %v4142, %v4146
    %v4149 = vsel %vm437, %v4136, %v4140
    %v4150 = vsel %vm437, %v4138, %v4142
    %v4151 = vsel %vm437, %v4132, %v4136
    %v4152 = vsel %vm437, %v4134, %v4138
    %v4153 = vsel %vm437, %v4144, %v4132
    %v4154 = vsel %vm437, %v4146, %v4134
    %v4155 = vmul.f32 %v4153, %v447
    %v4156 = vmul.f32 %v4151, %v451
    %v4157 = vmul.f32 %v4149, %v455
    %v4158 = vmul.f32 %v4147, %v459
    %v4159 = vmul.f32 %v4154, %v447
    %v4160 = vmul.f32 %v4152, %v451
    %v4161 = vmul.f32 %v4150, %v455
    %v4162 = vmul.f32 %v4148, %v459
    %v4163 = vld [vmem:[#allocation4] sm:$0x1]
    %4164 = vrot.lane.b32.xlu0 %v4123, 16
    %v4165 = vpop.permute.xlu0 %4164
    %4166 = vrot.lane.b32.xlu0 %v4127, 16
    %v4167 = vpop.permute.xlu0 %4166
    %4168 = vrot.lane.b32.xlu0 %v4124, 16
    %v4169 = vpop.permute.xlu0 %4168
    %4170 = vrot.lane.b32.xlu0 %v4128, 16
    %v4171 = vpop.permute.xlu0 %4170
    %4172 = vrot.lane.b32.xlu0 %v4125, 16
    %v4173 = vpop.permute.xlu0 %4172
    %4174 = vrot.lane.b32.xlu0 %v4129, 16
    %v4175 = vpop.permute.xlu0 %4174
    %4176 = vrot.lane.b32.xlu0 %v4126, 16
    %v4177 = vpop.permute.xlu0 %4176
    %4178 = vrot.lane.b32.xlu0 %v4130, 16
    %v4179 = vpop.permute.xlu0 %4178
    %v4180 = vsel %vm478, %v4173, %v4177
    %v4181 = vsel %vm478, %v4175, %v4179
    %v4182 = vsel %vm478, %v4169, %v4173
    %v4183 = vsel %vm478, %v4171, %v4175
    %v4184 = vsel %vm478, %v4165, %v4169
    %v4185 = vsel %vm478, %v4167, %v4171
    %v4186 = vsel %vm478, %v4177, %v4165
    %v4187 = vsel %vm478, %v4179, %v4167
    %v4188 = vmul.f32 %v4186, %v489
    %v4189 = vmul.f32 %v4184, %v493
    %v4190 = vmul.f32 %v4182, %v497
    %v4191 = vmul.f32 %v4180, %v501
    %v4192 = vmul.f32 %v4187, %v489
    %v4193 = vmul.f32 %v4185, %v493
    %v4194 = vmul.f32 %v4183, %v497
    %v4195 = vmul.f32 %v4181, %v501
    %s4196 = scalar_lea.vmem [#allocation4], 1
    %v4197 = vld [vmem:[%s4196] sm:$0x1]
    %v4199 = vsel %vm2381, %v4197, 0
    %4201 = vmatprep.subr.mxu0 0.0
    %4202 = vmatpush1.msra.mxu0 0.0
    %4203 = vmatprep.subr.mxu0 0.0
    %4204 = vmatpush1.msra.mxu0 0.0
    %4205 = vmatprep.subr.mxu0 0.0
    %4206 = vmatpush1.msra.mxu0 0.0
    %4207 = vmatprep.subr.mxu0 0.0
    %4208 = vmatpush1.msra.mxu0 0.0
    %4209 = vmatprep.subr.mxu0 0.0
    %4210 = vmatpush1.msra.mxu0 0.0
    %4211 = vmatprep.subr.mxu0 0.0
    %4212 = vmatpush1.msra.mxu0 0.0
    %4213 = vmatprep.subr.mxu0 0.0
    %4214 = vmatpush1.msra.mxu0 0.0
    %4215 = vmatprep.subr.mxu0 0.0
    %4216 = vmatpush1.msra.mxu0 0.0
    %4217 = vmatprep.subr.mxu0 0.0
    %4218 = vmatpush1.msra.mxu0 0.0
    %4219 = vmatprep.subr.mxu0 0.0
    %4220 = vmatpush1.msra.mxu0 0.0
    %4221 = vmatprep.subr.mxu0 0.0
    %4222 = vmatpush1.msra.mxu0 0.0
    %4223 = vmatprep.subr.mxu0 0.0
    %4224 = vmatpush1.msra.mxu0 0.0
    %4225 = vmatprep.subr.mxu0 0.0
    %4226 = vmatpush1.msra.mxu0 0.0
    %4227 = vmatprep.subr.mxu0 0.0
    %4228 = vmatpush1.msra.mxu0 0.0
    %4229 = vmatprep.subr.mxu0 %v4193
    %4230 = vmatpush1.msra.mxu0 %v4192
    %4231 = vmatprep.subr.mxu0 %v4189
    %4232 = vmatpush1.msra.mxu0 %v4188
    %4233 = vmatprep.subr.mxu0 0.0
    %4234 = vmatpush2.msra.mxu0 0.0
    %4235 = vmatprep.subr.mxu0 0.0
    %4236 = vmatpush2.msra.mxu0 0.0
    %4237 = vmatprep.subr.mxu0 0.0
    %4238 = vmatpush2.msra.mxu0 0.0
    %4239 = vmatprep.subr.mxu0 0.0
    %4240 = vmatpush2.msra.mxu0 0.0
    %4241 = vmatprep.subr.mxu0 0.0
    %4242 = vmatpush2.msra.mxu0 0.0
    %4243 = vmatprep.subr.mxu0 0.0
    %4244 = vmatpush2.msra.mxu0 0.0
    %4245 = vmatprep.subr.mxu0 0.0
    %4246 = vmatpush2.msra.mxu0 0.0
    %4247 = vmatprep.subr.mxu0 0.0
    %4248 = vmatpush2.msra.mxu0 0.0
    %4249 = vmatprep.subr.mxu0 0.0
    %4250 = vmatpush2.msra.mxu0 0.0
    %4251 = vmatprep.subr.mxu0 0.0
    %4252 = vmatpush2.msra.mxu0 0.0
    %4253 = vmatprep.subr.mxu0 0.0
    %4254 = vmatpush2.msra.mxu0 0.0
    %4255 = vmatprep.subr.mxu0 0.0
    %4256 = vmatpush2.msra.mxu0 0.0
    %4257 = vmatprep.subr.mxu0 0.0
    %4258 = vmatpush2.msra.mxu0 0.0
    %4259 = vmatprep.subr.mxu0 0.0
    %4260 = vmatpush2.msra.mxu0 0.0
    %4261 = vmatprep.subr.mxu0 0.0
    %4262 = vmatpush2.msra.mxu0 0.0
    %4263 = vmatprep.subr.mxu0 0.0
    %4264 = vmatpush2.msra.mxu0 0.0
    %4265 = vmatprep.mubr.f32.mxu0 0.0
    %4266 = vmatmul.mubr.f32.gmra.mxu0 %v4199
    %v4267 = vpop.f32.mrf.mxu0
    %v4268 = vadd.f32 0.0, %v4267
    %v4269 = vpop.f32.mrf.mxu0
    %v4270 = vadd.f32 0.0, %v4269
    %4271 = vdwg.mxu0
    %4272 = vmatprep.subr.mxu0 0.0
    %4273 = vmatpush1.msra.mxu0 0.0
    %4274 = vmatprep.subr.mxu0 0.0
    %4275 = vmatpush1.msra.mxu0 0.0
    %4276 = vmatprep.subr.mxu0 0.0
    %4277 = vmatpush1.msra.mxu0 0.0
    %4278 = vmatprep.subr.mxu0 0.0
    %4279 = vmatpush1.msra.mxu0 0.0
    %4280 = vmatprep.subr.mxu0 0.0
    %4281 = vmatpush1.msra.mxu0 0.0
    %4282 = vmatprep.subr.mxu0 0.0
    %4283 = vmatpush1.msra.mxu0 0.0
    %4284 = vmatprep.subr.mxu0 0.0
    %4285 = vmatpush1.msra.mxu0 0.0
    %4286 = vmatprep.subr.mxu0 0.0
    %4287 = vmatpush1.msra.mxu0 0.0
    %4288 = vmatprep.subr.mxu0 0.0
    %4289 = vmatpush1.msra.mxu0 0.0
    %4290 = vmatprep.subr.mxu0 0.0
    %4291 = vmatpush1.msra.mxu0 0.0
    %4292 = vmatprep.subr.mxu0 0.0
    %4293 = vmatpush1.msra.mxu0 0.0
    %4294 = vmatprep.subr.mxu0 0.0
    %4295 = vmatpush1.msra.mxu0 0.0
    %4296 = vmatprep.subr.mxu0 0.0
    %4297 = vmatpush1.msra.mxu0 0.0
    %4298 = vmatprep.subr.mxu0 0.0
    %4299 = vmatpush1.msra.mxu0 0.0
    %4300 = vmatprep.subr.mxu0 %v4195
    %4301 = vmatpush1.msra.mxu0 %v4194
    %4302 = vmatprep.subr.mxu0 %v4191
    %4303 = vmatpush1.msra.mxu0 %v4190
    %4304 = vmatprep.subr.mxu0 0.0
    %4305 = vmatpush2.msra.mxu0 0.0
    %4306 = vmatprep.subr.mxu0 0.0
    %4307 = vmatpush2.msra.mxu0 0.0
    %4308 = vmatprep.subr.mxu0 0.0
    %4309 = vmatpush2.msra.mxu0 0.0
    %4310 = vmatprep.subr.mxu0 0.0
    %4311 = vmatpush2.msra.mxu0 0.0
    %4312 = vmatprep.subr.mxu0 0.0
    %4313 = vmatpush2.msra.mxu0 0.0
    %4314 = vmatprep.subr.mxu0 0.0
    %4315 = vmatpush2.msra.mxu0 0.0
    %4316 = vmatprep.subr.mxu0 0.0
    %4317 = vmatpush2.msra.mxu0 0.0
    %4318 = vmatprep.subr.mxu0 0.0
    %4319 = vmatpush2.msra.mxu0 0.0
    %4320 = vmatprep.subr.mxu0 0.0
    %4321 = vmatpush2.msra.mxu0 0.0
    %4322 = vmatprep.subr.mxu0 0.0
    %4323 = vmatpush2.msra.mxu0 0.0
    %4324 = vmatprep.subr.mxu0 0.0
    %4325 = vmatpush2.msra.mxu0 0.0
    %4326 = vmatprep.subr.mxu0 0.0
    %4327 = vmatpush2.msra.mxu0 0.0
    %4328 = vmatprep.subr.mxu0 0.0
    %4329 = vmatpush2.msra.mxu0 0.0
    %4330 = vmatprep.subr.mxu0 0.0
    %4331 = vmatpush2.msra.mxu0 0.0
    %4332 = vmatprep.subr.mxu0 0.0
    %4333 = vmatpush2.msra.mxu0 0.0
    %4334 = vmatprep.subr.mxu0 0.0
    %4335 = vmatpush2.msra.mxu0 0.0
    %4336 = vmatprep.mubr.f32.mxu0 0.0
    %4337 = vmatmul.mubr.f32.gmra.mxu0 %v4199
    %v4338 = vpop.f32.mrf.mxu0
    %v4339 = vadd.f32 0.0, %v4338
    %v4340 = vpop.f32.mrf.mxu0
    %v4341 = vadd.f32 0.0, %v4340
    %4342 = vdwg.mxu0
    %v4344 = vsel %vm2381, %v4163, 0
    %4346 = vmatprep.subr.mxu0 0.0
    %4347 = vmatpush1.msra.mxu0 0.0
    %4348 = vmatprep.subr.mxu0 0.0
    %4349 = vmatpush1.msra.mxu0 0.0
    %4350 = vmatprep.subr.mxu0 0.0
    %4351 = vmatpush1.msra.mxu0 0.0
    %4352 = vmatprep.subr.mxu0 0.0
    %4353 = vmatpush1.msra.mxu0 0.0
    %4354 = vmatprep.subr.mxu0 0.0
    %4355 = vmatpush1.msra.mxu0 0.0
    %4356 = vmatprep.subr.mxu0 0.0
    %4357 = vmatpush1.msra.mxu0 0.0
    %4358 = vmatprep.subr.mxu0 0.0
    %4359 = vmatpush1.msra.mxu0 0.0
    %4360 = vmatprep.subr.mxu0 0.0
    %4361 = vmatpush1.msra.mxu0 0.0
    %4362 = vmatprep.subr.mxu0 0.0
    %4363 = vmatpush1.msra.mxu0 0.0
    %4364 = vmatprep.subr.mxu0 0.0
    %4365 = vmatpush1.msra.mxu0 0.0
    %4366 = vmatprep.subr.mxu0 0.0
    %4367 = vmatpush1.msra.mxu0 0.0
    %4368 = vmatprep.subr.mxu0 0.0
    %4369 = vmatpush1.msra.mxu0 0.0
    %4370 = vmatprep.subr.mxu0 0.0
    %4371 = vmatpush1.msra.mxu0 0.0
    %4372 = vmatprep.subr.mxu0 0.0
    %4373 = vmatpush1.msra.mxu0 0.0
    %4374 = vmatprep.subr.mxu0 %v4160
    %4375 = vmatpush1.msra.mxu0 %v4159
    %4376 = vmatprep.subr.mxu0 %v4156
    %4377 = vmatpush1.msra.mxu0 %v4155
    %4378 = vmatprep.subr.mxu0 0.0
    %4379 = vmatpush2.msra.mxu0 0.0
    %4380 = vmatprep.subr.mxu0 0.0
    %4381 = vmatpush2.msra.mxu0 0.0
    %4382 = vmatprep.subr.mxu0 0.0
    %4383 = vmatpush2.msra.mxu0 0.0
    %4384 = vmatprep.subr.mxu0 0.0
    %4385 = vmatpush2.msra.mxu0 0.0
    %4386 = vmatprep.subr.mxu0 0.0
    %4387 = vmatpush2.msra.mxu0 0.0
    %4388 = vmatprep.subr.mxu0 0.0
    %4389 = vmatpush2.msra.mxu0 0.0
    %4390 = vmatprep.subr.mxu0 0.0
    %4391 = vmatpush2.msra.mxu0 0.0
    %4392 = vmatprep.subr.mxu0 0.0
    %4393 = vmatpush2.msra.mxu0 0.0
    %4394 = vmatprep.subr.mxu0 0.0
    %4395 = vmatpush2.msra.mxu0 0.0
    %4396 = vmatprep.subr.mxu0 0.0
    %4397 = vmatpush2.msra.mxu0 0.0
    %4398 = vmatprep.subr.mxu0 0.0
    %4399 = vmatpush2.msra.mxu0 0.0
    %4400 = vmatprep.subr.mxu0 0.0
    %4401 = vmatpush2.msra.mxu0 0.0
    %4402 = vmatprep.subr.mxu0 0.0
    %4403 = vmatpush2.msra.mxu0 0.0
    %4404 = vmatprep.subr.mxu0 0.0
    %4405 = vmatpush2.msra.mxu0 0.0
    %4406 = vmatprep.subr.mxu0 0.0
    %4407 = vmatpush2.msra.mxu0 0.0
    %4408 = vmatprep.subr.mxu0 0.0
    %4409 = vmatpush2.msra.mxu0 0.0
    %4410 = vmatprep.mubr.f32.mxu0 0.0
    %4411 = vmatmul.mubr.f32.gmra.mxu0 %v4344
    %v4412 = vpop.f32.mrf.mxu0
    %v4413 = vadd.f32 %v4268, %v4412
    %v4414 = vpop.f32.mrf.mxu0
    %v4415 = vadd.f32 %v4270, %v4414
    %4416 = vdwg.mxu0
    %4417 = vmatprep.subr.mxu0 0.0
    %4418 = vmatpush1.msra.mxu0 0.0
    %4419 = vmatprep.subr.mxu0 0.0
    %4420 = vmatpush1.msra.mxu0 0.0
    %4421 = vmatprep.subr.mxu0 0.0
    %4422 = vmatpush1.msra.mxu0 0.0
    %4423 = vmatprep.subr.mxu0 0.0
    %4424 = vmatpush1.msra.mxu0 0.0
    %4425 = vmatprep.subr.mxu0 0.0
    %4426 = vmatpush1.msra.mxu0 0.0
    %4427 = vmatprep.subr.mxu0 0.0
    %4428 = vmatpush1.msra.mxu0 0.0
    %4429 = vmatprep.subr.mxu0 0.0
    %4430 = vmatpush1.msra.mxu0 0.0
    %4431 = vmatprep.subr.mxu0 0.0
    %4432 = vmatpush1.msra.mxu0 0.0
    %4433 = vmatprep.subr.mxu0 0.0
    %4434 = vmatpush1.msra.mxu0 0.0
    %4435 = vmatprep.subr.mxu0 0.0
    %4436 = vmatpush1.msra.mxu0 0.0
    %4437 = vmatprep.subr.mxu0 0.0
    %4438 = vmatpush1.msra.mxu0 0.0
    %4439 = vmatprep.subr.mxu0 0.0
    %4440 = vmatpush1.msra.mxu0 0.0
    %4441 = vmatprep.subr.mxu0 0.0
    %4442 = vmatpush1.msra.mxu0 0.0
    %4443 = vmatprep.subr.mxu0 0.0
    %4444 = vmatpush1.msra.mxu0 0.0
    %4445 = vmatprep.subr.mxu0 %v4162
    %4446 = vmatpush1.msra.mxu0 %v4161
    %4447 = vmatprep.subr.mxu0 %v4158
    %4448 = vmatpush1.msra.mxu0 %v4157
    %4449 = vmatprep.subr.mxu0 0.0
    %4450 = vmatpush2.msra.mxu0 0.0
    %4451 = vmatprep.subr.mxu0 0.0
    %4452 = vmatpush2.msra.mxu0 0.0
    %4453 = vmatprep.subr.mxu0 0.0
    %4454 = vmatpush2.msra.mxu0 0.0
    %4455 = vmatprep.subr.mxu0 0.0
    %4456 = vmatpush2.msra.mxu0 0.0
    %4457 = vmatprep.subr.mxu0 0.0
    %4458 = vmatpush2.msra.mxu0 0.0
    %4459 = vmatprep.subr.mxu0 0.0
    %4460 = vmatpush2.msra.mxu0 0.0
    %4461 = vmatprep.subr.mxu0 0.0
    %4462 = vmatpush2.msra.mxu0 0.0
    %4463 = vmatprep.subr.mxu0 0.0
    %4464 = vmatpush2.msra.mxu0 0.0
    %4465 = vmatprep.subr.mxu0 0.0
    %4466 = vmatpush2.msra.mxu0 0.0
    %4467 = vmatprep.subr.mxu0 0.0
    %4468 = vmatpush2.msra.mxu0 0.0
    %4469 = vmatprep.subr.mxu0 0.0
    %4470 = vmatpush2.msra.mxu0 0.0
    %4471 = vmatprep.subr.mxu0 0.0
    %4472 = vmatpush2.msra.mxu0 0.0
    %4473 = vmatprep.subr.mxu0 0.0
    %4474 = vmatpush2.msra.mxu0 0.0
    %4475 = vmatprep.subr.mxu0 0.0
    %4476 = vmatpush2.msra.mxu0 0.0
    %4477 = vmatprep.subr.mxu0 0.0
    %4478 = vmatpush2.msra.mxu0 0.0
    %4479 = vmatprep.subr.mxu0 0.0
    %4480 = vmatpush2.msra.mxu0 0.0
    %4481 = vmatprep.mubr.f32.mxu0 0.0
    %4482 = vmatmul.mubr.f32.gmra.mxu0 %v4344
    %v4483 = vpop.f32.mrf.mxu0
    %v4484 = vadd.f32 %v4339, %v4483
    %v4485 = vpop.f32.mrf.mxu0
    %v4486 = vadd.f32 %v4341, %v4485
    %4487 = vdwg.mxu0
    %4488 = vrot.lane.b32.xlu0 %v4123, 15
    %v4489 = vpop.permute.xlu0 %4488
    %4490 = vrot.lane.b32.xlu0 %v4127, 15
    %v4491 = vpop.permute.xlu0 %4490
    %4492 = vrot.lane.b32.xlu0 %v4124, 15
    %v4493 = vpop.permute.xlu0 %4492
    %4494 = vrot.lane.b32.xlu0 %v4128, 15
    %v4495 = vpop.permute.xlu0 %4494
    %4496 = vrot.lane.b32.xlu0 %v4125, 15
    %v4497 = vpop.permute.xlu0 %4496
    %4498 = vrot.lane.b32.xlu0 %v4129, 15
    %v4499 = vpop.permute.xlu0 %4498
    %4500 = vrot.lane.b32.xlu0 %v4126, 15
    %v4501 = vpop.permute.xlu0 %4500
    %4502 = vrot.lane.b32.xlu0 %v4130, 15
    %v4503 = vpop.permute.xlu0 %4502
    %v4504 = vsel %vm842, %v4497, %v4501
    %v4505 = vsel %vm842, %v4499, %v4503
    %v4506 = vsel %vm842, %v4493, %v4497
    %v4507 = vsel %vm842, %v4495, %v4499
    %v4508 = vsel %vm842, %v4489, %v4493
    %v4509 = vsel %vm842, %v4491, %v4495
    %v4510 = vsel %vm842, %v4501, %v4489
    %v4511 = vsel %vm842, %v4503, %v4491
    %v4512 = vmul.f32 %v4510, %v853
    %v4513 = vmul.f32 %v4508, %v857
    %v4514 = vmul.f32 %v4506, %v861
    %v4515 = vmul.f32 %v4504, %v865
    %v4516 = vmul.f32 %v4511, %v853
    %v4517 = vmul.f32 %v4509, %v857
    %v4518 = vmul.f32 %v4507, %v861
    %v4519 = vmul.f32 %v4505, %v865
    %s4520 = scalar_lea.vmem [#allocation4], 2
    %v4521 = vld [vmem:[%s4520] sm:$0x1]
    %v4523 = vsel %vm2381, %v4521, 0
    %4525 = vmatprep.subr.mxu0 0.0
    %4526 = vmatpush1.msra.mxu0 0.0
    %4527 = vmatprep.subr.mxu0 0.0
    %4528 = vmatpush1.msra.mxu0 0.0
    %4529 = vmatprep.subr.mxu0 0.0
    %4530 = vmatpush1.msra.mxu0 0.0
    %4531 = vmatprep.subr.mxu0 0.0
    %4532 = vmatpush1.msra.mxu0 0.0
    %4533 = vmatprep.subr.mxu0 0.0
    %4534 = vmatpush1.msra.mxu0 0.0
    %4535 = vmatprep.subr.mxu0 0.0
    %4536 = vmatpush1.msra.mxu0 0.0
    %4537 = vmatprep.subr.mxu0 0.0
    %4538 = vmatpush1.msra.mxu0 0.0
    %4539 = vmatprep.subr.mxu0 0.0
    %4540 = vmatpush1.msra.mxu0 0.0
    %4541 = vmatprep.subr.mxu0 0.0
    %4542 = vmatpush1.msra.mxu0 0.0
    %4543 = vmatprep.subr.mxu0 0.0
    %4544 = vmatpush1.msra.mxu0 0.0
    %4545 = vmatprep.subr.mxu0 0.0
    %4546 = vmatpush1.msra.mxu0 0.0
    %4547 = vmatprep.subr.mxu0 0.0
    %4548 = vmatpush1.msra.mxu0 0.0
    %4549 = vmatprep.subr.mxu0 0.0
    %4550 = vmatpush1.msra.mxu0 0.0
    %4551 = vmatprep.subr.mxu0 0.0
    %4552 = vmatpush1.msra.mxu0 0.0
    %4553 = vmatprep.subr.mxu0 %v4517
    %4554 = vmatpush1.msra.mxu0 %v4516
    %4555 = vmatprep.subr.mxu0 %v4513
    %4556 = vmatpush1.msra.mxu0 %v4512
    %4557 = vmatprep.subr.mxu0 0.0
    %4558 = vmatpush2.msra.mxu0 0.0
    %4559 = vmatprep.subr.mxu0 0.0
    %4560 = vmatpush2.msra.mxu0 0.0
    %4561 = vmatprep.subr.mxu0 0.0
    %4562 = vmatpush2.msra.mxu0 0.0
    %4563 = vmatprep.subr.mxu0 0.0
    %4564 = vmatpush2.msra.mxu0 0.0
    %4565 = vmatprep.subr.mxu0 0.0
    %4566 = vmatpush2.msra.mxu0 0.0
    %4567 = vmatprep.subr.mxu0 0.0
    %4568 = vmatpush2.msra.mxu0 0.0
    %4569 = vmatprep.subr.mxu0 0.0
    %4570 = vmatpush2.msra.mxu0 0.0
    %4571 = vmatprep.subr.mxu0 0.0
    %4572 = vmatpush2.msra.mxu0 0.0
    %4573 = vmatprep.subr.mxu0 0.0
    %4574 = vmatpush2.msra.mxu0 0.0
    %4575 = vmatprep.subr.mxu0 0.0
    %4576 = vmatpush2.msra.mxu0 0.0
    %4577 = vmatprep.subr.mxu0 0.0
    %4578 = vmatpush2.msra.mxu0 0.0
    %4579 = vmatprep.subr.mxu0 0.0
    %4580 = vmatpush2.msra.mxu0 0.0
    %4581 = vmatprep.subr.mxu0 0.0
    %4582 = vmatpush2.msra.mxu0 0.0
    %4583 = vmatprep.subr.mxu0 0.0
    %4584 = vmatpush2.msra.mxu0 0.0
    %4585 = vmatprep.subr.mxu0 0.0
    %4586 = vmatpush2.msra.mxu0 0.0
    %4587 = vmatprep.subr.mxu0 0.0
    %4588 = vmatpush2.msra.mxu0 0.0
    %4589 = vmatprep.mubr.f32.mxu0 0.0
    %4590 = vmatmul.mubr.f32.gmra.mxu0 %v4523
    %v4591 = vpop.f32.mrf.mxu0
    %v4592 = vadd.f32 0.0, %v4591
    %v4593 = vpop.f32.mrf.mxu0
    %v4594 = vadd.f32 0.0, %v4593
    %4595 = vdwg.mxu0
    %4596 = vmatprep.subr.mxu0 0.0
    %4597 = vmatpush1.msra.mxu0 0.0
    %4598 = vmatprep.subr.mxu0 0.0
    %4599 = vmatpush1.msra.mxu0 0.0
    %4600 = vmatprep.subr.mxu0 0.0
    %4601 = vmatpush1.msra.mxu0 0.0
    %4602 = vmatprep.subr.mxu0 0.0
    %4603 = vmatpush1.msra.mxu0 0.0
    %4604 = vmatprep.subr.mxu0 0.0
    %4605 = vmatpush1.msra.mxu0 0.0
    %4606 = vmatprep.subr.mxu0 0.0
    %4607 = vmatpush1.msra.mxu0 0.0
    %4608 = vmatprep.subr.mxu0 0.0
    %4609 = vmatpush1.msra.mxu0 0.0
    %4610 = vmatprep.subr.mxu0 0.0
    %4611 = vmatpush1.msra.mxu0 0.0
    %4612 = vmatprep.subr.mxu0 0.0
    %4613 = vmatpush1.msra.mxu0 0.0
    %4614 = vmatprep.subr.mxu0 0.0
    %4615 = vmatpush1.msra.mxu0 0.0
    %4616 = vmatprep.subr.mxu0 0.0
    %4617 = vmatpush1.msra.mxu0 0.0
    %4618 = vmatprep.subr.mxu0 0.0
    %4619 = vmatpush1.msra.mxu0 0.0
    %4620 = vmatprep.subr.mxu0 0.0
    %4621 = vmatpush1.msra.mxu0 0.0
    %4622 = vmatprep.subr.mxu0 0.0
    %4623 = vmatpush1.msra.mxu0 0.0
    %4624 = vmatprep.subr.mxu0 %v4519
    %4625 = vmatpush1.msra.mxu0 %v4518
    %4626 = vmatprep.subr.mxu0 %v4515
    %4627 = vmatpush1.msra.mxu0 %v4514
    %4628 = vmatprep.subr.mxu0 0.0
    %4629 = vmatpush2.msra.mxu0 0.0
    %4630 = vmatprep.subr.mxu0 0.0
    %4631 = vmatpush2.msra.mxu0 0.0
    %4632 = vmatprep.subr.mxu0 0.0
    %4633 = vmatpush2.msra.mxu0 0.0
    %4634 = vmatprep.subr.mxu0 0.0
    %4635 = vmatpush2.msra.mxu0 0.0
    %4636 = vmatprep.subr.mxu0 0.0
    %4637 = vmatpush2.msra.mxu0 0.0
    %4638 = vmatprep.subr.mxu0 0.0
    %4639 = vmatpush2.msra.mxu0 0.0
    %4640 = vmatprep.subr.mxu0 0.0
    %4641 = vmatpush2.msra.mxu0 0.0
    %4642 = vmatprep.subr.mxu0 0.0
    %4643 = vmatpush2.msra.mxu0 0.0
    %4644 = vmatprep.subr.mxu0 0.0
    %4645 = vmatpush2.msra.mxu0 0.0
    %4646 = vmatprep.subr.mxu0 0.0
    %4647 = vmatpush2.msra.mxu0 0.0
    %4648 = vmatprep.subr.mxu0 0.0
    %4649 = vmatpush2.msra.mxu0 0.0
    %4650 = vmatprep.subr.mxu0 0.0
    %4651 = vmatpush2.msra.mxu0 0.0
    %4652 = vmatprep.subr.mxu0 0.0
    %4653 = vmatpush2.msra.mxu0 0.0
    %4654 = vmatprep.subr.mxu0 0.0
    %4655 = vmatpush2.msra.mxu0 0.0
    %4656 = vmatprep.subr.mxu0 0.0
    %4657 = vmatpush2.msra.mxu0 0.0
    %4658 = vmatprep.subr.mxu0 0.0
    %4659 = vmatpush2.msra.mxu0 0.0
    %4660 = vmatprep.mubr.f32.mxu0 0.0
    %4661 = vmatmul.mubr.f32.gmra.mxu0 %v4523
    %v4662 = vpop.f32.mrf.mxu0
    %v4663 = vadd.f32 0.0, %v4662
    %v4664 = vpop.f32.mrf.mxu0
    %v4665 = vadd.f32 0.0, %v4664
    %4666 = vdwg.mxu0
    %v4667 = vadd.f32 %v4413, %v4592
    %v4668 = vadd.f32 %v4415, %v4594
    %v4669 = vadd.f32 %v4484, %v4663
    %v4670 = vadd.f32 %v4486, %v4665
    %4671 = vrot.lane.b32.xlu0 %v4123, 1
    %v4672 = vpop.permute.xlu0 %4671
    %4673 = vrot.lane.b32.xlu0 %v4127, 1
    %v4674 = vpop.permute.xlu0 %4673
    %4675 = vrot.lane.b32.xlu0 %v4124, 1
    %v4676 = vpop.permute.xlu0 %4675
    %4677 = vrot.lane.b32.xlu0 %v4128, 1
    %v4678 = vpop.permute.xlu0 %4677
    %4679 = vrot.lane.b32.xlu0 %v4125, 1
    %v4680 = vpop.permute.xlu0 %4679
    %4681 = vrot.lane.b32.xlu0 %v4129, 1
    %v4682 = vpop.permute.xlu0 %4681
    %4683 = vrot.lane.b32.xlu0 %v4126, 1
    %v4684 = vpop.permute.xlu0 %4683
    %4685 = vrot.lane.b32.xlu0 %v4130, 1
    %v4686 = vpop.permute.xlu0 %4685
    %v4687 = vsel %vm1053, %v4680, %v4684
    %v4688 = vsel %vm1053, %v4682, %v4686
    %v4689 = vsel %vm1053, %v4676, %v4680
    %v4690 = vsel %vm1053, %v4678, %v4682
    %v4691 = vsel %vm1053, %v4672, %v4676
    %v4692 = vsel %vm1053, %v4674, %v4678
    %v4693 = vsel %vm1053, %v4684, %v4672
    %v4694 = vsel %vm1053, %v4686, %v4674
    %v4695 = vmul.f32 %v4693, %v1064
    %v4696 = vmul.f32 %v4691, %v1068
    %v4697 = vmul.f32 %v4689, %v1072
    %v4698 = vmul.f32 %v4687, %v1076
    %v4699 = vmul.f32 %v4694, %v1064
    %v4700 = vmul.f32 %v4692, %v1068
    %v4701 = vmul.f32 %v4690, %v1072
    %v4702 = vmul.f32 %v4688, %v1076
    %s4703 = scalar_lea.vmem [#allocation4], 3
    %v4704 = vld [vmem:[%s4703] sm:$0x1]
    %v4706 = vsel %vm2381, %v4704, 0
    %4708 = vmatprep.subr.mxu0 0.0
    %4709 = vmatpush1.msra.mxu0 0.0
    %4710 = vmatprep.subr.mxu0 0.0
    %4711 = vmatpush1.msra.mxu0 0.0
    %4712 = vmatprep.subr.mxu0 0.0
    %4713 = vmatpush1.msra.mxu0 0.0
    %4714 = vmatprep.subr.mxu0 0.0
    %4715 = vmatpush1.msra.mxu0 0.0
    %4716 = vmatprep.subr.mxu0 0.0
    %4717 = vmatpush1.msra.mxu0 0.0
    %4718 = vmatprep.subr.mxu0 0.0
    %4719 = vmatpush1.msra.mxu0 0.0
    %4720 = vmatprep.subr.mxu0 0.0
    %4721 = vmatpush1.msra.mxu0 0.0
    %4722 = vmatprep.subr.mxu0 0.0
    %4723 = vmatpush1.msra.mxu0 0.0
    %4724 = vmatprep.subr.mxu0 0.0
    %4725 = vmatpush1.msra.mxu0 0.0
    %4726 = vmatprep.subr.mxu0 0.0
    %4727 = vmatpush1.msra.mxu0 0.0
    %4728 = vmatprep.subr.mxu0 0.0
    %4729 = vmatpush1.msra.mxu0 0.0
    %4730 = vmatprep.subr.mxu0 0.0
    %4731 = vmatpush1.msra.mxu0 0.0
    %4732 = vmatprep.subr.mxu0 0.0
    %4733 = vmatpush1.msra.mxu0 0.0
    %4734 = vmatprep.subr.mxu0 0.0
    %4735 = vmatpush1.msra.mxu0 0.0
    %4736 = vmatprep.subr.mxu0 %v4700
    %4737 = vmatpush1.msra.mxu0 %v4699
    %4738 = vmatprep.subr.mxu0 %v4696
    %4739 = vmatpush1.msra.mxu0 %v4695
    %4740 = vmatprep.subr.mxu0 0.0
    %4741 = vmatpush2.msra.mxu0 0.0
    %4742 = vmatprep.subr.mxu0 0.0
    %4743 = vmatpush2.msra.mxu0 0.0
    %4744 = vmatprep.subr.mxu0 0.0
    %4745 = vmatpush2.msra.mxu0 0.0
    %4746 = vmatprep.subr.mxu0 0.0
    %4747 = vmatpush2.msra.mxu0 0.0
    %4748 = vmatprep.subr.mxu0 0.0
    %4749 = vmatpush2.msra.mxu0 0.0
    %4750 = vmatprep.subr.mxu0 0.0
    %4751 = vmatpush2.msra.mxu0 0.0
    %4752 = vmatprep.subr.mxu0 0.0
    %4753 = vmatpush2.msra.mxu0 0.0
    %4754 = vmatprep.subr.mxu0 0.0
    %4755 = vmatpush2.msra.mxu0 0.0
    %4756 = vmatprep.subr.mxu0 0.0
    %4757 = vmatpush2.msra.mxu0 0.0
    %4758 = vmatprep.subr.mxu0 0.0
    %4759 = vmatpush2.msra.mxu0 0.0
    %4760 = vmatprep.subr.mxu0 0.0
    %4761 = vmatpush2.msra.mxu0 0.0
    %4762 = vmatprep.subr.mxu0 0.0
    %4763 = vmatpush2.msra.mxu0 0.0
    %4764 = vmatprep.subr.mxu0 0.0
    %4765 = vmatpush2.msra.mxu0 0.0
    %4766 = vmatprep.subr.mxu0 0.0
    %4767 = vmatpush2.msra.mxu0 0.0
    %4768 = vmatprep.subr.mxu0 0.0
    %4769 = vmatpush2.msra.mxu0 0.0
    %4770 = vmatprep.subr.mxu0 0.0
    %4771 = vmatpush2.msra.mxu0 0.0
    %4772 = vmatprep.mubr.f32.mxu0 0.0
    %4773 = vmatmul.mubr.f32.gmra.mxu0 %v4706
    %v4774 = vpop.f32.mrf.mxu0
    %v4775 = vadd.f32 0.0, %v4774
    %v4776 = vpop.f32.mrf.mxu0
    %v4777 = vadd.f32 0.0, %v4776
    %4778 = vdwg.mxu0
    %4779 = vmatprep.subr.mxu0 0.0
    %4780 = vmatpush1.msra.mxu0 0.0
    %4781 = vmatprep.subr.mxu0 0.0
    %4782 = vmatpush1.msra.mxu0 0.0
    %4783 = vmatprep.subr.mxu0 0.0
    %4784 = vmatpush1.msra.mxu0 0.0
    %4785 = vmatprep.subr.mxu0 0.0
    %4786 = vmatpush1.msra.mxu0 0.0
    %4787 = vmatprep.subr.mxu0 0.0
    %4788 = vmatpush1.msra.mxu0 0.0
    %4789 = vmatprep.subr.mxu0 0.0
    %4790 = vmatpush1.msra.mxu0 0.0
    %4791 = vmatprep.subr.mxu0 0.0
    %4792 = vmatpush1.msra.mxu0 0.0
    %4793 = vmatprep.subr.mxu0 0.0
    %4794 = vmatpush1.msra.mxu0 0.0
    %4795 = vmatprep.subr.mxu0 0.0
    %4796 = vmatpush1.msra.mxu0 0.0
    %4797 = vmatprep.subr.mxu0 0.0
    %4798 = vmatpush1.msra.mxu0 0.0
    %4799 = vmatprep.subr.mxu0 0.0
    %4800 = vmatpush1.msra.mxu0 0.0
    %4801 = vmatprep.subr.mxu0 0.0
    %4802 = vmatpush1.msra.mxu0 0.0
    %4803 = vmatprep.subr.mxu0 0.0
    %4804 = vmatpush1.msra.mxu0 0.0
    %4805 = vmatprep.subr.mxu0 0.0
    %4806 = vmatpush1.msra.mxu0 0.0
    %4807 = vmatprep.subr.mxu0 %v4702
    %4808 = vmatpush1.msra.mxu0 %v4701
    %4809 = vmatprep.subr.mxu0 %v4698
    %4810 = vmatpush1.msra.mxu0 %v4697
    %4811 = vmatprep.subr.mxu0 0.0
    %4812 = vmatpush2.msra.mxu0 0.0
    %4813 = vmatprep.subr.mxu0 0.0
    %4814 = vmatpush2.msra.mxu0 0.0
    %4815 = vmatprep.subr.mxu0 0.0
    %4816 = vmatpush2.msra.mxu0 0.0
    %4817 = vmatprep.subr.mxu0 0.0
    %4818 = vmatpush2.msra.mxu0 0.0
    %4819 = vmatprep.subr.mxu0 0.0
    %4820 = vmatpush2.msra.mxu0 0.0
    %4821 = vmatprep.subr.mxu0 0.0
    %4822 = vmatpush2.msra.mxu0 0.0
    %4823 = vmatprep.subr.mxu0 0.0
    %4824 = vmatpush2.msra.mxu0 0.0
    %4825 = vmatprep.subr.mxu0 0.0
    %4826 = vmatpush2.msra.mxu0 0.0
    %4827 = vmatprep.subr.mxu0 0.0
    %4828 = vmatpush2.msra.mxu0 0.0
    %4829 = vmatprep.subr.mxu0 0.0
    %4830 = vmatpush2.msra.mxu0 0.0
    %4831 = vmatprep.subr.mxu0 0.0
    %4832 = vmatpush2.msra.mxu0 0.0
    %4833 = vmatprep.subr.mxu0 0.0
    %4834 = vmatpush2.msra.mxu0 0.0
    %4835 = vmatprep.subr.mxu0 0.0
    %4836 = vmatpush2.msra.mxu0 0.0
    %4837 = vmatprep.subr.mxu0 0.0
    %4838 = vmatpush2.msra.mxu0 0.0
    %4839 = vmatprep.subr.mxu0 0.0
    %4840 = vmatpush2.msra.mxu0 0.0
    %4841 = vmatprep.subr.mxu0 0.0
    %4842 = vmatpush2.msra.mxu0 0.0
    %4843 = vmatprep.mubr.f32.mxu0 0.0
    %4844 = vmatmul.mubr.f32.gmra.mxu0 %v4706
    %v4845 = vpop.f32.mrf.mxu0
    %v4846 = vadd.f32 0.0, %v4845
    %v4847 = vpop.f32.mrf.mxu0
    %v4848 = vadd.f32 0.0, %v4847
    %4849 = vdwg.mxu0
    %v4850 = vadd.f32 %v4667, %v4775
    %v4851 = vadd.f32 %v4668, %v4777
    %v4852 = vadd.f32 %v4669, %v4846
    %v4853 = vadd.f32 %v4670, %v4848
    %s4854 = scalar_lea.vmem [#allocation4], 4
    %v4855 = vld [vmem:[%s4854] sm:$0x1]
    %v4857 = vsel %vm2381, %v4855, 0
    %4859 = vmatprep.subr.mxu0 0.0
    %4860 = vmatpush1.msra.mxu0 0.0
    %4861 = vmatprep.subr.mxu0 0.0
    %4862 = vmatpush1.msra.mxu0 0.0
    %4863 = vmatprep.subr.mxu0 0.0
    %4864 = vmatpush1.msra.mxu0 0.0
    %4865 = vmatprep.subr.mxu0 0.0
    %4866 = vmatpush1.msra.mxu0 0.0
    %4867 = vmatprep.subr.mxu0 0.0
    %4868 = vmatpush1.msra.mxu0 0.0
    %4869 = vmatprep.subr.mxu0 0.0
    %4870 = vmatpush1.msra.mxu0 0.0
    %4871 = vmatprep.subr.mxu0 0.0
    %4872 = vmatpush1.msra.mxu0 0.0
    %4873 = vmatprep.subr.mxu0 0.0
    %4874 = vmatpush1.msra.mxu0 0.0
    %4875 = vmatprep.subr.mxu0 0.0
    %4876 = vmatpush1.msra.mxu0 0.0
    %4877 = vmatprep.subr.mxu0 0.0
    %4878 = vmatpush1.msra.mxu0 0.0
    %4879 = vmatprep.subr.mxu0 0.0
    %4880 = vmatpush1.msra.mxu0 0.0
    %4881 = vmatprep.subr.mxu0 0.0
    %4882 = vmatpush1.msra.mxu0 0.0
    %4883 = vmatprep.subr.mxu0 0.0
    %4884 = vmatpush1.msra.mxu0 0.0
    %4885 = vmatprep.subr.mxu0 0.0
    %4886 = vmatpush1.msra.mxu0 0.0
    %4887 = vmatprep.subr.mxu0 %v4128
    %4888 = vmatpush1.msra.mxu0 %v4127
    %4889 = vmatprep.subr.mxu0 %v4124
    %4890 = vmatpush1.msra.mxu0 %v4123
    %4891 = vmatprep.subr.mxu0 0.0
    %4892 = vmatpush2.msra.mxu0 0.0
    %4893 = vmatprep.subr.mxu0 0.0
    %4894 = vmatpush2.msra.mxu0 0.0
    %4895 = vmatprep.subr.mxu0 0.0
    %4896 = vmatpush2.msra.mxu0 0.0
    %4897 = vmatprep.subr.mxu0 0.0
    %4898 = vmatpush2.msra.mxu0 0.0
    %4899 = vmatprep.subr.mxu0 0.0
    %4900 = vmatpush2.msra.mxu0 0.0
    %4901 = vmatprep.subr.mxu0 0.0
    %4902 = vmatpush2.msra.mxu0 0.0
    %4903 = vmatprep.subr.mxu0 0.0
    %4904 = vmatpush2.msra.mxu0 0.0
    %4905 = vmatprep.subr.mxu0 0.0
    %4906 = vmatpush2.msra.mxu0 0.0
    %4907 = vmatprep.subr.mxu0 0.0
    %4908 = vmatpush2.msra.mxu0 0.0
    %4909 = vmatprep.subr.mxu0 0.0
    %4910 = vmatpush2.msra.mxu0 0.0
    %4911 = vmatprep.subr.mxu0 0.0
    %4912 = vmatpush2.msra.mxu0 0.0
    %4913 = vmatprep.subr.mxu0 0.0
    %4914 = vmatpush2.msra.mxu0 0.0
    %4915 = vmatprep.subr.mxu0 0.0
    %4916 = vmatpush2.msra.mxu0 0.0
    %4917 = vmatprep.subr.mxu0 0.0
    %4918 = vmatpush2.msra.mxu0 0.0
    %4919 = vmatprep.subr.mxu0 0.0
    %4920 = vmatpush2.msra.mxu0 0.0
    %4921 = vmatprep.subr.mxu0 0.0
    %4922 = vmatpush2.msra.mxu0 0.0
    %4923 = vmatprep.mubr.f32.mxu0 0.0
    %4924 = vmatmul.mubr.f32.gmra.mxu0 %v4857
    %v4925 = vpop.f32.mrf.mxu0
    %v4926 = vadd.f32 0.0, %v4925
    %v4927 = vpop.f32.mrf.mxu0
    %v4928 = vadd.f32 0.0, %v4927
    %4929 = vdwg.mxu0
    %4930 = vmatprep.subr.mxu0 0.0
    %4931 = vmatpush1.msra.mxu0 0.0
    %4932 = vmatprep.subr.mxu0 0.0
    %4933 = vmatpush1.msra.mxu0 0.0
    %4934 = vmatprep.subr.mxu0 0.0
    %4935 = vmatpush1.msra.mxu0 0.0
    %4936 = vmatprep.subr.mxu0 0.0
    %4937 = vmatpush1.msra.mxu0 0.0
    %4938 = vmatprep.subr.mxu0 0.0
    %4939 = vmatpush1.msra.mxu0 0.0
    %4940 = vmatprep.subr.mxu0 0.0
    %4941 = vmatpush1.msra.mxu0 0.0
    %4942 = vmatprep.subr.mxu0 0.0
    %4943 = vmatpush1.msra.mxu0 0.0
    %4944 = vmatprep.subr.mxu0 0.0
    %4945 = vmatpush1.msra.mxu0 0.0
    %4946 = vmatprep.subr.mxu0 0.0
    %4947 = vmatpush1.msra.mxu0 0.0
    %4948 = vmatprep.subr.mxu0 0.0
    %4949 = vmatpush1.msra.mxu0 0.0
    %4950 = vmatprep.subr.mxu0 0.0
    %4951 = vmatpush1.msra.mxu0 0.0
    %4952 = vmatprep.subr.mxu0 0.0
    %4953 = vmatpush1.msra.mxu0 0.0
    %4954 = vmatprep.subr.mxu0 0.0
    %4955 = vmatpush1.msra.mxu0 0.0
    %4956 = vmatprep.subr.mxu0 0.0
    %4957 = vmatpush1.msra.mxu0 0.0
    %4958 = vmatprep.subr.mxu0 %v4130
    %4959 = vmatpush1.msra.mxu0 %v4129
    %4960 = vmatprep.subr.mxu0 %v4126
    %4961 = vmatpush1.msra.mxu0 %v4125
    %4962 = vmatprep.subr.mxu0 0.0
    %4963 = vmatpush2.msra.mxu0 0.0
    %4964 = vmatprep.subr.mxu0 0.0
    %4965 = vmatpush2.msra.mxu0 0.0
    %4966 = vmatprep.subr.mxu0 0.0
    %4967 = vmatpush2.msra.mxu0 0.0
    %4968 = vmatprep.subr.mxu0 0.0
    %4969 = vmatpush2.msra.mxu0 0.0
    %4970 = vmatprep.subr.mxu0 0.0
    %4971 = vmatpush2.msra.mxu0 0.0
    %4972 = vmatprep.subr.mxu0 0.0
    %4973 = vmatpush2.msra.mxu0 0.0
    %4974 = vmatprep.subr.mxu0 0.0
    %4975 = vmatpush2.msra.mxu0 0.0
    %4976 = vmatprep.subr.mxu0 0.0
    %4977 = vmatpush2.msra.mxu0 0.0
    %4978 = vmatprep.subr.mxu0 0.0
    %4979 = vmatpush2.msra.mxu0 0.0
    %4980 = vmatprep.subr.mxu0 0.0
    %4981 = vmatpush2.msra.mxu0 0.0
    %4982 = vmatprep.subr.mxu0 0.0
    %4983 = vmatpush2.msra.mxu0 0.0
    %4984 = vmatprep.subr.mxu0 0.0
    %4985 = vmatpush2.msra.mxu0 0.0
    %4986 = vmatprep.subr.mxu0 0.0
    %4987 = vmatpush2.msra.mxu0 0.0
    %4988 = vmatprep.subr.mxu0 0.0
    %4989 = vmatpush2.msra.mxu0 0.0
    %4990 = vmatprep.subr.mxu0 0.0
    %4991 = vmatpush2.msra.mxu0 0.0
    %4992 = vmatprep.subr.mxu0 0.0
    %4993 = vmatpush2.msra.mxu0 0.0
    %4994 = vmatprep.mubr.f32.mxu0 0.0
    %4995 = vmatmul.mubr.f32.gmra.mxu0 %v4857
    %v4996 = vpop.f32.mrf.mxu0
    %v4997 = vadd.f32 0.0, %v4996
    %v4998 = vpop.f32.mrf.mxu0
    %v4999 = vadd.f32 0.0, %v4998
    %5000 = vdwg.mxu0
    %v5001 = vadd.f32 %v4850, %v4926
    %v5002 = vadd.f32 %v4851, %v4928
    %v5003 = vadd.f32 %v4852, %v4997
    %v5004 = vadd.f32 %v4853, %v4999
    %5005 = vrot.lane.b32.xlu0 %v4123, 127
    %v5006 = vpop.permute.xlu0 %5005
    %5007 = vrot.lane.b32.xlu0 %v4127, 127
    %v5008 = vpop.permute.xlu0 %5007
    %5009 = vrot.lane.b32.xlu0 %v4124, 127
    %v5010 = vpop.permute.xlu0 %5009
    %5011 = vrot.lane.b32.xlu0 %v4128, 127
    %v5012 = vpop.permute.xlu0 %5011
    %5013 = vrot.lane.b32.xlu0 %v4125, 127
    %v5014 = vpop.permute.xlu0 %5013
    %5015 = vrot.lane.b32.xlu0 %v4129, 127
    %v5016 = vpop.permute.xlu0 %5015
    %5017 = vrot.lane.b32.xlu0 %v4126, 127
    %v5018 = vpop.permute.xlu0 %5017
    %5019 = vrot.lane.b32.xlu0 %v4130, 127
    %v5020 = vpop.permute.xlu0 %5019
    %v5021 = vsel %vm1435, %v5014, %v5018
    %v5022 = vsel %vm1435, %v5016, %v5020
    %v5023 = vsel %vm1435, %v5010, %v5014
    %v5024 = vsel %vm1435, %v5012, %v5016
    %v5025 = vsel %vm1435, %v5006, %v5010
    %v5026 = vsel %vm1435, %v5008, %v5012
    %v5027 = vsel %vm1435, %v5018, %v5006
    %v5028 = vsel %vm1435, %v5020, %v5008
    %v5029 = vmul.f32 %v5025, %v1446
    %v5030 = vmul.f32 %v5023, %v1450
    %v5031 = vmul.f32 %v5021, %v1454
    %v5032 = vmul.f32 %v5027, %v1458
    %v5033 = vmul.f32 %v5026, %v1446
    %v5034 = vmul.f32 %v5024, %v1450
    %v5035 = vmul.f32 %v5022, %v1454
    %v5036 = vmul.f32 %v5028, %v1458
    %s5037 = scalar_lea.vmem [#allocation4], 5
    %v5038 = vld [vmem:[%s5037] sm:$0x1]
    %v5040 = vsel %vm2381, %v5038, 0
    %5042 = vmatprep.subr.mxu0 0.0
    %5043 = vmatpush1.msra.mxu0 0.0
    %5044 = vmatprep.subr.mxu0 0.0
    %5045 = vmatpush1.msra.mxu0 0.0
    %5046 = vmatprep.subr.mxu0 0.0
    %5047 = vmatpush1.msra.mxu0 0.0
    %5048 = vmatprep.subr.mxu0 0.0
    %5049 = vmatpush1.msra.mxu0 0.0
    %5050 = vmatprep.subr.mxu0 0.0
    %5051 = vmatpush1.msra.mxu0 0.0
    %5052 = vmatprep.subr.mxu0 0.0
    %5053 = vmatpush1.msra.mxu0 0.0
    %5054 = vmatprep.subr.mxu0 0.0
    %5055 = vmatpush1.msra.mxu0 0.0
    %5056 = vmatprep.subr.mxu0 0.0
    %5057 = vmatpush1.msra.mxu0 0.0
    %5058 = vmatprep.subr.mxu0 0.0
    %5059 = vmatpush1.msra.mxu0 0.0
    %5060 = vmatprep.subr.mxu0 0.0
    %5061 = vmatpush1.msra.mxu0 0.0
    %5062 = vmatprep.subr.mxu0 0.0
    %5063 = vmatpush1.msra.mxu0 0.0
    %5064 = vmatprep.subr.mxu0 0.0
    %5065 = vmatpush1.msra.mxu0 0.0
    %5066 = vmatprep.subr.mxu0 0.0
    %5067 = vmatpush1.msra.mxu0 0.0
    %5068 = vmatprep.subr.mxu0 0.0
    %5069 = vmatpush1.msra.mxu0 0.0
    %5070 = vmatprep.subr.mxu0 %v5034
    %5071 = vmatpush1.msra.mxu0 %v5033
    %5072 = vmatprep.subr.mxu0 %v5030
    %5073 = vmatpush1.msra.mxu0 %v5029
    %5074 = vmatprep.subr.mxu0 0.0
    %5075 = vmatpush2.msra.mxu0 0.0
    %5076 = vmatprep.subr.mxu0 0.0
    %5077 = vmatpush2.msra.mxu0 0.0
    %5078 = vmatprep.subr.mxu0 0.0
    %5079 = vmatpush2.msra.mxu0 0.0
    %5080 = vmatprep.subr.mxu0 0.0
    %5081 = vmatpush2.msra.mxu0 0.0
    %5082 = vmatprep.subr.mxu0 0.0
    %5083 = vmatpush2.msra.mxu0 0.0
    %5084 = vmatprep.subr.mxu0 0.0
    %5085 = vmatpush2.msra.mxu0 0.0
    %5086 = vmatprep.subr.mxu0 0.0
    %5087 = vmatpush2.msra.mxu0 0.0
    %5088 = vmatprep.subr.mxu0 0.0
    %5089 = vmatpush2.msra.mxu0 0.0
    %5090 = vmatprep.subr.mxu0 0.0
    %5091 = vmatpush2.msra.mxu0 0.0
    %5092 = vmatprep.subr.mxu0 0.0
    %5093 = vmatpush2.msra.mxu0 0.0
    %5094 = vmatprep.subr.mxu0 0.0
    %5095 = vmatpush2.msra.mxu0 0.0
    %5096 = vmatprep.subr.mxu0 0.0
    %5097 = vmatpush2.msra.mxu0 0.0
    %5098 = vmatprep.subr.mxu0 0.0
    %5099 = vmatpush2.msra.mxu0 0.0
    %5100 = vmatprep.subr.mxu0 0.0
    %5101 = vmatpush2.msra.mxu0 0.0
    %5102 = vmatprep.subr.mxu0 0.0
    %5103 = vmatpush2.msra.mxu0 0.0
    %5104 = vmatprep.subr.mxu0 0.0
    %5105 = vmatpush2.msra.mxu0 0.0
    %5106 = vmatprep.mubr.f32.mxu0 0.0
    %5107 = vmatmul.mubr.f32.gmra.mxu0 %v5040
    %v5108 = vpop.f32.mrf.mxu0
    %v5109 = vadd.f32 0.0, %v5108
    %v5110 = vpop.f32.mrf.mxu0
    %v5111 = vadd.f32 0.0, %v5110
    %5112 = vdwg.mxu0
    %5113 = vmatprep.subr.mxu0 0.0
    %5114 = vmatpush1.msra.mxu0 0.0
    %5115 = vmatprep.subr.mxu0 0.0
    %5116 = vmatpush1.msra.mxu0 0.0
    %5117 = vmatprep.subr.mxu0 0.0
    %5118 = vmatpush1.msra.mxu0 0.0
    %5119 = vmatprep.subr.mxu0 0.0
    %5120 = vmatpush1.msra.mxu0 0.0
    %5121 = vmatprep.subr.mxu0 0.0
    %5122 = vmatpush1.msra.mxu0 0.0
    %5123 = vmatprep.subr.mxu0 0.0
    %5124 = vmatpush1.msra.mxu0 0.0
    %5125 = vmatprep.subr.mxu0 0.0
    %5126 = vmatpush1.msra.mxu0 0.0
    %5127 = vmatprep.subr.mxu0 0.0
    %5128 = vmatpush1.msra.mxu0 0.0
    %5129 = vmatprep.subr.mxu0 0.0
    %5130 = vmatpush1.msra.mxu0 0.0
    %5131 = vmatprep.subr.mxu0 0.0
    %5132 = vmatpush1.msra.mxu0 0.0
    %5133 = vmatprep.subr.mxu0 0.0
    %5134 = vmatpush1.msra.mxu0 0.0
    %5135 = vmatprep.subr.mxu0 0.0
    %5136 = vmatpush1.msra.mxu0 0.0
    %5137 = vmatprep.subr.mxu0 0.0
    %5138 = vmatpush1.msra.mxu0 0.0
    %5139 = vmatprep.subr.mxu0 0.0
    %5140 = vmatpush1.msra.mxu0 0.0
    %5141 = vmatprep.subr.mxu0 %v5036
    %5142 = vmatpush1.msra.mxu0 %v5035
    %5143 = vmatprep.subr.mxu0 %v5032
    %5144 = vmatpush1.msra.mxu0 %v5031
    %5145 = vmatprep.subr.mxu0 0.0
    %5146 = vmatpush2.msra.mxu0 0.0
    %5147 = vmatprep.subr.mxu0 0.0
    %5148 = vmatpush2.msra.mxu0 0.0
    %5149 = vmatprep.subr.mxu0 0.0
    %5150 = vmatpush2.msra.mxu0 0.0
    %5151 = vmatprep.subr.mxu0 0.0
    %5152 = vmatpush2.msra.mxu0 0.0
    %5153 = vmatprep.subr.mxu0 0.0
    %5154 = vmatpush2.msra.mxu0 0.0
    %5155 = vmatprep.subr.mxu0 0.0
    %5156 = vmatpush2.msra.mxu0 0.0
    %5157 = vmatprep.subr.mxu0 0.0
    %5158 = vmatpush2.msra.mxu0 0.0
    %5159 = vmatprep.subr.mxu0 0.0
    %5160 = vmatpush2.msra.mxu0 0.0
    %5161 = vmatprep.subr.mxu0 0.0
    %5162 = vmatpush2.msra.mxu0 0.0
    %5163 = vmatprep.subr.mxu0 0.0
    %5164 = vmatpush2.msra.mxu0 0.0
    %5165 = vmatprep.subr.mxu0 0.0
    %5166 = vmatpush2.msra.mxu0 0.0
    %5167 = vmatprep.subr.mxu0 0.0
    %5168 = vmatpush2.msra.mxu0 0.0
    %5169 = vmatprep.subr.mxu0 0.0
    %5170 = vmatpush2.msra.mxu0 0.0
    %5171 = vmatprep.subr.mxu0 0.0
    %5172 = vmatpush2.msra.mxu0 0.0
    %5173 = vmatprep.subr.mxu0 0.0
    %5174 = vmatpush2.msra.mxu0 0.0
    %5175 = vmatprep.subr.mxu0 0.0
    %5176 = vmatpush2.msra.mxu0 0.0
    %5177 = vmatprep.mubr.f32.mxu0 0.0
    %5178 = vmatmul.mubr.f32.gmra.mxu0 %v5040
    %v5179 = vpop.f32.mrf.mxu0
    %v5180 = vadd.f32 0.0, %v5179
    %v5181 = vpop.f32.mrf.mxu0
    %v5182 = vadd.f32 0.0, %v5181
    %5183 = vdwg.mxu0
    %v5184 = vadd.f32 %v5001, %v5109
    %v5185 = vadd.f32 %v5002, %v5111
    %v5186 = vadd.f32 %v5003, %v5180
    %v5187 = vadd.f32 %v5004, %v5182
    %5188 = vrot.lane.b32.xlu0 %v4123, 113
    %v5189 = vpop.permute.xlu0 %5188
    %5190 = vrot.lane.b32.xlu0 %v4127, 113
    %v5191 = vpop.permute.xlu0 %5190
    %5192 = vrot.lane.b32.xlu0 %v4124, 113
    %v5193 = vpop.permute.xlu0 %5192
    %5194 = vrot.lane.b32.xlu0 %v4128, 113
    %v5195 = vpop.permute.xlu0 %5194
    %5196 = vrot.lane.b32.xlu0 %v4125, 113
    %v5197 = vpop.permute.xlu0 %5196
    %5198 = vrot.lane.b32.xlu0 %v4129, 113
    %v5199 = vpop.permute.xlu0 %5198
    %5200 = vrot.lane.b32.xlu0 %v4126, 113
    %v5201 = vpop.permute.xlu0 %5200
    %5202 = vrot.lane.b32.xlu0 %v4130, 113
    %v5203 = vpop.permute.xlu0 %5202
    %v5204 = vsel %vm1646, %v5197, %v5201
    %v5205 = vsel %vm1646, %v5199, %v5203
    %v5206 = vsel %vm1646, %v5193, %v5197
    %v5207 = vsel %vm1646, %v5195, %v5199
    %v5208 = vsel %vm1646, %v5189, %v5193
    %v5209 = vsel %vm1646, %v5191, %v5195
    %v5210 = vsel %vm1646, %v5201, %v5189
    %v5211 = vsel %vm1646, %v5203, %v5191
    %v5212 = vmul.f32 %v5208, %v1657
    %v5213 = vmul.f32 %v5206, %v1661
    %v5214 = vmul.f32 %v5204, %v1665
    %v5215 = vmul.f32 %v5210, %v1669
    %v5216 = vmul.f32 %v5209, %v1657
    %v5217 = vmul.f32 %v5207, %v1661
    %v5218 = vmul.f32 %v5205, %v1665
    %v5219 = vmul.f32 %v5211, %v1669
    %s5220 = scalar_lea.vmem [#allocation4], 6
    %v5221 = vld [vmem:[%s5220] sm:$0x1]
    %v5223 = vsel %vm2381, %v5221, 0
    %5225 = vmatprep.subr.mxu0 0.0
    %5226 = vmatpush1.msra.mxu0 0.0
    %5227 = vmatprep.subr.mxu0 0.0
    %5228 = vmatpush1.msra.mxu0 0.0
    %5229 = vmatprep.subr.mxu0 0.0
    %5230 = vmatpush1.msra.mxu0 0.0
    %5231 = vmatprep.subr.mxu0 0.0
    %5232 = vmatpush1.msra.mxu0 0.0
    %5233 = vmatprep.subr.mxu0 0.0
    %5234 = vmatpush1.msra.mxu0 0.0
    %5235 = vmatprep.subr.mxu0 0.0
    %5236 = vmatpush1.msra.mxu0 0.0
    %5237 = vmatprep.subr.mxu0 0.0
    %5238 = vmatpush1.msra.mxu0 0.0
    %5239 = vmatprep.subr.mxu0 0.0
    %5240 = vmatpush1.msra.mxu0 0.0
    %5241 = vmatprep.subr.mxu0 0.0
    %5242 = vmatpush1.msra.mxu0 0.0
    %5243 = vmatprep.subr.mxu0 0.0
    %5244 = vmatpush1.msra.mxu0 0.0
    %5245 = vmatprep.subr.mxu0 0.0
    %5246 = vmatpush1.msra.mxu0 0.0
    %5247 = vmatprep.subr.mxu0 0.0
    %5248 = vmatpush1.msra.mxu0 0.0
    %5249 = vmatprep.subr.mxu0 0.0
    %5250 = vmatpush1.msra.mxu0 0.0
    %5251 = vmatprep.subr.mxu0 0.0
    %5252 = vmatpush1.msra.mxu0 0.0
    %5253 = vmatprep.subr.mxu0 %v5217
    %5254 = vmatpush1.msra.mxu0 %v5216
    %5255 = vmatprep.subr.mxu0 %v5213
    %5256 = vmatpush1.msra.mxu0 %v5212
    %5257 = vmatprep.subr.mxu0 0.0
    %5258 = vmatpush2.msra.mxu0 0.0
    %5259 = vmatprep.subr.mxu0 0.0
    %5260 = vmatpush2.msra.mxu0 0.0
    %5261 = vmatprep.subr.mxu0 0.0
    %5262 = vmatpush2.msra.mxu0 0.0
    %5263 = vmatprep.subr.mxu0 0.0
    %5264 = vmatpush2.msra.mxu0 0.0
    %5265 = vmatprep.subr.mxu0 0.0
    %5266 = vmatpush2.msra.mxu0 0.0
    %5267 = vmatprep.subr.mxu0 0.0
    %5268 = vmatpush2.msra.mxu0 0.0
    %5269 = vmatprep.subr.mxu0 0.0
    %5270 = vmatpush2.msra.mxu0 0.0
    %5271 = vmatprep.subr.mxu0 0.0
    %5272 = vmatpush2.msra.mxu0 0.0
    %5273 = vmatprep.subr.mxu0 0.0
    %5274 = vmatpush2.msra.mxu0 0.0
    %5275 = vmatprep.subr.mxu0 0.0
    %5276 = vmatpush2.msra.mxu0 0.0
    %5277 = vmatprep.subr.mxu0 0.0
    %5278 = vmatpush2.msra.mxu0 0.0
    %5279 = vmatprep.subr.mxu0 0.0
    %5280 = vmatpush2.msra.mxu0 0.0
    %5281 = vmatprep.subr.mxu0 0.0
    %5282 = vmatpush2.msra.mxu0 0.0
    %5283 = vmatprep.subr.mxu0 0.0
    %5284 = vmatpush2.msra.mxu0 0.0
    %5285 = vmatprep.subr.mxu0 0.0
    %5286 = vmatpush2.msra.mxu0 0.0
    %5287 = vmatprep.subr.mxu0 0.0
    %5288 = vmatpush2.msra.mxu0 0.0
    %5289 = vmatprep.mubr.f32.mxu0 0.0
    %5290 = vmatmul.mubr.f32.gmra.mxu0 %v5223
    %v5291 = vpop.f32.mrf.mxu0
    %v5292 = vadd.f32 0.0, %v5291
    %v5293 = vpop.f32.mrf.mxu0
    %v5294 = vadd.f32 0.0, %v5293
    %5295 = vdwg.mxu0
    %5296 = vmatprep.subr.mxu0 0.0
    %5297 = vmatpush1.msra.mxu0 0.0
    %5298 = vmatprep.subr.mxu0 0.0
    %5299 = vmatpush1.msra.mxu0 0.0
    %5300 = vmatprep.subr.mxu0 0.0
    %5301 = vmatpush1.msra.mxu0 0.0
    %5302 = vmatprep.subr.mxu0 0.0
    %5303 = vmatpush1.msra.mxu0 0.0
    %5304 = vmatprep.subr.mxu0 0.0
    %5305 = vmatpush1.msra.mxu0 0.0
    %5306 = vmatprep.subr.mxu0 0.0
    %5307 = vmatpush1.msra.mxu0 0.0
    %5308 = vmatprep.subr.mxu0 0.0
    %5309 = vmatpush1.msra.mxu0 0.0
    %5310 = vmatprep.subr.mxu0 0.0
    %5311 = vmatpush1.msra.mxu0 0.0
    %5312 = vmatprep.subr.mxu0 0.0
    %5313 = vmatpush1.msra.mxu0 0.0
    %5314 = vmatprep.subr.mxu0 0.0
    %5315 = vmatpush1.msra.mxu0 0.0
    %5316 = vmatprep.subr.mxu0 0.0
    %5317 = vmatpush1.msra.mxu0 0.0
    %5318 = vmatprep.subr.mxu0 0.0
    %5319 = vmatpush1.msra.mxu0 0.0
    %5320 = vmatprep.subr.mxu0 0.0
    %5321 = vmatpush1.msra.mxu0 0.0
    %5322 = vmatprep.subr.mxu0 0.0
    %5323 = vmatpush1.msra.mxu0 0.0
    %5324 = vmatprep.subr.mxu0 %v5219
    %5325 = vmatpush1.msra.mxu0 %v5218
    %5326 = vmatprep.subr.mxu0 %v5215
    %5327 = vmatpush1.msra.mxu0 %v5214
    %5328 = vmatprep.subr.mxu0 0.0
    %5329 = vmatpush2.msra.mxu0 0.0
    %5330 = vmatprep.subr.mxu0 0.0
    %5331 = vmatpush2.msra.mxu0 0.0
    %5332 = vmatprep.subr.mxu0 0.0
    %5333 = vmatpush2.msra.mxu0 0.0
    %5334 = vmatprep.subr.mxu0 0.0
    %5335 = vmatpush2.msra.mxu0 0.0
    %5336 = vmatprep.subr.mxu0 0.0
    %5337 = vmatpush2.msra.mxu0 0.0
    %5338 = vmatprep.subr.mxu0 0.0
    %5339 = vmatpush2.msra.mxu0 0.0
    %5340 = vmatprep.subr.mxu0 0.0
    %5341 = vmatpush2.msra.mxu0 0.0
    %5342 = vmatprep.subr.mxu0 0.0
    %5343 = vmatpush2.msra.mxu0 0.0
    %5344 = vmatprep.subr.mxu0 0.0
    %5345 = vmatpush2.msra.mxu0 0.0
    %5346 = vmatprep.subr.mxu0 0.0
    %5347 = vmatpush2.msra.mxu0 0.0
    %5348 = vmatprep.subr.mxu0 0.0
    %5349 = vmatpush2.msra.mxu0 0.0
    %5350 = vmatprep.subr.mxu0 0.0
    %5351 = vmatpush2.msra.mxu0 0.0
    %5352 = vmatprep.subr.mxu0 0.0
    %5353 = vmatpush2.msra.mxu0 0.0
    %5354 = vmatprep.subr.mxu0 0.0
    %5355 = vmatpush2.msra.mxu0 0.0
    %5356 = vmatprep.subr.mxu0 0.0
    %5357 = vmatpush2.msra.mxu0 0.0
    %5358 = vmatprep.subr.mxu0 0.0
    %5359 = vmatpush2.msra.mxu0 0.0
    %5360 = vmatprep.mubr.f32.mxu0 0.0
    %5361 = vmatmul.mubr.f32.gmra.mxu0 %v5223
    %v5362 = vpop.f32.mrf.mxu0
    %v5363 = vadd.f32 0.0, %v5362
    %v5364 = vpop.f32.mrf.mxu0
    %v5365 = vadd.f32 0.0, %v5364
    %5366 = vdwg.mxu0
    %v5367 = vadd.f32 %v5184, %v5292
    %v5368 = vadd.f32 %v5185, %v5294
    %v5369 = vadd.f32 %v5186, %v5363
    %v5370 = vadd.f32 %v5187, %v5365
    %5371 = vrot.lane.b32.xlu0 %v4123, 112
    %v5372 = vpop.permute.xlu0 %5371
    %5373 = vrot.lane.b32.xlu0 %v4127, 112
    %v5374 = vpop.permute.xlu0 %5373
    %5375 = vrot.lane.b32.xlu0 %v4124, 112
    %v5376 = vpop.permute.xlu0 %5375
    %5377 = vrot.lane.b32.xlu0 %v4128, 112
    %v5378 = vpop.permute.xlu0 %5377
    %5379 = vrot.lane.b32.xlu0 %v4125, 112
    %v5380 = vpop.permute.xlu0 %5379
    %5381 = vrot.lane.b32.xlu0 %v4129, 112
    %v5382 = vpop.permute.xlu0 %5381
    %5383 = vrot.lane.b32.xlu0 %v4126, 112
    %v5384 = vpop.permute.xlu0 %5383
    %5385 = vrot.lane.b32.xlu0 %v4130, 112
    %v5386 = vpop.permute.xlu0 %5385
    %v5387 = vsel %vm1857, %v5380, %v5384
    %v5388 = vsel %vm1857, %v5382, %v5386
    %v5389 = vsel %vm1857, %v5376, %v5380
    %v5390 = vsel %vm1857, %v5378, %v5382
    %v5391 = vsel %vm1857, %v5372, %v5376
    %v5392 = vsel %vm1857, %v5374, %v5378
    %v5393 = vsel %vm1857, %v5384, %v5372
    %v5394 = vsel %vm1857, %v5386, %v5374
    %v5395 = vmul.f32 %v5391, %v1868
    %v5396 = vmul.f32 %v5389, %v1872
    %v5397 = vmul.f32 %v5387, %v1876
    %v5398 = vmul.f32 %v5393, %v1880
    %v5399 = vmul.f32 %v5392, %v1868
    %v5400 = vmul.f32 %v5390, %v1872
    %v5401 = vmul.f32 %v5388, %v1876
    %v5402 = vmul.f32 %v5394, %v1880
    %s5403 = scalar_lea.vmem [#allocation4], 7
    %v5404 = vld [vmem:[%s5403] sm:$0x1]
    %v5406 = vsel %vm2381, %v5404, 0
    %5408 = vmatprep.subr.mxu0 0.0
    %5409 = vmatpush1.msra.mxu0 0.0
    %5410 = vmatprep.subr.mxu0 0.0
    %5411 = vmatpush1.msra.mxu0 0.0
    %5412 = vmatprep.subr.mxu0 0.0
    %5413 = vmatpush1.msra.mxu0 0.0
    %5414 = vmatprep.subr.mxu0 0.0
    %5415 = vmatpush1.msra.mxu0 0.0
    %5416 = vmatprep.subr.mxu0 0.0
    %5417 = vmatpush1.msra.mxu0 0.0
    %5418 = vmatprep.subr.mxu0 0.0
    %5419 = vmatpush1.msra.mxu0 0.0
    %5420 = vmatprep.subr.mxu0 0.0
    %5421 = vmatpush1.msra.mxu0 0.0
    %5422 = vmatprep.subr.mxu0 0.0
    %5423 = vmatpush1.msra.mxu0 0.0
    %5424 = vmatprep.subr.mxu0 0.0
    %5425 = vmatpush1.msra.mxu0 0.0
    %5426 = vmatprep.subr.mxu0 0.0
    %5427 = vmatpush1.msra.mxu0 0.0
    %5428 = vmatprep.subr.mxu0 0.0
    %5429 = vmatpush1.msra.mxu0 0.0
    %5430 = vmatprep.subr.mxu0 0.0
    %5431 = vmatpush1.msra.mxu0 0.0
    %5432 = vmatprep.subr.mxu0 0.0
    %5433 = vmatpush1.msra.mxu0 0.0
    %5434 = vmatprep.subr.mxu0 0.0
    %5435 = vmatpush1.msra.mxu0 0.0
    %5436 = vmatprep.subr.mxu0 %v5400
    %5437 = vmatpush1.msra.mxu0 %v5399
    %5438 = vmatprep.subr.mxu0 %v5396
    %5439 = vmatpush1.msra.mxu0 %v5395
    %5440 = vmatprep.subr.mxu0 0.0
    %5441 = vmatpush2.msra.mxu0 0.0
    %5442 = vmatprep.subr.mxu0 0.0
    %5443 = vmatpush2.msra.mxu0 0.0
    %5444 = vmatprep.subr.mxu0 0.0
    %5445 = vmatpush2.msra.mxu0 0.0
    %5446 = vmatprep.subr.mxu0 0.0
    %5447 = vmatpush2.msra.mxu0 0.0
    %5448 = vmatprep.subr.mxu0 0.0
    %5449 = vmatpush2.msra.mxu0 0.0
    %5450 = vmatprep.subr.mxu0 0.0
    %5451 = vmatpush2.msra.mxu0 0.0
    %5452 = vmatprep.subr.mxu0 0.0
    %5453 = vmatpush2.msra.mxu0 0.0
    %5454 = vmatprep.subr.mxu0 0.0
    %5455 = vmatpush2.msra.mxu0 0.0
    %5456 = vmatprep.subr.mxu0 0.0
    %5457 = vmatpush2.msra.mxu0 0.0
    %5458 = vmatprep.subr.mxu0 0.0
    %5459 = vmatpush2.msra.mxu0 0.0
    %5460 = vmatprep.subr.mxu0 0.0
    %5461 = vmatpush2.msra.mxu0 0.0
    %5462 = vmatprep.subr.mxu0 0.0
    %5463 = vmatpush2.msra.mxu0 0.0
    %5464 = vmatprep.subr.mxu0 0.0
    %5465 = vmatpush2.msra.mxu0 0.0
    %5466 = vmatprep.subr.mxu0 0.0
    %5467 = vmatpush2.msra.mxu0 0.0
    %5468 = vmatprep.subr.mxu0 0.0
    %5469 = vmatpush2.msra.mxu0 0.0
    %5470 = vmatprep.subr.mxu0 0.0
    %5471 = vmatpush2.msra.mxu0 0.0
    %5472 = vmatprep.mubr.f32.mxu0 0.0
    %5473 = vmatmul.mubr.f32.gmra.mxu0 %v5406
    %v5474 = vpop.f32.mrf.mxu0
    %v5475 = vadd.f32 0.0, %v5474
    %v5476 = vpop.f32.mrf.mxu0
    %v5477 = vadd.f32 0.0, %v5476
    %5478 = vdwg.mxu0
    %5479 = vmatprep.subr.mxu0 0.0
    %5480 = vmatpush1.msra.mxu0 0.0
    %5481 = vmatprep.subr.mxu0 0.0
    %5482 = vmatpush1.msra.mxu0 0.0
    %5483 = vmatprep.subr.mxu0 0.0
    %5484 = vmatpush1.msra.mxu0 0.0
    %5485 = vmatprep.subr.mxu0 0.0
    %5486 = vmatpush1.msra.mxu0 0.0
    %5487 = vmatprep.subr.mxu0 0.0
    %5488 = vmatpush1.msra.mxu0 0.0
    %5489 = vmatprep.subr.mxu0 0.0
    %5490 = vmatpush1.msra.mxu0 0.0
    %5491 = vmatprep.subr.mxu0 0.0
    %5492 = vmatpush1.msra.mxu0 0.0
    %5493 = vmatprep.subr.mxu0 0.0
    %5494 = vmatpush1.msra.mxu0 0.0
    %5495 = vmatprep.subr.mxu0 0.0
    %5496 = vmatpush1.msra.mxu0 0.0
    %5497 = vmatprep.subr.mxu0 0.0
    %5498 = vmatpush1.msra.mxu0 0.0
    %5499 = vmatprep.subr.mxu0 0.0
    %5500 = vmatpush1.msra.mxu0 0.0
    %5501 = vmatprep.subr.mxu0 0.0
    %5502 = vmatpush1.msra.mxu0 0.0
    %5503 = vmatprep.subr.mxu0 0.0
    %5504 = vmatpush1.msra.mxu0 0.0
    %5505 = vmatprep.subr.mxu0 0.0
    %5506 = vmatpush1.msra.mxu0 0.0
    %5507 = vmatprep.subr.mxu0 %v5402
    %5508 = vmatpush1.msra.mxu0 %v5401
    %5509 = vmatprep.subr.mxu0 %v5398
    %5510 = vmatpush1.msra.mxu0 %v5397
    %5511 = vmatprep.subr.mxu0 0.0
    %5512 = vmatpush2.msra.mxu0 0.0
    %5513 = vmatprep.subr.mxu0 0.0
    %5514 = vmatpush2.msra.mxu0 0.0
    %5515 = vmatprep.subr.mxu0 0.0
    %5516 = vmatpush2.msra.mxu0 0.0
    %5517 = vmatprep.subr.mxu0 0.0
    %5518 = vmatpush2.msra.mxu0 0.0
    %5519 = vmatprep.subr.mxu0 0.0
    %5520 = vmatpush2.msra.mxu0 0.0
    %5521 = vmatprep.subr.mxu0 0.0
    %5522 = vmatpush2.msra.mxu0 0.0
    %5523 = vmatprep.subr.mxu0 0.0
    %5524 = vmatpush2.msra.mxu0 0.0
    %5525 = vmatprep.subr.mxu0 0.0
    %5526 = vmatpush2.msra.mxu0 0.0
    %5527 = vmatprep.subr.mxu0 0.0
    %5528 = vmatpush2.msra.mxu0 0.0
    %5529 = vmatprep.subr.mxu0 0.0
    %5530 = vmatpush2.msra.mxu0 0.0
    %5531 = vmatprep.subr.mxu0 0.0
    %5532 = vmatpush2.msra.mxu0 0.0
    %5533 = vmatprep.subr.mxu0 0.0
    %5534 = vmatpush2.msra.mxu0 0.0
    %5535 = vmatprep.subr.mxu0 0.0
    %5536 = vmatpush2.msra.mxu0 0.0
    %5537 = vmatprep.subr.mxu0 0.0
    %5538 = vmatpush2.msra.mxu0 0.0
    %5539 = vmatprep.subr.mxu0 0.0
    %5540 = vmatpush2.msra.mxu0 0.0
    %5541 = vmatprep.subr.mxu0 0.0
    %5542 = vmatpush2.msra.mxu0 0.0
    %5543 = vmatprep.mubr.f32.mxu0 0.0
    %5544 = vmatmul.mubr.f32.gmra.mxu0 %v5406
    %v5545 = vpop.f32.mrf.mxu0
    %v5546 = vadd.f32 0.0, %v5545
    %v5547 = vpop.f32.mrf.mxu0
    %v5548 = vadd.f32 0.0, %v5547
    %5549 = vdwg.mxu0
    %v5550 = vadd.f32 %v5367, %v5475
    %v5551 = vadd.f32 %v5368, %v5477
    %v5552 = vadd.f32 %v5369, %v5546
    %v5553 = vadd.f32 %v5370, %v5548
    %5554 = vrot.lane.b32.xlu0 %v4123, 111
    %v5555 = vpop.permute.xlu0 %5554
    %5556 = vrot.lane.b32.xlu0 %v4127, 111
    %v5557 = vpop.permute.xlu0 %5556
    %5558 = vrot.lane.b32.xlu0 %v4124, 111
    %v5559 = vpop.permute.xlu0 %5558
    %5560 = vrot.lane.b32.xlu0 %v4128, 111
    %v5561 = vpop.permute.xlu0 %5560
    %5562 = vrot.lane.b32.xlu0 %v4125, 111
    %v5563 = vpop.permute.xlu0 %5562
    %5564 = vrot.lane.b32.xlu0 %v4129, 111
    %v5565 = vpop.permute.xlu0 %5564
    %5566 = vrot.lane.b32.xlu0 %v4126, 111
    %v5567 = vpop.permute.xlu0 %5566
    %5568 = vrot.lane.b32.xlu0 %v4130, 111
    %v5569 = vpop.permute.xlu0 %5568
    %v5570 = vsel %vm2068, %v5563, %v5567
    %v5571 = vsel %vm2068, %v5565, %v5569
    %v5572 = vsel %vm2068, %v5559, %v5563
    %v5573 = vsel %vm2068, %v5561, %v5565
    %v5574 = vsel %vm2068, %v5555, %v5559
    %v5575 = vsel %vm2068, %v5557, %v5561
    %v5576 = vsel %vm2068, %v5567, %v5555
    %v5577 = vsel %vm2068, %v5569, %v5557
    %v5578 = vmul.f32 %v5574, %v2079
    %v5579 = vmul.f32 %v5572, %v2083
    %v5580 = vmul.f32 %v5570, %v2087
    %v5581 = vmul.f32 %v5576, %v2091
    %v5582 = vmul.f32 %v5575, %v2079
    %v5583 = vmul.f32 %v5573, %v2083
    %v5584 = vmul.f32 %v5571, %v2087
    %v5585 = vmul.f32 %v5577, %v2091
    %s5586 = scalar_lea.vmem [#allocation4], 8
    %v5587 = vld [vmem:[%s5586] sm:$0x1]
    %v5589 = vsel %vm2381, %v5587, 0
    %5591 = vmatprep.subr.mxu0 0.0
    %5592 = vmatpush1.msra.mxu0 0.0
    %5593 = vmatprep.subr.mxu0 0.0
    %5594 = vmatpush1.msra.mxu0 0.0
    %5595 = vmatprep.subr.mxu0 0.0
    %5596 = vmatpush1.msra.mxu0 0.0
    %5597 = vmatprep.subr.mxu0 0.0
    %5598 = vmatpush1.msra.mxu0 0.0
    %5599 = vmatprep.subr.mxu0 0.0
    %5600 = vmatpush1.msra.mxu0 0.0
    %5601 = vmatprep.subr.mxu0 0.0
    %5602 = vmatpush1.msra.mxu0 0.0
    %5603 = vmatprep.subr.mxu0 0.0
    %5604 = vmatpush1.msra.mxu0 0.0
    %5605 = vmatprep.subr.mxu0 0.0
    %5606 = vmatpush1.msra.mxu0 0.0
    %5607 = vmatprep.subr.mxu0 0.0
    %5608 = vmatpush1.msra.mxu0 0.0
    %5609 = vmatprep.subr.mxu0 0.0
    %5610 = vmatpush1.msra.mxu0 0.0
    %5611 = vmatprep.subr.mxu0 0.0
    %5612 = vmatpush1.msra.mxu0 0.0
    %5613 = vmatprep.subr.mxu0 0.0
    %5614 = vmatpush1.msra.mxu0 0.0
    %5615 = vmatprep.subr.mxu0 0.0
    %5616 = vmatpush1.msra.mxu0 0.0
    %5617 = vmatprep.subr.mxu0 0.0
    %5618 = vmatpush1.msra.mxu0 0.0
    %5619 = vmatprep.subr.mxu0 %v5583
    %5620 = vmatpush1.msra.mxu0 %v5582
    %5621 = vmatprep.subr.mxu0 %v5579
    %5622 = vmatpush1.msra.mxu0 %v5578
    %5623 = vmatprep.subr.mxu0 0.0
    %5624 = vmatpush2.msra.mxu0 0.0
    %5625 = vmatprep.subr.mxu0 0.0
    %5626 = vmatpush2.msra.mxu0 0.0
    %5627 = vmatprep.subr.mxu0 0.0
    %5628 = vmatpush2.msra.mxu0 0.0
    %5629 = vmatprep.subr.mxu0 0.0
    %5630 = vmatpush2.msra.mxu0 0.0
    %5631 = vmatprep.subr.mxu0 0.0
    %5632 = vmatpush2.msra.mxu0 0.0
    %5633 = vmatprep.subr.mxu0 0.0
    %5634 = vmatpush2.msra.mxu0 0.0
    %5635 = vmatprep.subr.mxu0 0.0
    %5636 = vmatpush2.msra.mxu0 0.0
    %5637 = vmatprep.subr.mxu0 0.0
    %5638 = vmatpush2.msra.mxu0 0.0
    %5639 = vmatprep.subr.mxu0 0.0
    %5640 = vmatpush2.msra.mxu0 0.0
    %5641 = vmatprep.subr.mxu0 0.0
    %5642 = vmatpush2.msra.mxu0 0.0
    %5643 = vmatprep.subr.mxu0 0.0
    %5644 = vmatpush2.msra.mxu0 0.0
    %5645 = vmatprep.subr.mxu0 0.0
    %5646 = vmatpush2.msra.mxu0 0.0
    %5647 = vmatprep.subr.mxu0 0.0
    %5648 = vmatpush2.msra.mxu0 0.0
    %5649 = vmatprep.subr.mxu0 0.0
    %5650 = vmatpush2.msra.mxu0 0.0
    %5651 = vmatprep.subr.mxu0 0.0
    %5652 = vmatpush2.msra.mxu0 0.0
    %5653 = vmatprep.subr.mxu0 0.0
    %5654 = vmatpush2.msra.mxu0 0.0
    %5655 = vmatprep.mubr.f32.mxu0 0.0
    %5656 = vmatmul.mubr.f32.gmra.mxu0 %v5589
    %v5657 = vpop.f32.mrf.mxu0
    %v5658 = vadd.f32 0.0, %v5657
    %v5659 = vpop.f32.mrf.mxu0
    %v5660 = vadd.f32 0.0, %v5659
    %5661 = vdwg.mxu0
    %5662 = vmatprep.subr.mxu0 0.0
    %5663 = vmatpush1.msra.mxu0 0.0
    %5664 = vmatprep.subr.mxu0 0.0
    %5665 = vmatpush1.msra.mxu0 0.0
    %5666 = vmatprep.subr.mxu0 0.0
    %5667 = vmatpush1.msra.mxu0 0.0
    %5668 = vmatprep.subr.mxu0 0.0
    %5669 = vmatpush1.msra.mxu0 0.0
    %5670 = vmatprep.subr.mxu0 0.0
    %5671 = vmatpush1.msra.mxu0 0.0
    %5672 = vmatprep.subr.mxu0 0.0
    %5673 = vmatpush1.msra.mxu0 0.0
    %5674 = vmatprep.subr.mxu0 0.0
    %5675 = vmatpush1.msra.mxu0 0.0
    %5676 = vmatprep.subr.mxu0 0.0
    %5677 = vmatpush1.msra.mxu0 0.0
    %5678 = vmatprep.subr.mxu0 0.0
    %5679 = vmatpush1.msra.mxu0 0.0
    %5680 = vmatprep.subr.mxu0 0.0
    %5681 = vmatpush1.msra.mxu0 0.0
    %5682 = vmatprep.subr.mxu0 0.0
    %5683 = vmatpush1.msra.mxu0 0.0
    %5684 = vmatprep.subr.mxu0 0.0
    %5685 = vmatpush1.msra.mxu0 0.0
    %5686 = vmatprep.subr.mxu0 0.0
    %5687 = vmatpush1.msra.mxu0 0.0
    %5688 = vmatprep.subr.mxu0 0.0
    %5689 = vmatpush1.msra.mxu0 0.0
    %5690 = vmatprep.subr.mxu0 %v5585
    %5691 = vmatpush1.msra.mxu0 %v5584
    %5692 = vmatprep.subr.mxu0 %v5581
    %5693 = vmatpush1.msra.mxu0 %v5580
    %5694 = vmatprep.subr.mxu0 0.0
    %5695 = vmatpush2.msra.mxu0 0.0
    %5696 = vmatprep.subr.mxu0 0.0
    %5697 = vmatpush2.msra.mxu0 0.0
    %5698 = vmatprep.subr.mxu0 0.0
    %5699 = vmatpush2.msra.mxu0 0.0
    %5700 = vmatprep.subr.mxu0 0.0
    %5701 = vmatpush2.msra.mxu0 0.0
    %5702 = vmatprep.subr.mxu0 0.0
    %5703 = vmatpush2.msra.mxu0 0.0
    %5704 = vmatprep.subr.mxu0 0.0
    %5705 = vmatpush2.msra.mxu0 0.0
    %5706 = vmatprep.subr.mxu0 0.0
    %5707 = vmatpush2.msra.mxu0 0.0
    %5708 = vmatprep.subr.mxu0 0.0
    %5709 = vmatpush2.msra.mxu0 0.0
    %5710 = vmatprep.subr.mxu0 0.0
    %5711 = vmatpush2.msra.mxu0 0.0
    %5712 = vmatprep.subr.mxu0 0.0
    %5713 = vmatpush2.msra.mxu0 0.0
    %5714 = vmatprep.subr.mxu0 0.0
    %5715 = vmatpush2.msra.mxu0 0.0
    %5716 = vmatprep.subr.mxu0 0.0
    %5717 = vmatpush2.msra.mxu0 0.0
    %5718 = vmatprep.subr.mxu0 0.0
    %5719 = vmatpush2.msra.mxu0 0.0
    %5720 = vmatprep.subr.mxu0 0.0
    %5721 = vmatpush2.msra.mxu0 0.0
    %5722 = vmatprep.subr.mxu0 0.0
    %5723 = vmatpush2.msra.mxu0 0.0
    %5724 = vmatprep.subr.mxu0 0.0
    %5725 = vmatpush2.msra.mxu0 0.0
    %5726 = vmatprep.mubr.f32.mxu0 0.0
    %5727 = vmatmul.mubr.f32.gmra.mxu0 %v5589
    %v5728 = vpop.f32.mrf.mxu0
    %v5729 = vadd.f32 0.0, %v5728
    %v5730 = vpop.f32.mrf.mxu0
    %v5731 = vadd.f32 0.0, %v5730
    %5732 = vdwg.mxu0
    %v5733 = vadd.f32 %v5550, %v5658
    %v5734 = vadd.f32 %v5551, %v5660
    %v5735 = vadd.f32 %v5552, %v5729
    %v5736 = vadd.f32 %v5553, %v5731
    %5738 = vset.pattern.permute.xlu0 5
    %5739 = vperm.xlu0 %5738, %v60
    %v5740 = vpop.permute.xlu0 %5739
    %v5742 = vadd.f32 %v5733, %v5740
    %v5743 = vadd.f32 %v5734, %v5740
    %v5744 = vadd.f32 %v5735, %v5740
    %v5745 = vadd.f32 %v5736, %v5740
    %v5748 = vcombine.low %v5742, %v5743
    %v5750 = vunpack.c.l.s4 1966171168
    %v5751 = vunpack.c.0.s8 %v5750
    %v5752 = vlaneseq
    %v5753 = vshrl.u32 %v5752, 7
    %v5754 = vsub.s32 %v5751, %v5753
    %v5755 = vrot.slane %v5748, %v5754
    %v5757 = vunpack.c.l.s4 1966171168
    %v5758 = vunpack.c.0.s8 %v5757
    %v5759 = vlaneseq
    %v5760 = vshrl.u32 %v5759, 7
    %v5761 = vsub.s32 %v5758, %v5760
    %v5762 = vrot.slane %v5755, %v5761
    %v5764 = vlaneseq
    %vm5765 = vcmp.ge.s32.totalorder %v5764, 0
    %vm5766 = vcmp.lt.s32.totalorder %v5764, 256
    %vm5767 = vmand %vm5765, %vm5766
    %5768 = vst.msk [vmem:[%s9] sm:$0x3] %vm5767, %v5762
    %v5771 = vcombine.low %v5744, %v5745
    %v5773 = vunpack.c.l.s4 1966171168
    %v5774 = vunpack.c.0.s8 %v5773
    %v5775 = vlaneseq
    %v5776 = vshrl.u32 %v5775, 7
    %v5777 = vsub.s32 %v5774, %v5776
    %v5778 = vrot.slane %v5771, %v5777
    %v5780 = vunpack.c.l.s4 1966171168
    %v5781 = vunpack.c.0.s8 %v5780
    %v5782 = vlaneseq
    %v5783 = vshrl.u32 %v5782, 7
    %v5784 = vsub.s32 %v5781, %v5783
    %v5785 = vrot.slane %v5778, %v5784
    %s5787 = scalar_lea.vmem %s9, 2
    %5788 = vst.msk [vmem:[%s5787] sm:$0x3] %vm5767, %v5785
    // Predicated region
    $region46: #{_lambda_.1} parent=1 // pred_check
      _
    $region47: #{_lambda_.1} parent=1 // pred_check_branch
      %5790 = sbr.rel (0) target = $region49
    $region48: #{_lambda_.1} parent=1 // pred_region
      _
    $region49: #{_lambda_.1} parent=1 // pred_fallthru
      _
    // Predicated region
    $region50: #{_lambda_.1} parent=1 // pred_check
      _
    $region51: #{_lambda_.1} parent=1 // pred_check_branch
      %5792 = sbr.rel (0) target = $region53
    $region52: #{_lambda_.1} parent=1 // pred_region
      _
    $region53: #{_lambda_.1} parent=1 // pred_fallthru
      _
    %5793 = vsyncpa [#allocation3], 1
    %5794 = vsyncpa [#allocation5], 1

</llo_original>
